<compile_context>
chip_gen: v5e
topology: v5e:2x2
jax: 0.10.0
libtpu: 0.0.40
codegen_flags: <defaults>
</compile_context>

<pallas_src>
import math
import functools

import jax
import jax.numpy as jnp
from jax import lax
from jax.experimental import pallas as pl
from jax.experimental.pallas import tpu as pltpu

# ----------------------- scaled-down config -----------------------
VOCAB = 128          # vocab_size (fc_out output dim)
HIDDEN = 64          # stands in for 768
N_HEADS = 2          # stands in for 12
HEAD_DIM = HIDDEN // N_HEADS
FFN = 128            # stands in for 3072
N_LAYERS = 2         # stands in for 12
MAX_POS = 16
LN_EPS = 1e-12       # BERT LayerNorm eps


def _layernorm(x, g, b):
    mu = jnp.mean(x, axis=-1, keepdims=True)
    var = jnp.mean(jnp.square(x - mu), axis=-1, keepdims=True)
    return (x - mu) * lax.rsqrt(var + LN_EPS) * g + b


def _mm(a, b):
    # bf16 MXU operands, f32 accumulation.
    return jnp.dot(a.astype(jnp.bfloat16), b.astype(jnp.bfloat16),
                   preferred_element_type=jnp.float32)


# ----------------------- fused forward kernel -----------------------

def chatbot_kernel(emb_ref, maskb_ref, eg_ref, eb_ref,
                   wqkv_ref, bqkv_ref, wo_ref, bo_ref, ln1g_ref, ln1b_ref,
                   w1_ref, b1_ref, w2_ref, b2_ref, ln2g_ref, ln2b_ref,
                   wih_ref, whh_ref, bih_ref, bhh_ref, fcw_ref, fcb_ref,
                   out_ref, *, num_heads, head_dim, hidden, seq_len, n_layers):
    # One batch element per grid step (grid axis is "parallel" for megacore).
    x = _layernorm(emb_ref[0], eg_ref[...], eb_ref[...])      # (S, H) f32
    mb = maskb_ref[0]                                          # (1, S) additive key mask

    scale = 1.0 / math.sqrt(head_dim)

    # ---------------- BERT encoder layers (static unroll, L=2) ----------------
    for l in range(n_layers):
        # Fused QKV projection: one (S,H) @ (H,3H) matmul.
        qkv = _mm(x, wqkv_ref[l]) + bqkv_ref[l]                # (S, 3H) f32
        ctx_heads = []
        for h in range(num_heads):                             # static, nH=2
            lo = h * head_dim
            qh = qkv[:, lo:lo + head_dim]
            kh = qkv[:, hidden + lo:hidden + lo + head_dim]
            vh = qkv[:, 2 * hidden + lo:2 * hidden + lo + head_dim]
            s = jnp.einsum('qd,kd->qk',
                           qh.astype(jnp.bfloat16), kh.astype(jnp.bfloat16),
                           preferred_element_type=jnp.float32) * scale
            s = s + mb                                         # mask padded keys
            s = s - jnp.max(s, axis=-1, keepdims=True)
            p = jnp.exp(s)
            p = p * pl.reciprocal(jnp.sum(p, axis=-1, keepdims=True), approx=True)
            ctx_heads.append(_mm(p, vh))                       # (S, dH)
        ctx = jnp.concatenate(ctx_heads, axis=-1)              # (S, H) lane concat
        attn = _mm(ctx, wo_ref[l]) + bo_ref[l]                 # fused output proj
        y = _layernorm(x + attn, ln1g_ref[l], ln1b_ref[l])

        # TODO(synk): HF BERT uses exact erf-GELU; tanh-approximate GELU used here.
        h1 = jax.nn.gelu(_mm(y, w1_ref[l]) + b1_ref[l], approximate=True)
        h2 = _mm(h1, w2_ref[l]) + b2_ref[l]
        x = _layernorm(y + h2, ln2g_ref[l], ln2b_ref[l])

    # ---------------- LSTM decoder: statically unrolled time loop -------------
    wih = wih_ref[...].astype(jnp.bfloat16)                    # hoisted casts
    whh = whh_ref[...].astype(jnp.bfloat16)
    bias = bih_ref[...] + bhh_ref[...]                         # (1, 4H)

    h_t = jnp.zeros((1, hidden), jnp.float32)
    c_t = jnp.zeros((1, hidden), jnp.float32)
    dec_rows = []
    for t in range(seq_len):                                   # static, S=8
        x_t = x[t:t + 1, :]                                    # (1, H) static slice
        gates = (jnp.dot(x_t.astype(jnp.bfloat16), wih,
                         preferred_element_type=jnp.float32)
                 + jnp.dot(h_t, whh, preferred_element_type=jnp.float32)
                 + bias)                                       # (1, 4H), order i,f,g,o
        # TODO(synk): gate slices at 64-lane offsets; re-align to 128 if HIDDEN scales up.
        i_g = jax.nn.sigmoid(gates[:, 0 * hidden:1 * hidden])
        f_g = jax.nn.sigmoid(gates[:, 1 * hidden:2 * hidden])
        g_g = jnp.tanh(gates[:, 2 * hidden:3 * hidden])
        o_g = jax.nn.sigmoid(gates[:, 3 * hidden:4 * hidden])
        c_t = f_g * c_t + i_g * g_g
        h_t = o_g * jnp.tanh(c_t)
        dec_rows.append(h_t.astype(jnp.bfloat16))
    dec = jnp.concatenate(dec_rows, axis=0)                    # (S, H) sublane concat

    # ---------------- fc_out: the only HBM write (lane-dense, VOCAB=128) -------
    out_ref[0] = _mm(dec, fcw_ref[...]) + fcb_ref[...]


# ----------------------- wrapper -----------------------

def _rep_spec(shape):
    nd = len(shape)
    return pl.BlockSpec(shape, lambda b, _nd=nd: (0,) * _nd)   # fetched once (constant index)


def chatbot_forward(params, input_ids, attention_mask):
    B, S = input_ids.shape
    # BERT embeddings (gather = glue JAX; LayerNorm happens inside the kernel).
    emb = (params['word_emb'][input_ids]
           + params['pos_emb'][:S][None, :, :]
           + params['type_emb'][0][None, None, :]).astype(jnp.float32)
    # Additive key-mask bias, shaped (B, 1, S) so each grid block is (1, 1, S).
    mask_bias = ((1.0 - attention_mask.astype(jnp.float32)) * -10000.0)[:, None, :]

    H, F, V, L = HIDDEN, FFN, VOCAB, N_LAYERS
    kern = functools.partial(chatbot_kernel, num_heads=N_HEADS, head_dim=HEAD_DIM,
                             hidden=H, seq_len=S, n_layers=L)

    in_specs = [
        pl.BlockSpec((1, S, H), lambda b: (b, 0, 0)),          # embeddings (per batch)
        pl.BlockSpec((1, 1, S), lambda b: (b, 0, 0)),          # mask bias (per batch)
        _rep_spec((1, H)), _rep_spec((1, H)),                  # emb LN g/b
        _rep_spec((L, H, 3 * H)), _rep_spec((L, 1, 3 * H)),    # fused QKV W/b
        _rep_spec((L, H, H)), _rep_spec((L, 1, H)),            # attn out W/b
        _rep_spec((L, 1, H)), _rep_spec((L, 1, H)),            # LN1 g/b
        _rep_spec((L, H, F)), _rep_spec((L, 1, F)),            # FFN W1/b1
        _rep_spec((L, F, H)), _rep_spec((L, 1, H)),            # FFN W2/b2
        _rep_spec((L, 1, H)), _rep_spec((L, 1, H)),            # LN2 g/b
        _rep_spec((H, 4 * H)), _rep_spec((H, 4 * H)),          # LSTM wih/whh
        _rep_spec((1, 4 * H)), _rep_spec((1, 4 * H)),          # LSTM bih/bhh
        _rep_spec((H, V)), _rep_spec((1, V)),                  # fc_out W/b
    ]

    logits = pl.pallas_call(
        kern,
        out_shape=jax.ShapeDtypeStruct((B, S, V), jnp.float32),
        grid_spec=pltpu.PrefetchScalarGridSpec(
            num_scalar_prefetch=0,
            grid=(B,),
            in_specs=in_specs,
            out_specs=pl.BlockSpec((1, S, V), lambda b: (b, 0, 0)),
        ),
        compiler_params=pltpu.CompilerParams(
            dimension_semantics=("parallel",)),                # batch split across TCs (v7x)
    )(emb, mask_bias,
      params['emb_ln_g'], params['emb_ln_b'],
      params['wqkv'], params['bqkv'], params['wo'], params['bo'],
      params['ln1_g'], params['ln1_b'],
      params['w1'], params['b1'], params['w2'], params['b2'],
      params['ln2_g'], params['ln2_b'],
      params['wih'], params['whh'], params['bih'], params['bhh'],
      params['fc_w'], params['fc_b'])
    return logits


# ----------------------- deterministic synthetic params -----------------------

def init_params(key):
    keys = iter(jax.random.split(key, 64))
    bf = jnp.bfloat16

    def nrm(shape, scale=0.02, dtype=jnp.float32):
        return (scale * jax.random.normal(next(keys), shape)).astype(dtype)

    L, H, F, V = N_LAYERS, HIDDEN, FFN, VOCAB
    return {
        'word_emb': nrm((V, H)),
        'pos_emb': nrm((MAX_POS, H)),
        'type_emb': nrm((2, H)),
        'emb_ln_g': jnp.ones((1, H), jnp.float32),
        'emb_ln_b': jnp.zeros((1, H), jnp.float32),
        # stacked encoder layer weights; matmul weights stored as bf16
        'wqkv': nrm((L, H, 3 * H), dtype=bf),
        'bqkv': jnp.zeros((L, 1, 3 * H), jnp.float32),
        'wo': nrm((L, H, H), dtype=bf),
        'bo': jnp.zeros((L, 1, H), jnp.float32),
        'ln1_g': jnp.ones((L, 1, H), jnp.float32),
        'ln1_b': jnp.zeros((L, 1, H), jnp.float32),
        'w1': nrm((L, H, F), dtype=bf),
        'b1': jnp.zeros((L, 1, F), jnp.float32),
        'w2': nrm((L, F, H), dtype=bf),
        'b2': jnp.zeros((L, 1, H), jnp.float32),
        'ln2_g': jnp.ones((L, 1, H), jnp.float32),
        'ln2_b': jnp.zeros((L, 1, H), jnp.float32),
        # LSTM decoder (gate order i,f,g,o; stored transposed: (H, 4H))
        'wih': nrm((H, 4 * H), dtype=bf),
        'whh': nrm((H, 4 * H), dtype=bf),
        'bih': jnp.zeros((1, 4 * H), jnp.float32),
        'bhh': jnp.zeros((1, 4 * H), jnp.float32),
        # fc_out (stored transposed: (H, V))
        'fc_w': nrm((H, V), dtype=bf),
        'fc_b': jnp.zeros((1, V), jnp.float32),
    }


if __name__ == "__main__":
    key = jax.random.PRNGKey(0)
    pkey, dkey = jax.random.split(key)
    params = init_params(pkey)

    B, S = 2, 8
    input_ids = jax.random.randint(dkey, (B, S), 0, VOCAB, dtype=jnp.int32)
    attention_mask = jnp.array([[1, 1, 1, 1, 1, 1, 1, 1],
                                [1, 1, 1, 1, 1, 0, 0, 0]], dtype=jnp.int32)

    logits = chatbot_forward(params, input_ids, attention_mask)
    logits = jax.block_until_ready(logits)
    assert logits.shape == (B, S, VOCAB)
    assert bool(jnp.all(jnp.isfinite(logits)))
    print("KERNEL_OK")
</pallas_src>

<mosaic_0001>
module attributes {stable_mosaic.version = 11 : i64} {
  func.func @chatbot_kernel(%arg0: i32, %arg1: memref<1x8x64xf32, #tpu.memory_space<vmem>>, %arg2: memref<1x1x8xf32, #tpu.memory_space<vmem>>, %arg3: memref<1x64xf32, #tpu.memory_space<vmem>>, %arg4: memref<1x64xf32, #tpu.memory_space<vmem>>, %arg5: memref<2x64x192xbf16, #tpu.memory_space<vmem>>, %arg6: memref<2x1x192xf32, #tpu.memory_space<vmem>>, %arg7: memref<2x64x64xbf16, #tpu.memory_space<vmem>>, %arg8: memref<2x1x64xf32, #tpu.memory_space<vmem>>, %arg9: memref<2x1x64xf32, #tpu.memory_space<vmem>>, %arg10: memref<2x1x64xf32, #tpu.memory_space<vmem>>, %arg11: memref<2x64x128xbf16, #tpu.memory_space<vmem>>, %arg12: memref<2x1x128xf32, #tpu.memory_space<vmem>>, %arg13: memref<2x128x64xbf16, #tpu.memory_space<vmem>>, %arg14: memref<2x1x64xf32, #tpu.memory_space<vmem>>, %arg15: memref<2x1x64xf32, #tpu.memory_space<vmem>>, %arg16: memref<2x1x64xf32, #tpu.memory_space<vmem>>, %arg17: memref<64x256xbf16, #tpu.memory_space<vmem>>, %arg18: memref<64x256xbf16, #tpu.memory_space<vmem>>, %arg19: memref<1x256xf32, #tpu.memory_space<vmem>>, %arg20: memref<1x256xf32, #tpu.memory_space<vmem>>, %arg21: memref<64x128xbf16, #tpu.memory_space<vmem>>, %arg22: memref<1x128xf32, #tpu.memory_space<vmem>>, %arg23: memref<1x8x128xf32, #tpu.memory_space<vmem>>) attributes {dimension_semantics = [#tpu.dimension_semantics<parallel>], iteration_bounds = array<i64: 2>, scalar_prefetch = 0 : i64, scratch_operands = 0 : i64, tpu.core_type = #tpu.core_type<tc>, window_params = [{transform_indices = @transform_0, window_bounds = array<i64: 1, 8, 64>}, {transform_indices = @transform_1, window_bounds = array<i64: 1, 1, 8>}, {pipeline_mode = #tpu.pipeline_mode<synchronous>, transform_indices = @transform_2, window_bounds = array<i64: 1, 64>}, {pipeline_mode = #tpu.pipeline_mode<synchronous>, transform_indices = @transform_3, window_bounds = array<i64: 1, 64>}, {pipeline_mode = #tpu.pipeline_mode<synchronous>, transform_indices = @transform_4, window_bounds = array<i64: 2, 64, 192>}, {pipeline_mode = #tpu.pipeline_mode<synchronous>, transform_indices = @transform_5, window_bounds = array<i64: 2, 1, 192>}, {pipeline_mode = #tpu.pipeline_mode<synchronous>, transform_indices = @transform_6, window_bounds = array<i64: 2, 64, 64>}, {pipeline_mode = #tpu.pipeline_mode<synchronous>, transform_indices = @transform_7, window_bounds = array<i64: 2, 1, 64>}, {pipeline_mode = #tpu.pipeline_mode<synchronous>, transform_indices = @transform_8, window_bounds = array<i64: 2, 1, 64>}, {pipeline_mode = #tpu.pipeline_mode<synchronous>, transform_indices = @transform_9, window_bounds = array<i64: 2, 1, 64>}, {pipeline_mode = #tpu.pipeline_mode<synchronous>, transform_indices = @transform_10, window_bounds = array<i64: 2, 64, 128>}, {pipeline_mode = #tpu.pipeline_mode<synchronous>, transform_indices = @transform_11, window_bounds = array<i64: 2, 1, 128>}, {pipeline_mode = #tpu.pipeline_mode<synchronous>, transform_indices = @transform_12, window_bounds = array<i64: 2, 128, 64>}, {pipeline_mode = #tpu.pipeline_mode<synchronous>, transform_indices = @transform_13, window_bounds = array<i64: 2, 1, 64>}, {pipeline_mode = #tpu.pipeline_mode<synchronous>, transform_indices = @transform_14, window_bounds = array<i64: 2, 1, 64>}, {pipeline_mode = #tpu.pipeline_mode<synchronous>, transform_indices = @transform_15, window_bounds = array<i64: 2, 1, 64>}, {pipeline_mode = #tpu.pipeline_mode<synchronous>, transform_indices = @transform_16, window_bounds = array<i64: 64, 256>}, {pipeline_mode = #tpu.pipeline_mode<synchronous>, transform_indices = @transform_17, window_bounds = array<i64: 64, 256>}, {pipeline_mode = #tpu.pipeline_mode<synchronous>, transform_indices = @transform_18, window_bounds = array<i64: 1, 256>}, {pipeline_mode = #tpu.pipeline_mode<synchronous>, transform_indices = @transform_19, window_bounds = array<i64: 1, 256>}, {pipeline_mode = #tpu.pipeline_mode<synchronous>, transform_indices = @transform_20, window_bounds = array<i64: 64, 128>}, {pipeline_mode = #tpu.pipeline_mode<synchronous>, transform_indices = @transform_21, window_bounds = array<i64: 1, 128>}, {transform_indices = @transform_22, window_bounds = array<i64: 1, 8, 128>}]} {
    %c0 = arith.constant 0 : index
    %c0_0 = arith.constant 0 : index
    %c0_1 = arith.constant 0 : index
    %0 = vector.load %arg1[%c0, %c0_0, %c0_1] : memref<1x8x64xf32, #tpu.memory_space<vmem>>, vector<1x8x64xf32>
    %1 = vector.shape_cast %0 : vector<1x8x64xf32> to vector<8x64xf32>
    %c0_2 = arith.constant 0 : index
    %c0_3 = arith.constant 0 : index
    %2 = vector.load %arg3[%c0_2, %c0_3] : memref<1x64xf32, #tpu.memory_space<vmem>>, vector<1x64xf32>
    %c0_4 = arith.constant 0 : index
    %c0_5 = arith.constant 0 : index
    %3 = vector.load %arg4[%c0_4, %c0_5] : memref<1x64xf32, #tpu.memory_space<vmem>>, vector<1x64xf32>
    %cst = arith.constant dense<0.000000e+00> : vector<8xf32>
    %4 = vector.multi_reduction <add>, %1, %cst [1] : vector<8x64xf32> to vector<8xf32>
    %5 = vector.shape_cast %4 : vector<8xf32> to vector<8x1xf32>
    %cst_6 = arith.constant 6.400000e+01 : f32
    %6 = vector.broadcast %cst_6 : f32 to vector<8x1xf32>
    %7 = arith.divf %5, %6 : vector<8x1xf32>
    %8 = vector.broadcast %7 : vector<8x1xf32> to vector<8x64xf32>
    %9 = arith.subf %1, %8 : vector<8x64xf32>
    %10 = arith.mulf %9, %9 : vector<8x64xf32>
    %cst_7 = arith.constant dense<0.000000e+00> : vector<8xf32>
    %11 = vector.multi_reduction <add>, %10, %cst_7 [1] : vector<8x64xf32> to vector<8xf32>
    %12 = vector.shape_cast %11 : vector<8xf32> to vector<8x1xf32>
    %cst_8 = arith.constant 6.400000e+01 : f32
    %13 = vector.broadcast %cst_8 : f32 to vector<8x1xf32>
    %14 = arith.divf %12, %13 : vector<8x1xf32>
    %15 = vector.broadcast %7 : vector<8x1xf32> to vector<8x64xf32>
    %16 = arith.subf %1, %15 : vector<8x64xf32>
    %cst_9 = arith.constant 9.99999996E-13 : f32
    %17 = vector.broadcast %cst_9 : f32 to vector<8x1xf32>
    %18 = arith.addf %14, %17 : vector<8x1xf32>
    %19 = math.rsqrt %18 : vector<8x1xf32>
    %20 = vector.broadcast %19 : vector<8x1xf32> to vector<8x64xf32>
    %21 = arith.mulf %16, %20 : vector<8x64xf32>
    %22 = vector.broadcast %2 : vector<1x64xf32> to vector<8x64xf32>
    %23 = arith.mulf %21, %22 : vector<8x64xf32>
    %24 = vector.broadcast %3 : vector<1x64xf32> to vector<8x64xf32>
    %25 = arith.addf %23, %24 : vector<8x64xf32>
    %c0_10 = arith.constant 0 : index
    %c0_11 = arith.constant 0 : index
    %c0_12 = arith.constant 0 : index
    %26 = vector.load %arg2[%c0_10, %c0_11, %c0_12] : memref<1x1x8xf32, #tpu.memory_space<vmem>>, vector<1x1x8xf32>
    %27 = vector.shape_cast %26 : vector<1x1x8xf32> to vector<1x8xf32>
    %c0_13 = arith.constant 0 : index
    %c0_14 = arith.constant 0 : index
    %c0_15 = arith.constant 0 : index
    %28 = vector.load %arg5[%c0_13, %c0_14, %c0_15] : memref<2x64x192xbf16, #tpu.memory_space<vmem>>, vector<1x64x192xbf16>
    %29 = vector.shape_cast %28 : vector<1x64x192xbf16> to vector<64x192xbf16>
    %30 = arith.truncf %25 : vector<8x64xf32> to vector<8x64xbf16>
    %cst_16 = arith.constant dense<0.000000e+00> : vector<8x192xf32>
    %31 = tpu.matmul %30, %29, %cst_16 {dimension_numbers = #tpu.dot_dimension_numbers<[1], [0], [0], [1], [0, 0, 1, 1], [], []>} : vector<8x64xbf16>, vector<64x192xbf16>, vector<8x192xf32> -> vector<8x192xf32>
    %c0_17 = arith.constant 0 : index
    %c0_18 = arith.constant 0 : index
    %c0_19 = arith.constant 0 : index
    %32 = vector.load %arg6[%c0_17, %c0_18, %c0_19] : memref<2x1x192xf32, #tpu.memory_space<vmem>>, vector<1x1x192xf32>
    %33 = vector.shape_cast %32 : vector<1x1x192xf32> to vector<1x192xf32>
    %34 = vector.broadcast %33 : vector<1x192xf32> to vector<8x192xf32>
    %35 = arith.addf %31, %34 : vector<8x192xf32>
    %36 = vector.extract_strided_slice %35 {offsets = [0, 0], sizes = [8, 32], strides = [1, 1]} : vector<8x192xf32> to vector<8x32xf32>
    %37 = vector.extract_strided_slice %35 {offsets = [0, 64], sizes = [8, 32], strides = [1, 1]} : vector<8x192xf32> to vector<8x32xf32>
    %38 = vector.extract_strided_slice %35 {offsets = [0, 128], sizes = [8, 32], strides = [1, 1]} : vector<8x192xf32> to vector<8x32xf32>
    %39 = arith.truncf %36 : vector<8x32xf32> to vector<8x32xbf16>
    %40 = arith.truncf %37 : vector<8x32xf32> to vector<8x32xbf16>
    "tpu.trace_start"() <{level = 10 : i32, message = "qd,kd->qk"}> : () -> ()
    %cst_20 = arith.constant dense<0.000000e+00> : vector<8x8xf32>
    %41 = tpu.matmul %39, %40, %cst_20 {dimension_numbers = #tpu.dot_dimension_numbers<[1], [1], [0], [0], [0, 0, 1, 0], [], []>} : vector<8x32xbf16>, vector<8x32xbf16>, vector<8x8xf32> -> vector<8x8xf32>
    "tpu.trace_stop"() : () -> ()
    %cst_21 = arith.constant 0.176776692 : f32
    %42 = vector.broadcast %cst_21 : f32 to vector<8x8xf32>
    %43 = arith.mulf %41, %42 : vector<8x8xf32>
    %44 = vector.broadcast %27 : vector<1x8xf32> to vector<8x8xf32>
    %45 = arith.addf %43, %44 : vector<8x8xf32>
    %cst_22 = arith.constant dense<0xFF800000> : vector<8xf32>
    %46 = vector.multi_reduction <maximumf>, %45, %cst_22 [1] : vector<8x8xf32> to vector<8xf32>
    %47 = vector.shape_cast %46 : vector<8xf32> to vector<8x1xf32>
    %48 = vector.broadcast %47 : vector<8x1xf32> to vector<8x8xf32>
    %49 = arith.subf %45, %48 : vector<8x8xf32>
    %50 = math.exp %49 : vector<8x8xf32>
    %cst_23 = arith.constant dense<0.000000e+00> : vector<8xf32>
    %51 = vector.multi_reduction <add>, %50, %cst_23 [1] : vector<8x8xf32> to vector<8xf32>
    %52 = vector.shape_cast %51 : vector<8xf32> to vector<8x1xf32>
    %53 = tpu.reciprocal %52 {approx = true} : vector<8x1xf32> -> vector<8x1xf32>
    %54 = vector.broadcast %53 : vector<8x1xf32> to vector<8x8xf32>
    %55 = arith.mulf %50, %54 : vector<8x8xf32>
    %56 = arith.truncf %55 : vector<8x8xf32> to vector<8x8xbf16>
    %57 = arith.truncf %38 : vector<8x32xf32> to vector<8x32xbf16>
    %cst_24 = arith.constant dense<0.000000e+00> : vector<8x32xf32>
    %58 = tpu.matmul %56, %57, %cst_24 {dimension_numbers = #tpu.dot_dimension_numbers<[1], [0], [0], [1], [0, 0, 1, 1], [], []>} : vector<8x8xbf16>, vector<8x32xbf16>, vector<8x32xf32> -> vector<8x32xf32>
    %59 = vector.extract_strided_slice %35 {offsets = [0, 32], sizes = [8, 32], strides = [1, 1]} : vector<8x192xf32> to vector<8x32xf32>
    %60 = vector.extract_strided_slice %35 {offsets = [0, 96], sizes = [8, 32], strides = [1, 1]} : vector<8x192xf32> to vector<8x32xf32>
    %61 = vector.extract_strided_slice %35 {offsets = [0, 160], sizes = [8, 32], strides = [1, 1]} : vector<8x192xf32> to vector<8x32xf32>
    %62 = arith.truncf %59 : vector<8x32xf32> to vector<8x32xbf16>
    %63 = arith.truncf %60 : vector<8x32xf32> to vector<8x32xbf16>
    "tpu.trace_start"() <{level = 10 : i32, message = "qd,kd->qk"}> : () -> ()
    %cst_25 = arith.constant dense<0.000000e+00> : vector<8x8xf32>
    %64 = tpu.matmul %62, %63, %cst_25 {dimension_numbers = #tpu.dot_dimension_numbers<[1], [1], [0], [0], [0, 0, 1, 0], [], []>} : vector<8x32xbf16>, vector<8x32xbf16>, vector<8x8xf32> -> vector<8x8xf32>
    "tpu.trace_stop"() : () -> ()
    %cst_26 = arith.constant 0.176776692 : f32
    %65 = vector.broadcast %cst_26 : f32 to vector<8x8xf32>
    %66 = arith.mulf %64, %65 : vector<8x8xf32>
    %67 = vector.broadcast %27 : vector<1x8xf32> to vector<8x8xf32>
    %68 = arith.addf %66, %67 : vector<8x8xf32>
    %cst_27 = arith.constant dense<0xFF800000> : vector<8xf32>
    %69 = vector.multi_reduction <maximumf>, %68, %cst_27 [1] : vector<8x8xf32> to vector<8xf32>
    %70 = vector.shape_cast %69 : vector<8xf32> to vector<8x1xf32>
    %71 = vector.broadcast %70 : vector<8x1xf32> to vector<8x8xf32>
    %72 = arith.subf %68, %71 : vector<8x8xf32>
    %73 = math.exp %72 : vector<8x8xf32>
    %cst_28 = arith.constant dense<0.000000e+00> : vector<8xf32>
    %74 = vector.multi_reduction <add>, %73, %cst_28 [1] : vector<8x8xf32> to vector<8xf32>
    %75 = vector.shape_cast %74 : vector<8xf32> to vector<8x1xf32>
    %76 = tpu.reciprocal %75 {approx = true} : vector<8x1xf32> -> vector<8x1xf32>
    %77 = vector.broadcast %76 : vector<8x1xf32> to vector<8x8xf32>
    %78 = arith.mulf %73, %77 : vector<8x8xf32>
    %79 = arith.truncf %78 : vector<8x8xf32> to vector<8x8xbf16>
    %80 = arith.truncf %61 : vector<8x32xf32> to vector<8x32xbf16>
    %cst_29 = arith.constant dense<0.000000e+00> : vector<8x32xf32>
    %81 = tpu.matmul %79, %80, %cst_29 {dimension_numbers = #tpu.dot_dimension_numbers<[1], [0], [0], [1], [0, 0, 1, 1], [], []>} : vector<8x8xbf16>, vector<8x32xbf16>, vector<8x32xf32> -> vector<8x32xf32>
    %82 = tpu.concatenate %58, %81 in 1 : vector<8x32xf32>, vector<8x32xf32> -> vector<8x64xf32>
    %c0_30 = arith.constant 0 : index
    %c0_31 = arith.constant 0 : index
    %c0_32 = arith.constant 0 : index
    %83 = vector.load %arg7[%c0_30, %c0_31, %c0_32] : memref<2x64x64xbf16, #tpu.memory_space<vmem>>, vector<1x64x64xbf16>
    %84 = vector.shape_cast %83 : vector<1x64x64xbf16> to vector<64x64xbf16>
    %85 = arith.truncf %82 : vector<8x64xf32> to vector<8x64xbf16>
    %cst_33 = arith.constant dense<0.000000e+00> : vector<8x64xf32>
    %86 = tpu.matmul %85, %84, %cst_33 {dimension_numbers = #tpu.dot_dimension_numbers<[1], [0], [0], [1], [0, 0, 1, 1], [], []>} : vector<8x64xbf16>, vector<64x64xbf16>, vector<8x64xf32> -> vector<8x64xf32>
    %c0_34 = arith.constant 0 : index
    %c0_35 = arith.constant 0 : index
    %c0_36 = arith.constant 0 : index
    %87 = vector.load %arg8[%c0_34, %c0_35, %c0_36] : memref<2x1x64xf32, #tpu.memory_space<vmem>>, vector<1x1x64xf32>
    %88 = vector.shape_cast %87 : vector<1x1x64xf32> to vector<1x64xf32>
    %89 = vector.broadcast %88 : vector<1x64xf32> to vector<8x64xf32>
    %90 = arith.addf %86, %89 : vector<8x64xf32>
    %91 = arith.addf %25, %90 : vector<8x64xf32>
    %c0_37 = arith.constant 0 : index
    %c0_38 = arith.constant 0 : index
    %c0_39 = arith.constant 0 : index
    %92 = vector.load %arg9[%c0_37, %c0_38, %c0_39] : memref<2x1x64xf32, #tpu.memory_space<vmem>>, vector<1x1x64xf32>
    %93 = vector.shape_cast %92 : vector<1x1x64xf32> to vector<1x64xf32>
    %c0_40 = arith.constant 0 : index
    %c0_41 = arith.constant 0 : index
    %c0_42 = arith.constant 0 : index
    %94 = vector.load %arg10[%c0_40, %c0_41, %c0_42] : memref<2x1x64xf32, #tpu.memory_space<vmem>>, vector<1x1x64xf32>
    %95 = vector.shape_cast %94 : vector<1x1x64xf32> to vector<1x64xf32>
    %cst_43 = arith.constant dense<0.000000e+00> : vector<8xf32>
    %96 = vector.multi_reduction <add>, %91, %cst_43 [1] : vector<8x64xf32> to vector<8xf32>
    %97 = vector.shape_cast %96 : vector<8xf32> to vector<8x1xf32>
    %cst_44 = arith.constant 6.400000e+01 : f32
    %98 = vector.broadcast %cst_44 : f32 to vector<8x1xf32>
    %99 = arith.divf %97, %98 : vector<8x1xf32>
    %100 = vector.broadcast %99 : vector<8x1xf32> to vector<8x64xf32>
    %101 = arith.subf %91, %100 : vector<8x64xf32>
    %102 = arith.mulf %101, %101 : vector<8x64xf32>
    %cst_45 = arith.constant dense<0.000000e+00> : vector<8xf32>
    %103 = vector.multi_reduction <add>, %102, %cst_45 [1] : vector<8x64xf32> to vector<8xf32>
    %104 = vector.shape_cast %103 : vector<8xf32> to vector<8x1xf32>
    %cst_46 = arith.constant 6.400000e+01 : f32
    %105 = vector.broadcast %cst_46 : f32 to vector<8x1xf32>
    %106 = arith.divf %104, %105 : vector<8x1xf32>
    %107 = vector.broadcast %99 : vector<8x1xf32> to vector<8x64xf32>
    %108 = arith.subf %91, %107 : vector<8x64xf32>
    %cst_47 = arith.constant 9.99999996E-13 : f32
    %109 = vector.broadcast %cst_47 : f32 to vector<8x1xf32>
    %110 = arith.addf %106, %109 : vector<8x1xf32>
    %111 = math.rsqrt %110 : vector<8x1xf32>
    %112 = vector.broadcast %111 : vector<8x1xf32> to vector<8x64xf32>
    %113 = arith.mulf %108, %112 : vector<8x64xf32>
    %114 = vector.broadcast %93 : vector<1x64xf32> to vector<8x64xf32>
    %115 = arith.mulf %113, %114 : vector<8x64xf32>
    %116 = vector.broadcast %95 : vector<1x64xf32> to vector<8x64xf32>
    %117 = arith.addf %115, %116 : vector<8x64xf32>
    %c0_48 = arith.constant 0 : index
    %c0_49 = arith.constant 0 : index
    %c0_50 = arith.constant 0 : index
    %118 = vector.load %arg11[%c0_48, %c0_49, %c0_50] : memref<2x64x128xbf16, #tpu.memory_space<vmem>>, vector<1x64x128xbf16>
    %119 = vector.shape_cast %118 : vector<1x64x128xbf16> to vector<64x128xbf16>
    %120 = arith.truncf %117 : vector<8x64xf32> to vector<8x64xbf16>
    %cst_51 = arith.constant dense<0.000000e+00> : vector<8x128xf32>
    %121 = tpu.matmul %120, %119, %cst_51 {dimension_numbers = #tpu.dot_dimension_numbers<[1], [0], [0], [1], [0, 0, 1, 1], [], []>} : vector<8x64xbf16>, vector<64x128xbf16>, vector<8x128xf32> -> vector<8x128xf32>
    %c0_52 = arith.constant 0 : index
    %c0_53 = arith.constant 0 : index
    %c0_54 = arith.constant 0 : index
    %122 = vector.load %arg12[%c0_52, %c0_53, %c0_54] : memref<2x1x128xf32, #tpu.memory_space<vmem>>, vector<1x1x128xf32>
    %123 = vector.shape_cast %122 : vector<1x1x128xf32> to vector<1x128xf32>
    %124 = vector.broadcast %123 : vector<1x128xf32> to vector<8x128xf32>
    %125 = arith.addf %121, %124 : vector<8x128xf32>
    %126 = arith.mulf %125, %125 : vector<8x128xf32>
    %127 = arith.mulf %125, %126 : vector<8x128xf32>
    %cst_55 = arith.constant 4.471500e-02 : f32
    %128 = vector.broadcast %cst_55 : f32 to vector<8x128xf32>
    %129 = arith.mulf %128, %127 : vector<8x128xf32>
    %130 = arith.addf %125, %129 : vector<8x128xf32>
    %cst_56 = arith.constant 0.797884583 : f32
    %131 = vector.broadcast %cst_56 : f32 to vector<8x128xf32>
    %132 = arith.mulf %131, %130 : vector<8x128xf32>
    %133 = math.tanh %132 : vector<8x128xf32>
    %cst_57 = arith.constant 1.000000e+00 : f32
    %134 = vector.broadcast %cst_57 : f32 to vector<8x128xf32>
    %135 = arith.addf %134, %133 : vector<8x128xf32>
    %cst_58 = arith.constant 5.000000e-01 : f32
    %136 = vector.broadcast %cst_58 : f32 to vector<8x128xf32>
    %137 = arith.mulf %136, %135 : vector<8x128xf32>
    %138 = arith.mulf %125, %137 : vector<8x128xf32>
    %c0_59 = arith.constant 0 : index
    %c0_60 = arith.constant 0 : index
    %c0_61 = arith.constant 0 : index
    %139 = vector.load %arg13[%c0_59, %c0_60, %c0_61] : memref<2x128x64xbf16, #tpu.memory_space<vmem>>, vector<1x128x64xbf16>
    %140 = vector.shape_cast %139 : vector<1x128x64xbf16> to vector<128x64xbf16>
    %141 = arith.truncf %138 : vector<8x128xf32> to vector<8x128xbf16>
    %cst_62 = arith.constant dense<0.000000e+00> : vector<8x64xf32>
    %142 = tpu.matmul %141, %140, %cst_62 {dimension_numbers = #tpu.dot_dimension_numbers<[1], [0], [0], [1], [0, 0, 1, 1], [], []>} : vector<8x128xbf16>, vector<128x64xbf16>, vector<8x64xf32> -> vector<8x64xf32>
    %c0_63 = arith.constant 0 : index
    %c0_64 = arith.constant 0 : index
    %c0_65 = arith.constant 0 : index
    %143 = vector.load %arg14[%c0_63, %c0_64, %c0_65] : memref<2x1x64xf32, #tpu.memory_space<vmem>>, vector<1x1x64xf32>
    %144 = vector.shape_cast %143 : vector<1x1x64xf32> to vector<1x64xf32>
    %145 = vector.broadcast %144 : vector<1x64xf32> to vector<8x64xf32>
    %146 = arith.addf %142, %145 : vector<8x64xf32>
    %147 = arith.addf %117, %146 : vector<8x64xf32>
    %c0_66 = arith.constant 0 : index
    %c0_67 = arith.constant 0 : index
    %c0_68 = arith.constant 0 : index
    %148 = vector.load %arg15[%c0_66, %c0_67, %c0_68] : memref<2x1x64xf32, #tpu.memory_space<vmem>>, vector<1x1x64xf32>
    %149 = vector.shape_cast %148 : vector<1x1x64xf32> to vector<1x64xf32>
    %c0_69 = arith.constant 0 : index
    %c0_70 = arith.constant 0 : index
    %c0_71 = arith.constant 0 : index
    %150 = vector.load %arg16[%c0_69, %c0_70, %c0_71] : memref<2x1x64xf32, #tpu.memory_space<vmem>>, vector<1x1x64xf32>
    %151 = vector.shape_cast %150 : vector<1x1x64xf32> to vector<1x64xf32>
    %cst_72 = arith.constant dense<0.000000e+00> : vector<8xf32>
    %152 = vector.multi_reduction <add>, %147, %cst_72 [1] : vector<8x64xf32> to vector<8xf32>
    %153 = vector.shape_cast %152 : vector<8xf32> to vector<8x1xf32>
    %cst_73 = arith.constant 6.400000e+01 : f32
    %154 = vector.broadcast %cst_73 : f32 to vector<8x1xf32>
    %155 = arith.divf %153, %154 : vector<8x1xf32>
    %156 = vector.broadcast %155 : vector<8x1xf32> to vector<8x64xf32>
    %157 = arith.subf %147, %156 : vector<8x64xf32>
    %158 = arith.mulf %157, %157 : vector<8x64xf32>
    %cst_74 = arith.constant dense<0.000000e+00> : vector<8xf32>
    %159 = vector.multi_reduction <add>, %158, %cst_74 [1] : vector<8x64xf32> to vector<8xf32>
    %160 = vector.shape_cast %159 : vector<8xf32> to vector<8x1xf32>
    %cst_75 = arith.constant 6.400000e+01 : f32
    %161 = vector.broadcast %cst_75 : f32 to vector<8x1xf32>
    %162 = arith.divf %160, %161 : vector<8x1xf32>
    %163 = vector.broadcast %155 : vector<8x1xf32> to vector<8x64xf32>
    %164 = arith.subf %147, %163 : vector<8x64xf32>
    %cst_76 = arith.constant 9.99999996E-13 : f32
    %165 = vector.broadcast %cst_76 : f32 to vector<8x1xf32>
    %166 = arith.addf %162, %165 : vector<8x1xf32>
    %167 = math.rsqrt %166 : vector<8x1xf32>
    %168 = vector.broadcast %167 : vector<8x1xf32> to vector<8x64xf32>
    %169 = arith.mulf %164, %168 : vector<8x64xf32>
    %170 = vector.broadcast %149 : vector<1x64xf32> to vector<8x64xf32>
    %171 = arith.mulf %169, %170 : vector<8x64xf32>
    %172 = vector.broadcast %151 : vector<1x64xf32> to vector<8x64xf32>
    %173 = arith.addf %171, %172 : vector<8x64xf32>
    %c1 = arith.constant 1 : index
    %c0_77 = arith.constant 0 : index
    %c0_78 = arith.constant 0 : index
    %174 = vector.load %arg5[%c1, %c0_77, %c0_78] : memref<2x64x192xbf16, #tpu.memory_space<vmem>>, vector<1x64x192xbf16>
    %175 = vector.shape_cast %174 : vector<1x64x192xbf16> to vector<64x192xbf16>
    %176 = arith.truncf %173 : vector<8x64xf32> to vector<8x64xbf16>
    %cst_79 = arith.constant dense<0.000000e+00> : vector<8x192xf32>
    %177 = tpu.matmul %176, %175, %cst_79 {dimension_numbers = #tpu.dot_dimension_numbers<[1], [0], [0], [1], [0, 0, 1, 1], [], []>} : vector<8x64xbf16>, vector<64x192xbf16>, vector<8x192xf32> -> vector<8x192xf32>
    %c1_80 = arith.constant 1 : index
    %c0_81 = arith.constant 0 : index
    %c0_82 = arith.constant 0 : index
    %178 = vector.load %arg6[%c1_80, %c0_81, %c0_82] : memref<2x1x192xf32, #tpu.memory_space<vmem>>, vector<1x1x192xf32>
    %179 = vector.shape_cast %178 : vector<1x1x192xf32> to vector<1x192xf32>
    %180 = vector.broadcast %179 : vector<1x192xf32> to vector<8x192xf32>
    %181 = arith.addf %177, %180 : vector<8x192xf32>
    %182 = vector.extract_strided_slice %181 {offsets = [0, 0], sizes = [8, 32], strides = [1, 1]} : vector<8x192xf32> to vector<8x32xf32>
    %183 = vector.extract_strided_slice %181 {offsets = [0, 64], sizes = [8, 32], strides = [1, 1]} : vector<8x192xf32> to vector<8x32xf32>
    %184 = vector.extract_strided_slice %181 {offsets = [0, 128], sizes = [8, 32], strides = [1, 1]} : vector<8x192xf32> to vector<8x32xf32>
    %185 = arith.truncf %182 : vector<8x32xf32> to vector<8x32xbf16>
    %186 = arith.truncf %183 : vector<8x32xf32> to vector<8x32xbf16>
    "tpu.trace_start"() <{level = 10 : i32, message = "qd,kd->qk"}> : () -> ()
    %cst_83 = arith.constant dense<0.000000e+00> : vector<8x8xf32>
    %187 = tpu.matmul %185, %186, %cst_83 {dimension_numbers = #tpu.dot_dimension_numbers<[1], [1], [0], [0], [0, 0, 1, 0], [], []>} : vector<8x32xbf16>, vector<8x32xbf16>, vector<8x8xf32> -> vector<8x8xf32>
    "tpu.trace_stop"() : () -> ()
    %cst_84 = arith.constant 0.176776692 : f32
    %188 = vector.broadcast %cst_84 : f32 to vector<8x8xf32>
    %189 = arith.mulf %187, %188 : vector<8x8xf32>
    %190 = vector.broadcast %27 : vector<1x8xf32> to vector<8x8xf32>
    %191 = arith.addf %189, %190 : vector<8x8xf32>
    %cst_85 = arith.constant dense<0xFF800000> : vector<8xf32>
    %192 = vector.multi_reduction <maximumf>, %191, %cst_85 [1] : vector<8x8xf32> to vector<8xf32>
    %193 = vector.shape_cast %192 : vector<8xf32> to vector<8x1xf32>
    %194 = vector.broadcast %193 : vector<8x1xf32> to vector<8x8xf32>
    %195 = arith.subf %191, %194 : vector<8x8xf32>
    %196 = math.exp %195 : vector<8x8xf32>
    %cst_86 = arith.constant dense<0.000000e+00> : vector<8xf32>
    %197 = vector.multi_reduction <add>, %196, %cst_86 [1] : vector<8x8xf32> to vector<8xf32>
    %198 = vector.shape_cast %197 : vector<8xf32> to vector<8x1xf32>
    %199 = tpu.reciprocal %198 {approx = true} : vector<8x1xf32> -> vector<8x1xf32>
    %200 = vector.broadcast %199 : vector<8x1xf32> to vector<8x8xf32>
    %201 = arith.mulf %196, %200 : vector<8x8xf32>
    %202 = arith.truncf %201 : vector<8x8xf32> to vector<8x8xbf16>
    %203 = arith.truncf %184 : vector<8x32xf32> to vector<8x32xbf16>
    %cst_87 = arith.constant dense<0.000000e+00> : vector<8x32xf32>
    %204 = tpu.matmul %202, %203, %cst_87 {dimension_numbers = #tpu.dot_dimension_numbers<[1], [0], [0], [1], [0, 0, 1, 1], [], []>} : vector<8x8xbf16>, vector<8x32xbf16>, vector<8x32xf32> -> vector<8x32xf32>
    %205 = vector.extract_strided_slice %181 {offsets = [0, 32], sizes = [8, 32], strides = [1, 1]} : vector<8x192xf32> to vector<8x32xf32>
    %206 = vector.extract_strided_slice %181 {offsets = [0, 96], sizes = [8, 32], strides = [1, 1]} : vector<8x192xf32> to vector<8x32xf32>
    %207 = vector.extract_strided_slice %181 {offsets = [0, 160], sizes = [8, 32], strides = [1, 1]} : vector<8x192xf32> to vector<8x32xf32>
    %208 = arith.truncf %205 : vector<8x32xf32> to vector<8x32xbf16>
    %209 = arith.truncf %206 : vector<8x32xf32> to vector<8x32xbf16>
    "tpu.trace_start"() <{level = 10 : i32, message = "qd,kd->qk"}> : () -> ()
    %cst_88 = arith.constant dense<0.000000e+00> : vector<8x8xf32>
    %210 = tpu.matmul %208, %209, %cst_88 {dimension_numbers = #tpu.dot_dimension_numbers<[1], [1], [0], [0], [0, 0, 1, 0], [], []>} : vector<8x32xbf16>, vector<8x32xbf16>, vector<8x8xf32> -> vector<8x8xf32>
    "tpu.trace_stop"() : () -> ()
    %cst_89 = arith.constant 0.176776692 : f32
    %211 = vector.broadcast %cst_89 : f32 to vector<8x8xf32>
    %212 = arith.mulf %210, %211 : vector<8x8xf32>
    %213 = vector.broadcast %27 : vector<1x8xf32> to vector<8x8xf32>
    %214 = arith.addf %212, %213 : vector<8x8xf32>
    %cst_90 = arith.constant dense<0xFF800000> : vector<8xf32>
    %215 = vector.multi_reduction <maximumf>, %214, %cst_90 [1] : vector<8x8xf32> to vector<8xf32>
    %216 = vector.shape_cast %215 : vector<8xf32> to vector<8x1xf32>
    %217 = vector.broadcast %216 : vector<8x1xf32> to vector<8x8xf32>
    %218 = arith.subf %214, %217 : vector<8x8xf32>
    %219 = math.exp %218 : vector<8x8xf32>
    %cst_91 = arith.constant dense<0.000000e+00> : vector<8xf32>
    %220 = vector.multi_reduction <add>, %219, %cst_91 [1] : vector<8x8xf32> to vector<8xf32>
    %221 = vector.shape_cast %220 : vector<8xf32> to vector<8x1xf32>
    %222 = tpu.reciprocal %221 {approx = true} : vector<8x1xf32> -> vector<8x1xf32>
    %223 = vector.broadcast %222 : vector<8x1xf32> to vector<8x8xf32>
    %224 = arith.mulf %219, %223 : vector<8x8xf32>
    %225 = arith.truncf %224 : vector<8x8xf32> to vector<8x8xbf16>
    %226 = arith.truncf %207 : vector<8x32xf32> to vector<8x32xbf16>
    %cst_92 = arith.constant dense<0.000000e+00> : vector<8x32xf32>
    %227 = tpu.matmul %225, %226, %cst_92 {dimension_numbers = #tpu.dot_dimension_numbers<[1], [0], [0], [1], [0, 0, 1, 1], [], []>} : vector<8x8xbf16>, vector<8x32xbf16>, vector<8x32xf32> -> vector<8x32xf32>
    %228 = tpu.concatenate %204, %227 in 1 : vector<8x32xf32>, vector<8x32xf32> -> vector<8x64xf32>
    %c1_93 = arith.constant 1 : index
    %c0_94 = arith.constant 0 : index
    %c0_95 = arith.constant 0 : index
    %229 = vector.load %arg7[%c1_93, %c0_94, %c0_95] : memref<2x64x64xbf16, #tpu.memory_space<vmem>>, vector<1x64x64xbf16>
    %230 = vector.shape_cast %229 : vector<1x64x64xbf16> to vector<64x64xbf16>
    %231 = arith.truncf %228 : vector<8x64xf32> to vector<8x64xbf16>
    %cst_96 = arith.constant dense<0.000000e+00> : vector<8x64xf32>
    %232 = tpu.matmul %231, %230, %cst_96 {dimension_numbers = #tpu.dot_dimension_numbers<[1], [0], [0], [1], [0, 0, 1, 1], [], []>} : vector<8x64xbf16>, vector<64x64xbf16>, vector<8x64xf32> -> vector<8x64xf32>
    %c1_97 = arith.constant 1 : index
    %c0_98 = arith.constant 0 : index
    %c0_99 = arith.constant 0 : index
    %233 = vector.load %arg8[%c1_97, %c0_98, %c0_99] : memref<2x1x64xf32, #tpu.memory_space<vmem>>, vector<1x1x64xf32>
    %234 = vector.shape_cast %233 : vector<1x1x64xf32> to vector<1x64xf32>
    %235 = vector.broadcast %234 : vector<1x64xf32> to vector<8x64xf32>
    %236 = arith.addf %232, %235 : vector<8x64xf32>
    %237 = arith.addf %173, %236 : vector<8x64xf32>
    %c1_100 = arith.constant 1 : index
    %c0_101 = arith.constant 0 : index
    %c0_102 = arith.constant 0 : index
    %238 = vector.load %arg9[%c1_100, %c0_101, %c0_102] : memref<2x1x64xf32, #tpu.memory_space<vmem>>, vector<1x1x64xf32>
    %239 = vector.shape_cast %238 : vector<1x1x64xf32> to vector<1x64xf32>
    %c1_103 = arith.constant 1 : index
    %c0_104 = arith.constant 0 : index
    %c0_105 = arith.constant 0 : index
    %240 = vector.load %arg10[%c1_103, %c0_104, %c0_105] : memref<2x1x64xf32, #tpu.memory_space<vmem>>, vector<1x1x64xf32>
    %241 = vector.shape_cast %240 : vector<1x1x64xf32> to vector<1x64xf32>
    %cst_106 = arith.constant dense<0.000000e+00> : vector<8xf32>
    %242 = vector.multi_reduction <add>, %237, %cst_106 [1] : vector<8x64xf32> to vector<8xf32>
    %243 = vector.shape_cast %242 : vector<8xf32> to vector<8x1xf32>
    %cst_107 = arith.constant 6.400000e+01 : f32
    %244 = vector.broadcast %cst_107 : f32 to vector<8x1xf32>
    %245 = arith.divf %243, %244 : vector<8x1xf32>
    %246 = vector.broadcast %245 : vector<8x1xf32> to vector<8x64xf32>
    %247 = arith.subf %237, %246 : vector<8x64xf32>
    %248 = arith.mulf %247, %247 : vector<8x64xf32>
    %cst_108 = arith.constant dense<0.000000e+00> : vector<8xf32>
    %249 = vector.multi_reduction <add>, %248, %cst_108 [1] : vector<8x64xf32> to vector<8xf32>
    %250 = vector.shape_cast %249 : vector<8xf32> to vector<8x1xf32>
    %cst_109 = arith.constant 6.400000e+01 : f32
    %251 = vector.broadcast %cst_109 : f32 to vector<8x1xf32>
    %252 = arith.divf %250, %251 : vector<8x1xf32>
    %253 = vector.broadcast %245 : vector<8x1xf32> to vector<8x64xf32>
    %254 = arith.subf %237, %253 : vector<8x64xf32>
    %cst_110 = arith.constant 9.99999996E-13 : f32
    %255 = vector.broadcast %cst_110 : f32 to vector<8x1xf32>
    %256 = arith.addf %252, %255 : vector<8x1xf32>
    %257 = math.rsqrt %256 : vector<8x1xf32>
    %258 = vector.broadcast %257 : vector<8x1xf32> to vector<8x64xf32>
    %259 = arith.mulf %254, %258 : vector<8x64xf32>
    %260 = vector.broadcast %239 : vector<1x64xf32> to vector<8x64xf32>
    %261 = arith.mulf %259, %260 : vector<8x64xf32>
    %262 = vector.broadcast %241 : vector<1x64xf32> to vector<8x64xf32>
    %263 = arith.addf %261, %262 : vector<8x64xf32>
    %c1_111 = arith.constant 1 : index
    %c0_112 = arith.constant 0 : index
    %c0_113 = arith.constant 0 : index
    %264 = vector.load %arg11[%c1_111, %c0_112, %c0_113] : memref<2x64x128xbf16, #tpu.memory_space<vmem>>, vector<1x64x128xbf16>
    %265 = vector.shape_cast %264 : vector<1x64x128xbf16> to vector<64x128xbf16>
    %266 = arith.truncf %263 : vector<8x64xf32> to vector<8x64xbf16>
    %cst_114 = arith.constant dense<0.000000e+00> : vector<8x128xf32>
    %267 = tpu.matmul %266, %265, %cst_114 {dimension_numbers = #tpu.dot_dimension_numbers<[1], [0], [0], [1], [0, 0, 1, 1], [], []>} : vector<8x64xbf16>, vector<64x128xbf16>, vector<8x128xf32> -> vector<8x128xf32>
    %c1_115 = arith.constant 1 : index
    %c0_116 = arith.constant 0 : index
    %c0_117 = arith.constant 0 : index
    %268 = vector.load %arg12[%c1_115, %c0_116, %c0_117] : memref<2x1x128xf32, #tpu.memory_space<vmem>>, vector<1x1x128xf32>
    %269 = vector.shape_cast %268 : vector<1x1x128xf32> to vector<1x128xf32>
    %270 = vector.broadcast %269 : vector<1x128xf32> to vector<8x128xf32>
    %271 = arith.addf %267, %270 : vector<8x128xf32>
    %272 = arith.mulf %271, %271 : vector<8x128xf32>
    %273 = arith.mulf %271, %272 : vector<8x128xf32>
    %cst_118 = arith.constant 4.471500e-02 : f32
    %274 = vector.broadcast %cst_118 : f32 to vector<8x128xf32>
    %275 = arith.mulf %274, %273 : vector<8x128xf32>
    %276 = arith.addf %271, %275 : vector<8x128xf32>
    %cst_119 = arith.constant 0.797884583 : f32
    %277 = vector.broadcast %cst_119 : f32 to vector<8x128xf32>
    %278 = arith.mulf %277, %276 : vector<8x128xf32>
    %279 = math.tanh %278 : vector<8x128xf32>
    %cst_120 = arith.constant 1.000000e+00 : f32
    %280 = vector.broadcast %cst_120 : f32 to vector<8x128xf32>
    %281 = arith.addf %280, %279 : vector<8x128xf32>
    %cst_121 = arith.constant 5.000000e-01 : f32
    %282 = vector.broadcast %cst_121 : f32 to vector<8x128xf32>
    %283 = arith.mulf %282, %281 : vector<8x128xf32>
    %284 = arith.mulf %271, %283 : vector<8x128xf32>
    %c1_122 = arith.constant 1 : index
    %c0_123 = arith.constant 0 : index
    %c0_124 = arith.constant 0 : index
    %285 = vector.load %arg13[%c1_122, %c0_123, %c0_124] : memref<2x128x64xbf16, #tpu.memory_space<vmem>>, vector<1x128x64xbf16>
    %286 = vector.shape_cast %285 : vector<1x128x64xbf16> to vector<128x64xbf16>
    %287 = arith.truncf %284 : vector<8x128xf32> to vector<8x128xbf16>
    %cst_125 = arith.constant dense<0.000000e+00> : vector<8x64xf32>
    %288 = tpu.matmul %287, %286, %cst_125 {dimension_numbers = #tpu.dot_dimension_numbers<[1], [0], [0], [1], [0, 0, 1, 1], [], []>} : vector<8x128xbf16>, vector<128x64xbf16>, vector<8x64xf32> -> vector<8x64xf32>
    %c1_126 = arith.constant 1 : index
    %c0_127 = arith.constant 0 : index
    %c0_128 = arith.constant 0 : index
    %289 = vector.load %arg14[%c1_126, %c0_127, %c0_128] : memref<2x1x64xf32, #tpu.memory_space<vmem>>, vector<1x1x64xf32>
    %290 = vector.shape_cast %289 : vector<1x1x64xf32> to vector<1x64xf32>
    %291 = vector.broadcast %290 : vector<1x64xf32> to vector<8x64xf32>
    %292 = arith.addf %288, %291 : vector<8x64xf32>
    %293 = arith.addf %263, %292 : vector<8x64xf32>
    %c1_129 = arith.constant 1 : index
    %c0_130 = arith.constant 0 : index
    %c0_131 = arith.constant 0 : index
    %294 = vector.load %arg15[%c1_129, %c0_130, %c0_131] : memref<2x1x64xf32, #tpu.memory_space<vmem>>, vector<1x1x64xf32>
    %295 = vector.shape_cast %294 : vector<1x1x64xf32> to vector<1x64xf32>
    %c1_132 = arith.constant 1 : index
    %c0_133 = arith.constant 0 : index
    %c0_134 = arith.constant 0 : index
    %296 = vector.load %arg16[%c1_132, %c0_133, %c0_134] : memref<2x1x64xf32, #tpu.memory_space<vmem>>, vector<1x1x64xf32>
    %297 = vector.shape_cast %296 : vector<1x1x64xf32> to vector<1x64xf32>
    %cst_135 = arith.constant dense<0.000000e+00> : vector<8xf32>
    %298 = vector.multi_reduction <add>, %293, %cst_135 [1] : vector<8x64xf32> to vector<8xf32>
    %299 = vector.shape_cast %298 : vector<8xf32> to vector<8x1xf32>
    %cst_136 = arith.constant 6.400000e+01 : f32
    %300 = vector.broadcast %cst_136 : f32 to vector<8x1xf32>
    %301 = arith.divf %299, %300 : vector<8x1xf32>
    %302 = vector.broadcast %301 : vector<8x1xf32> to vector<8x64xf32>
    %303 = arith.subf %293, %302 : vector<8x64xf32>
    %304 = arith.mulf %303, %303 : vector<8x64xf32>
    %cst_137 = arith.constant dense<0.000000e+00> : vector<8xf32>
    %305 = vector.multi_reduction <add>, %304, %cst_137 [1] : vector<8x64xf32> to vector<8xf32>
    %306 = vector.shape_cast %305 : vector<8xf32> to vector<8x1xf32>
    %cst_138 = arith.constant 6.400000e+01 : f32
    %307 = vector.broadcast %cst_138 : f32 to vector<8x1xf32>
    %308 = arith.divf %306, %307 : vector<8x1xf32>
    %309 = vector.broadcast %301 : vector<8x1xf32> to vector<8x64xf32>
    %310 = arith.subf %293, %309 : vector<8x64xf32>
    %cst_139 = arith.constant 9.99999996E-13 : f32
    %311 = vector.broadcast %cst_139 : f32 to vector<8x1xf32>
    %312 = arith.addf %308, %311 : vector<8x1xf32>
    %313 = math.rsqrt %312 : vector<8x1xf32>
    %314 = vector.broadcast %313 : vector<8x1xf32> to vector<8x64xf32>
    %315 = arith.mulf %310, %314 : vector<8x64xf32>
    %316 = vector.broadcast %295 : vector<1x64xf32> to vector<8x64xf32>
    %317 = arith.mulf %315, %316 : vector<8x64xf32>
    %318 = vector.broadcast %297 : vector<1x64xf32> to vector<8x64xf32>
    %319 = arith.addf %317, %318 : vector<8x64xf32>
    %c0_140 = arith.constant 0 : index
    %c0_141 = arith.constant 0 : index
    %320 = vector.load %arg17[%c0_140, %c0_141] : memref<64x256xbf16, #tpu.memory_space<vmem>>, vector<64x256xbf16>
    %c0_142 = arith.constant 0 : index
    %c0_143 = arith.constant 0 : index
    %321 = vector.load %arg18[%c0_142, %c0_143] : memref<64x256xbf16, #tpu.memory_space<vmem>>, vector<64x256xbf16>
    %c0_144 = arith.constant 0 : index
    %c0_145 = arith.constant 0 : index
    %322 = vector.load %arg19[%c0_144, %c0_145] : memref<1x256xf32, #tpu.memory_space<vmem>>, vector<1x256xf32>
    %c0_146 = arith.constant 0 : index
    %c0_147 = arith.constant 0 : index
    %323 = vector.load %arg20[%c0_146, %c0_147] : memref<1x256xf32, #tpu.memory_space<vmem>>, vector<1x256xf32>
    %324 = arith.addf %322, %323 : vector<1x256xf32>
    %cst_148 = arith.constant 0.000000e+00 : f32
    %325 = vector.broadcast %cst_148 : f32 to vector<1x64xf32>
    %cst_149 = arith.constant 0.000000e+00 : f32
    %326 = vector.broadcast %cst_149 : f32 to vector<1x64xf32>
    %327 = vector.extract_strided_slice %319 {offsets = [0, 0], sizes = [1, 64], strides = [1, 1]} : vector<8x64xf32> to vector<1x64xf32>
    %328 = arith.truncf %327 : vector<1x64xf32> to vector<1x64xbf16>
    %cst_150 = arith.constant dense<0.000000e+00> : vector<1x256xf32>
    %329 = tpu.matmul %328, %320, %cst_150 {dimension_numbers = #tpu.dot_dimension_numbers<[1], [0], [0], [1], [0, 0, 1, 1], [], []>} : vector<1x64xbf16>, vector<64x256xbf16>, vector<1x256xf32> -> vector<1x256xf32>
    %cst_151 = arith.constant dense<0.000000e+00> : vector<1x256xf32>
    %330 = tpu.matmul %325, %321, %cst_151 {dimension_numbers = #tpu.dot_dimension_numbers<[1], [0], [0], [1], [0, 0, 1, 1], [], []>} : vector<1x64xf32>, vector<64x256xbf16>, vector<1x256xf32> -> vector<1x256xf32>
    %331 = arith.addf %329, %330 : vector<1x256xf32>
    %332 = arith.addf %331, %324 : vector<1x256xf32>
    %333 = vector.extract_strided_slice %332 {offsets = [0, 0], sizes = [1, 64], strides = [1, 1]} : vector<1x256xf32> to vector<1x64xf32>
    %334 = arith.negf %333 : vector<1x64xf32>
    %335 = math.exp %334 : vector<1x64xf32>
    %cst_152 = arith.constant 1.000000e+00 : f32
    %336 = vector.broadcast %cst_152 : f32 to vector<1x64xf32>
    %337 = arith.addf %336, %335 : vector<1x64xf32>
    %338 = arith.divf %336, %337 : vector<1x64xf32>
    %339 = vector.extract_strided_slice %332 {offsets = [0, 64], sizes = [1, 64], strides = [1, 1]} : vector<1x256xf32> to vector<1x64xf32>
    %340 = arith.negf %339 : vector<1x64xf32>
    %341 = math.exp %340 : vector<1x64xf32>
    %cst_153 = arith.constant 1.000000e+00 : f32
    %342 = vector.broadcast %cst_153 : f32 to vector<1x64xf32>
    %343 = arith.addf %342, %341 : vector<1x64xf32>
    %344 = arith.divf %342, %343 : vector<1x64xf32>
    %345 = vector.extract_strided_slice %332 {offsets = [0, 128], sizes = [1, 64], strides = [1, 1]} : vector<1x256xf32> to vector<1x64xf32>
    %346 = math.tanh %345 : vector<1x64xf32>
    %347 = vector.extract_strided_slice %332 {offsets = [0, 192], sizes = [1, 64], strides = [1, 1]} : vector<1x256xf32> to vector<1x64xf32>
    %348 = arith.negf %347 : vector<1x64xf32>
    %349 = math.exp %348 : vector<1x64xf32>
    %cst_154 = arith.constant 1.000000e+00 : f32
    %350 = vector.broadcast %cst_154 : f32 to vector<1x64xf32>
    %351 = arith.addf %350, %349 : vector<1x64xf32>
    %352 = arith.divf %350, %351 : vector<1x64xf32>
    %353 = arith.mulf %344, %326 : vector<1x64xf32>
    %354 = arith.mulf %338, %346 : vector<1x64xf32>
    %355 = arith.addf %353, %354 : vector<1x64xf32>
    %356 = math.tanh %355 : vector<1x64xf32>
    %357 = arith.mulf %352, %356 : vector<1x64xf32>
    %358 = arith.truncf %357 : vector<1x64xf32> to vector<1x64xbf16>
    %359 = vector.extract_strided_slice %319 {offsets = [1, 0], sizes = [1, 64], strides = [1, 1]} : vector<8x64xf32> to vector<1x64xf32>
    %360 = arith.truncf %359 : vector<1x64xf32> to vector<1x64xbf16>
    %cst_155 = arith.constant dense<0.000000e+00> : vector<1x256xf32>
    %361 = tpu.matmul %360, %320, %cst_155 {dimension_numbers = #tpu.dot_dimension_numbers<[1], [0], [0], [1], [0, 0, 1, 1], [], []>} : vector<1x64xbf16>, vector<64x256xbf16>, vector<1x256xf32> -> vector<1x256xf32>
    %cst_156 = arith.constant dense<0.000000e+00> : vector<1x256xf32>
    %362 = tpu.matmul %357, %321, %cst_156 {dimension_numbers = #tpu.dot_dimension_numbers<[1], [0], [0], [1], [0, 0, 1, 1], [], []>} : vector<1x64xf32>, vector<64x256xbf16>, vector<1x256xf32> -> vector<1x256xf32>
    %363 = arith.addf %361, %362 : vector<1x256xf32>
    %364 = arith.addf %363, %324 : vector<1x256xf32>
    %365 = vector.extract_strided_slice %364 {offsets = [0, 0], sizes = [1, 64], strides = [1, 1]} : vector<1x256xf32> to vector<1x64xf32>
    %366 = arith.negf %365 : vector<1x64xf32>
    %367 = math.exp %366 : vector<1x64xf32>
    %cst_157 = arith.constant 1.000000e+00 : f32
    %368 = vector.broadcast %cst_157 : f32 to vector<1x64xf32>
    %369 = arith.addf %368, %367 : vector<1x64xf32>
    %370 = arith.divf %368, %369 : vector<1x64xf32>
    %371 = vector.extract_strided_slice %364 {offsets = [0, 64], sizes = [1, 64], strides = [1, 1]} : vector<1x256xf32> to vector<1x64xf32>
    %372 = arith.negf %371 : vector<1x64xf32>
    %373 = math.exp %372 : vector<1x64xf32>
    %cst_158 = arith.constant 1.000000e+00 : f32
    %374 = vector.broadcast %cst_158 : f32 to vector<1x64xf32>
    %375 = arith.addf %374, %373 : vector<1x64xf32>
    %376 = arith.divf %374, %375 : vector<1x64xf32>
    %377 = vector.extract_strided_slice %364 {offsets = [0, 128], sizes = [1, 64], strides = [1, 1]} : vector<1x256xf32> to vector<1x64xf32>
    %378 = math.tanh %377 : vector<1x64xf32>
    %379 = vector.extract_strided_slice %364 {offsets = [0, 192], sizes = [1, 64], strides = [1, 1]} : vector<1x256xf32> to vector<1x64xf32>
    %380 = arith.negf %379 : vector<1x64xf32>
    %381 = math.exp %380 : vector<1x64xf32>
    %cst_159 = arith.constant 1.000000e+00 : f32
    %382 = vector.broadcast %cst_159 : f32 to vector<1x64xf32>
    %383 = arith.addf %382, %381 : vector<1x64xf32>
    %384 = arith.divf %382, %383 : vector<1x64xf32>
    %385 = arith.mulf %376, %355 : vector<1x64xf32>
    %386 = arith.mulf %370, %378 : vector<1x64xf32>
    %387 = arith.addf %385, %386 : vector<1x64xf32>
    %388 = math.tanh %387 : vector<1x64xf32>
    %389 = arith.mulf %384, %388 : vector<1x64xf32>
    %390 = arith.truncf %389 : vector<1x64xf32> to vector<1x64xbf16>
    %391 = vector.extract_strided_slice %319 {offsets = [2, 0], sizes = [1, 64], strides = [1, 1]} : vector<8x64xf32> to vector<1x64xf32>
    %392 = arith.truncf %391 : vector<1x64xf32> to vector<1x64xbf16>
    %cst_160 = arith.constant dense<0.000000e+00> : vector<1x256xf32>
    %393 = tpu.matmul %392, %320, %cst_160 {dimension_numbers = #tpu.dot_dimension_numbers<[1], [0], [0], [1], [0, 0, 1, 1], [], []>} : vector<1x64xbf16>, vector<64x256xbf16>, vector<1x256xf32> -> vector<1x256xf32>
    %cst_161 = arith.constant dense<0.000000e+00> : vector<1x256xf32>
    %394 = tpu.matmul %389, %321, %cst_161 {dimension_numbers = #tpu.dot_dimension_numbers<[1], [0], [0], [1], [0, 0, 1, 1], [], []>} : vector<1x64xf32>, vector<64x256xbf16>, vector<1x256xf32> -> vector<1x256xf32>
    %395 = arith.addf %393, %394 : vector<1x256xf32>
    %396 = arith.addf %395, %324 : vector<1x256xf32>
    %397 = vector.extract_strided_slice %396 {offsets = [0, 0], sizes = [1, 64], strides = [1, 1]} : vector<1x256xf32> to vector<1x64xf32>
    %398 = arith.negf %397 : vector<1x64xf32>
    %399 = math.exp %398 : vector<1x64xf32>
    %cst_162 = arith.constant 1.000000e+00 : f32
    %400 = vector.broadcast %cst_162 : f32 to vector<1x64xf32>
    %401 = arith.addf %400, %399 : vector<1x64xf32>
    %402 = arith.divf %400, %401 : vector<1x64xf32>
    %403 = vector.extract_strided_slice %396 {offsets = [0, 64], sizes = [1, 64], strides = [1, 1]} : vector<1x256xf32> to vector<1x64xf32>
    %404 = arith.negf %403 : vector<1x64xf32>
    %405 = math.exp %404 : vector<1x64xf32>
    %cst_163 = arith.constant 1.000000e+00 : f32
    %406 = vector.broadcast %cst_163 : f32 to vector<1x64xf32>
    %407 = arith.addf %406, %405 : vector<1x64xf32>
    %408 = arith.divf %406, %407 : vector<1x64xf32>
    %409 = vector.extract_strided_slice %396 {offsets = [0, 128], sizes = [1, 64], strides = [1, 1]} : vector<1x256xf32> to vector<1x64xf32>
    %410 = math.tanh %409 : vector<1x64xf32>
    %411 = vector.extract_strided_slice %396 {offsets = [0, 192], sizes = [1, 64], strides = [1, 1]} : vector<1x256xf32> to vector<1x64xf32>
    %412 = arith.negf %411 : vector<1x64xf32>
    %413 = math.exp %412 : vector<1x64xf32>
    %cst_164 = arith.constant 1.000000e+00 : f32
    %414 = vector.broadcast %cst_164 : f32 to vector<1x64xf32>
    %415 = arith.addf %414, %413 : vector<1x64xf32>
    %416 = arith.divf %414, %415 : vector<1x64xf32>
    %417 = arith.mulf %408, %387 : vector<1x64xf32>
    %418 = arith.mulf %402, %410 : vector<1x64xf32>
    %419 = arith.addf %417, %418 : vector<1x64xf32>
    %420 = math.tanh %419 : vector<1x64xf32>
    %421 = arith.mulf %416, %420 : vector<1x64xf32>
    %422 = arith.truncf %421 : vector<1x64xf32> to vector<1x64xbf16>
    %423 = vector.extract_strided_slice %319 {offsets = [3, 0], sizes = [1, 64], strides = [1, 1]} : vector<8x64xf32> to vector<1x64xf32>
    %424 = arith.truncf %423 : vector<1x64xf32> to vector<1x64xbf16>
    %cst_165 = arith.constant dense<0.000000e+00> : vector<1x256xf32>
    %425 = tpu.matmul %424, %320, %cst_165 {dimension_numbers = #tpu.dot_dimension_numbers<[1], [0], [0], [1], [0, 0, 1, 1], [], []>} : vector<1x64xbf16>, vector<64x256xbf16>, vector<1x256xf32> -> vector<1x256xf32>
    %cst_166 = arith.constant dense<0.000000e+00> : vector<1x256xf32>
    %426 = tpu.matmul %421, %321, %cst_166 {dimension_numbers = #tpu.dot_dimension_numbers<[1], [0], [0], [1], [0, 0, 1, 1], [], []>} : vector<1x64xf32>, vector<64x256xbf16>, vector<1x256xf32> -> vector<1x256xf32>
    %427 = arith.addf %425, %426 : vector<1x256xf32>
    %428 = arith.addf %427, %324 : vector<1x256xf32>
    %429 = vector.extract_strided_slice %428 {offsets = [0, 0], sizes = [1, 64], strides = [1, 1]} : vector<1x256xf32> to vector<1x64xf32>
    %430 = arith.negf %429 : vector<1x64xf32>
    %431 = math.exp %430 : vector<1x64xf32>
    %cst_167 = arith.constant 1.000000e+00 : f32
    %432 = vector.broadcast %cst_167 : f32 to vector<1x64xf32>
    %433 = arith.addf %432, %431 : vector<1x64xf32>
    %434 = arith.divf %432, %433 : vector<1x64xf32>
    %435 = vector.extract_strided_slice %428 {offsets = [0, 64], sizes = [1, 64], strides = [1, 1]} : vector<1x256xf32> to vector<1x64xf32>
    %436 = arith.negf %435 : vector<1x64xf32>
    %437 = math.exp %436 : vector<1x64xf32>
    %cst_168 = arith.constant 1.000000e+00 : f32
    %438 = vector.broadcast %cst_168 : f32 to vector<1x64xf32>
    %439 = arith.addf %438, %437 : vector<1x64xf32>
    %440 = arith.divf %438, %439 : vector<1x64xf32>
    %441 = vector.extract_strided_slice %428 {offsets = [0, 128], sizes = [1, 64], strides = [1, 1]} : vector<1x256xf32> to vector<1x64xf32>
    %442 = math.tanh %441 : vector<1x64xf32>
    %443 = vector.extract_strided_slice %428 {offsets = [0, 192], sizes = [1, 64], strides = [1, 1]} : vector<1x256xf32> to vector<1x64xf32>
    %444 = arith.negf %443 : vector<1x64xf32>
    %445 = math.exp %444 : vector<1x64xf32>
    %cst_169 = arith.constant 1.000000e+00 : f32
    %446 = vector.broadcast %cst_169 : f32 to vector<1x64xf32>
    %447 = arith.addf %446, %445 : vector<1x64xf32>
    %448 = arith.divf %446, %447 : vector<1x64xf32>
    %449 = arith.mulf %440, %419 : vector<1x64xf32>
    %450 = arith.mulf %434, %442 : vector<1x64xf32>
    %451 = arith.addf %449, %450 : vector<1x64xf32>
    %452 = math.tanh %451 : vector<1x64xf32>
    %453 = arith.mulf %448, %452 : vector<1x64xf32>
    %454 = arith.truncf %453 : vector<1x64xf32> to vector<1x64xbf16>
    %455 = vector.extract_strided_slice %319 {offsets = [4, 0], sizes = [1, 64], strides = [1, 1]} : vector<8x64xf32> to vector<1x64xf32>
    %456 = arith.truncf %455 : vector<1x64xf32> to vector<1x64xbf16>
    %cst_170 = arith.constant dense<0.000000e+00> : vector<1x256xf32>
    %457 = tpu.matmul %456, %320, %cst_170 {dimension_numbers = #tpu.dot_dimension_numbers<[1], [0], [0], [1], [0, 0, 1, 1], [], []>} : vector<1x64xbf16>, vector<64x256xbf16>, vector<1x256xf32> -> vector<1x256xf32>
    %cst_171 = arith.constant dense<0.000000e+00> : vector<1x256xf32>
    %458 = tpu.matmul %453, %321, %cst_171 {dimension_numbers = #tpu.dot_dimension_numbers<[1], [0], [0], [1], [0, 0, 1, 1], [], []>} : vector<1x64xf32>, vector<64x256xbf16>, vector<1x256xf32> -> vector<1x256xf32>
    %459 = arith.addf %457, %458 : vector<1x256xf32>
    %460 = arith.addf %459, %324 : vector<1x256xf32>
    %461 = vector.extract_strided_slice %460 {offsets = [0, 0], sizes = [1, 64], strides = [1, 1]} : vector<1x256xf32> to vector<1x64xf32>
    %462 = arith.negf %461 : vector<1x64xf32>
    %463 = math.exp %462 : vector<1x64xf32>
    %cst_172 = arith.constant 1.000000e+00 : f32
    %464 = vector.broadcast %cst_172 : f32 to vector<1x64xf32>
    %465 = arith.addf %464, %463 : vector<1x64xf32>
    %466 = arith.divf %464, %465 : vector<1x64xf32>
    %467 = vector.extract_strided_slice %460 {offsets = [0, 64], sizes = [1, 64], strides = [1, 1]} : vector<1x256xf32> to vector<1x64xf32>
    %468 = arith.negf %467 : vector<1x64xf32>
    %469 = math.exp %468 : vector<1x64xf32>
    %cst_173 = arith.constant 1.000000e+00 : f32
    %470 = vector.broadcast %cst_173 : f32 to vector<1x64xf32>
    %471 = arith.addf %470, %469 : vector<1x64xf32>
    %472 = arith.divf %470, %471 : vector<1x64xf32>
    %473 = vector.extract_strided_slice %460 {offsets = [0, 128], sizes = [1, 64], strides = [1, 1]} : vector<1x256xf32> to vector<1x64xf32>
    %474 = math.tanh %473 : vector<1x64xf32>
    %475 = vector.extract_strided_slice %460 {offsets = [0, 192], sizes = [1, 64], strides = [1, 1]} : vector<1x256xf32> to vector<1x64xf32>
    %476 = arith.negf %475 : vector<1x64xf32>
    %477 = math.exp %476 : vector<1x64xf32>
    %cst_174 = arith.constant 1.000000e+00 : f32
    %478 = vector.broadcast %cst_174 : f32 to vector<1x64xf32>
    %479 = arith.addf %478, %477 : vector<1x64xf32>
    %480 = arith.divf %478, %479 : vector<1x64xf32>
    %481 = arith.mulf %472, %451 : vector<1x64xf32>
    %482 = arith.mulf %466, %474 : vector<1x64xf32>
    %483 = arith.addf %481, %482 : vector<1x64xf32>
    %484 = math.tanh %483 : vector<1x64xf32>
    %485 = arith.mulf %480, %484 : vector<1x64xf32>
    %486 = arith.truncf %485 : vector<1x64xf32> to vector<1x64xbf16>
    %487 = vector.extract_strided_slice %319 {offsets = [5, 0], sizes = [1, 64], strides = [1, 1]} : vector<8x64xf32> to vector<1x64xf32>
    %488 = arith.truncf %487 : vector<1x64xf32> to vector<1x64xbf16>
    %cst_175 = arith.constant dense<0.000000e+00> : vector<1x256xf32>
    %489 = tpu.matmul %488, %320, %cst_175 {dimension_numbers = #tpu.dot_dimension_numbers<[1], [0], [0], [1], [0, 0, 1, 1], [], []>} : vector<1x64xbf16>, vector<64x256xbf16>, vector<1x256xf32> -> vector<1x256xf32>
    %cst_176 = arith.constant dense<0.000000e+00> : vector<1x256xf32>
    %490 = tpu.matmul %485, %321, %cst_176 {dimension_numbers = #tpu.dot_dimension_numbers<[1], [0], [0], [1], [0, 0, 1, 1], [], []>} : vector<1x64xf32>, vector<64x256xbf16>, vector<1x256xf32> -> vector<1x256xf32>
    %491 = arith.addf %489, %490 : vector<1x256xf32>
    %492 = arith.addf %491, %324 : vector<1x256xf32>
    %493 = vector.extract_strided_slice %492 {offsets = [0, 0], sizes = [1, 64], strides = [1, 1]} : vector<1x256xf32> to vector<1x64xf32>
    %494 = arith.negf %493 : vector<1x64xf32>
    %495 = math.exp %494 : vector<1x64xf32>
    %cst_177 = arith.constant 1.000000e+00 : f32
    %496 = vector.broadcast %cst_177 : f32 to vector<1x64xf32>
    %497 = arith.addf %496, %495 : vector<1x64xf32>
    %498 = arith.divf %496, %497 : vector<1x64xf32>
    %499 = vector.extract_strided_slice %492 {offsets = [0, 64], sizes = [1, 64], strides = [1, 1]} : vector<1x256xf32> to vector<1x64xf32>
    %500 = arith.negf %499 : vector<1x64xf32>
    %501 = math.exp %500 : vector<1x64xf32>
    %cst_178 = arith.constant 1.000000e+00 : f32
    %502 = vector.broadcast %cst_178 : f32 to vector<1x64xf32>
    %503 = arith.addf %502, %501 : vector<1x64xf32>
    %504 = arith.divf %502, %503 : vector<1x64xf32>
    %505 = vector.extract_strided_slice %492 {offsets = [0, 128], sizes = [1, 64], strides = [1, 1]} : vector<1x256xf32> to vector<1x64xf32>
    %506 = math.tanh %505 : vector<1x64xf32>
    %507 = vector.extract_strided_slice %492 {offsets = [0, 192], sizes = [1, 64], strides = [1, 1]} : vector<1x256xf32> to vector<1x64xf32>
    %508 = arith.negf %507 : vector<1x64xf32>
    %509 = math.exp %508 : vector<1x64xf32>
    %cst_179 = arith.constant 1.000000e+00 : f32
    %510 = vector.broadcast %cst_179 : f32 to vector<1x64xf32>
    %511 = arith.addf %510, %509 : vector<1x64xf32>
    %512 = arith.divf %510, %511 : vector<1x64xf32>
    %513 = arith.mulf %504, %483 : vector<1x64xf32>
    %514 = arith.mulf %498, %506 : vector<1x64xf32>
    %515 = arith.addf %513, %514 : vector<1x64xf32>
    %516 = math.tanh %515 : vector<1x64xf32>
    %517 = arith.mulf %512, %516 : vector<1x64xf32>
    %518 = arith.truncf %517 : vector<1x64xf32> to vector<1x64xbf16>
    %519 = vector.extract_strided_slice %319 {offsets = [6, 0], sizes = [1, 64], strides = [1, 1]} : vector<8x64xf32> to vector<1x64xf32>
    %520 = arith.truncf %519 : vector<1x64xf32> to vector<1x64xbf16>
    %cst_180 = arith.constant dense<0.000000e+00> : vector<1x256xf32>
    %521 = tpu.matmul %520, %320, %cst_180 {dimension_numbers = #tpu.dot_dimension_numbers<[1], [0], [0], [1], [0, 0, 1, 1], [], []>} : vector<1x64xbf16>, vector<64x256xbf16>, vector<1x256xf32> -> vector<1x256xf32>
    %cst_181 = arith.constant dense<0.000000e+00> : vector<1x256xf32>
    %522 = tpu.matmul %517, %321, %cst_181 {dimension_numbers = #tpu.dot_dimension_numbers<[1], [0], [0], [1], [0, 0, 1, 1], [], []>} : vector<1x64xf32>, vector<64x256xbf16>, vector<1x256xf32> -> vector<1x256xf32>
    %523 = arith.addf %521, %522 : vector<1x256xf32>
    %524 = arith.addf %523, %324 : vector<1x256xf32>
    %525 = vector.extract_strided_slice %524 {offsets = [0, 0], sizes = [1, 64], strides = [1, 1]} : vector<1x256xf32> to vector<1x64xf32>
    %526 = arith.negf %525 : vector<1x64xf32>
    %527 = math.exp %526 : vector<1x64xf32>
    %cst_182 = arith.constant 1.000000e+00 : f32
    %528 = vector.broadcast %cst_182 : f32 to vector<1x64xf32>
    %529 = arith.addf %528, %527 : vector<1x64xf32>
    %530 = arith.divf %528, %529 : vector<1x64xf32>
    %531 = vector.extract_strided_slice %524 {offsets = [0, 64], sizes = [1, 64], strides = [1, 1]} : vector<1x256xf32> to vector<1x64xf32>
    %532 = arith.negf %531 : vector<1x64xf32>
    %533 = math.exp %532 : vector<1x64xf32>
    %cst_183 = arith.constant 1.000000e+00 : f32
    %534 = vector.broadcast %cst_183 : f32 to vector<1x64xf32>
    %535 = arith.addf %534, %533 : vector<1x64xf32>
    %536 = arith.divf %534, %535 : vector<1x64xf32>
    %537 = vector.extract_strided_slice %524 {offsets = [0, 128], sizes = [1, 64], strides = [1, 1]} : vector<1x256xf32> to vector<1x64xf32>
    %538 = math.tanh %537 : vector<1x64xf32>
    %539 = vector.extract_strided_slice %524 {offsets = [0, 192], sizes = [1, 64], strides = [1, 1]} : vector<1x256xf32> to vector<1x64xf32>
    %540 = arith.negf %539 : vector<1x64xf32>
    %541 = math.exp %540 : vector<1x64xf32>
    %cst_184 = arith.constant 1.000000e+00 : f32
    %542 = vector.broadcast %cst_184 : f32 to vector<1x64xf32>
    %543 = arith.addf %542, %541 : vector<1x64xf32>
    %544 = arith.divf %542, %543 : vector<1x64xf32>
    %545 = arith.mulf %536, %515 : vector<1x64xf32>
    %546 = arith.mulf %530, %538 : vector<1x64xf32>
    %547 = arith.addf %545, %546 : vector<1x64xf32>
    %548 = math.tanh %547 : vector<1x64xf32>
    %549 = arith.mulf %544, %548 : vector<1x64xf32>
    %550 = arith.truncf %549 : vector<1x64xf32> to vector<1x64xbf16>
    %551 = vector.extract_strided_slice %319 {offsets = [7, 0], sizes = [1, 64], strides = [1, 1]} : vector<8x64xf32> to vector<1x64xf32>
    %552 = arith.truncf %551 : vector<1x64xf32> to vector<1x64xbf16>
    %cst_185 = arith.constant dense<0.000000e+00> : vector<1x256xf32>
    %553 = tpu.matmul %552, %320, %cst_185 {dimension_numbers = #tpu.dot_dimension_numbers<[1], [0], [0], [1], [0, 0, 1, 1], [], []>} : vector<1x64xbf16>, vector<64x256xbf16>, vector<1x256xf32> -> vector<1x256xf32>
    %cst_186 = arith.constant dense<0.000000e+00> : vector<1x256xf32>
    %554 = tpu.matmul %549, %321, %cst_186 {dimension_numbers = #tpu.dot_dimension_numbers<[1], [0], [0], [1], [0, 0, 1, 1], [], []>} : vector<1x64xf32>, vector<64x256xbf16>, vector<1x256xf32> -> vector<1x256xf32>
    %555 = arith.addf %553, %554 : vector<1x256xf32>
    %556 = arith.addf %555, %324 : vector<1x256xf32>
    %557 = vector.extract_strided_slice %556 {offsets = [0, 0], sizes = [1, 64], strides = [1, 1]} : vector<1x256xf32> to vector<1x64xf32>
    %558 = arith.negf %557 : vector<1x64xf32>
    %559 = math.exp %558 : vector<1x64xf32>
    %cst_187 = arith.constant 1.000000e+00 : f32
    %560 = vector.broadcast %cst_187 : f32 to vector<1x64xf32>
    %561 = arith.addf %560, %559 : vector<1x64xf32>
    %562 = arith.divf %560, %561 : vector<1x64xf32>
    %563 = vector.extract_strided_slice %556 {offsets = [0, 64], sizes = [1, 64], strides = [1, 1]} : vector<1x256xf32> to vector<1x64xf32>
    %564 = arith.negf %563 : vector<1x64xf32>
    %565 = math.exp %564 : vector<1x64xf32>
    %cst_188 = arith.constant 1.000000e+00 : f32
    %566 = vector.broadcast %cst_188 : f32 to vector<1x64xf32>
    %567 = arith.addf %566, %565 : vector<1x64xf32>
    %568 = arith.divf %566, %567 : vector<1x64xf32>
    %569 = vector.extract_strided_slice %556 {offsets = [0, 128], sizes = [1, 64], strides = [1, 1]} : vector<1x256xf32> to vector<1x64xf32>
    %570 = math.tanh %569 : vector<1x64xf32>
    %571 = vector.extract_strided_slice %556 {offsets = [0, 192], sizes = [1, 64], strides = [1, 1]} : vector<1x256xf32> to vector<1x64xf32>
    %572 = arith.negf %571 : vector<1x64xf32>
    %573 = math.exp %572 : vector<1x64xf32>
    %cst_189 = arith.constant 1.000000e+00 : f32
    %574 = vector.broadcast %cst_189 : f32 to vector<1x64xf32>
    %575 = arith.addf %574, %573 : vector<1x64xf32>
    %576 = arith.divf %574, %575 : vector<1x64xf32>
    %577 = arith.mulf %568, %547 : vector<1x64xf32>
    %578 = arith.mulf %562, %570 : vector<1x64xf32>
    %579 = arith.addf %577, %578 : vector<1x64xf32>
    %580 = math.tanh %579 : vector<1x64xf32>
    %581 = arith.mulf %576, %580 : vector<1x64xf32>
    %582 = arith.truncf %581 : vector<1x64xf32> to vector<1x64xbf16>
    %583 = tpu.concatenate %358, %390, %422, %454, %486, %518, %550, %582 in 0 : vector<1x64xbf16>, vector<1x64xbf16>, vector<1x64xbf16>, vector<1x64xbf16>, vector<1x64xbf16>, vector<1x64xbf16>, vector<1x64xbf16>, vector<1x64xbf16> -> vector<8x64xbf16>
    %c0_190 = arith.constant 0 : index
    %c0_191 = arith.constant 0 : index
    %584 = vector.load %arg21[%c0_190, %c0_191] : memref<64x128xbf16, #tpu.memory_space<vmem>>, vector<64x128xbf16>
    %cst_192 = arith.constant dense<0.000000e+00> : vector<8x128xf32>
    %585 = tpu.matmul %583, %584, %cst_192 {dimension_numbers = #tpu.dot_dimension_numbers<[1], [0], [0], [1], [0, 0, 1, 1], [], []>} : vector<8x64xbf16>, vector<64x128xbf16>, vector<8x128xf32> -> vector<8x128xf32>
    %c0_193 = arith.constant 0 : index
    %c0_194 = arith.constant 0 : index
    %586 = vector.load %arg22[%c0_193, %c0_194] : memref<1x128xf32, #tpu.memory_space<vmem>>, vector<1x128xf32>
    %587 = vector.broadcast %586 : vector<1x128xf32> to vector<8x128xf32>
    %588 = arith.addf %585, %587 : vector<8x128xf32>
    %c0_195 = arith.constant 0 : index
    %c0_196 = arith.constant 0 : index
    %c0_197 = arith.constant 0 : index
    %589 = vector.load %arg23[%c0_195, %c0_196, %c0_197] : memref<1x8x128xf32, #tpu.memory_space<vmem>>, vector<1x8x128xf32>
    %590 = vector.shape_cast %589 : vector<1x8x128xf32> to vector<8x128xf32>
    %591 = vector.shape_cast %588 : vector<8x128xf32> to vector<1x8x128xf32>
    tpu.vector_store %arg23[%c0_195, %c0_196, %c0_197], %591 {strides = array<i32>} : memref<1x8x128xf32, #tpu.memory_space<vmem>>, vector<1x8x128xf32>,
    return
  }
  func.func @transform_0(%arg0: i32) -> (i32, i32, i32) {
    %c0_i32 = arith.constant 0 : i32
    %c0_i32_0 = arith.constant 0 : i32
    %c0_i32_1 = arith.constant 0 : i32
    return %arg0, %c0_i32, %c0_i32_0 : i32, i32, i32
  }
  func.func @transform_1(%arg0: i32) -> (i32, i32, i32) {
    %c0_i32 = arith.constant 0 : i32
    %c0_i32_0 = arith.constant 0 : i32
    %c0_i32_1 = arith.constant 0 : i32
    return %arg0, %c0_i32, %c0_i32_0 : i32, i32, i32
  }
  func.func @transform_2(%arg0: i32) -> (i32, i32) {
    %c0_i32 = arith.constant 0 : i32
    %c0_i32_0 = arith.constant 0 : i32
    %c0_i32_1 = arith.constant 0 : i32
    return %c0_i32, %c0_i32_0 : i32, i32
  }
  func.func @transform_3(%arg0: i32) -> (i32, i32) {
    %c0_i32 = arith.constant 0 : i32
    %c0_i32_0 = arith.constant 0 : i32
    %c0_i32_1 = arith.constant 0 : i32
    return %c0_i32, %c0_i32_0 : i32, i32
  }
  func.func @transform_4(%arg0: i32) -> (i32, i32, i32) {
    %c0_i32 = arith.constant 0 : i32
    %c0_i32_0 = arith.constant 0 : i32
    %c0_i32_1 = arith.constant 0 : i32
    %c0_i32_2 = arith.constant 0 : i32
    return %c0_i32, %c0_i32_0, %c0_i32_1 : i32, i32, i32
  }
  func.func @transform_5(%arg0: i32) -> (i32, i32, i32) {
    %c0_i32 = arith.constant 0 : i32
    %c0_i32_0 = arith.constant 0 : i32
    %c0_i32_1 = arith.constant 0 : i32
    %c0_i32_2 = arith.constant 0 : i32
    return %c0_i32, %c0_i32_0, %c0_i32_1 : i32, i32, i32
  }
  func.func @transform_6(%arg0: i32) -> (i32, i32, i32) {
    %c0_i32 = arith.constant 0 : i32
    %c0_i32_0 = arith.constant 0 : i32
    %c0_i32_1 = arith.constant 0 : i32
    %c0_i32_2 = arith.constant 0 : i32
    return %c0_i32, %c0_i32_0, %c0_i32_1 : i32, i32, i32
  }
  func.func @transform_7(%arg0: i32) -> (i32, i32, i32) {
    %c0_i32 = arith.constant 0 : i32
    %c0_i32_0 = arith.constant 0 : i32
    %c0_i32_1 = arith.constant 0 : i32
    %c0_i32_2 = arith.constant 0 : i32
    return %c0_i32, %c0_i32_0, %c0_i32_1 : i32, i32, i32
  }
  func.func @transform_8(%arg0: i32) -> (i32, i32, i32) {
    %c0_i32 = arith.constant 0 : i32
    %c0_i32_0 = arith.constant 0 : i32
    %c0_i32_1 = arith.constant 0 : i32
    %c0_i32_2 = arith.constant 0 : i32
    return %c0_i32, %c0_i32_0, %c0_i32_1 : i32, i32, i32
  }
  func.func @transform_9(%arg0: i32) -> (i32, i32, i32) {
    %c0_i32 = arith.constant 0 : i32
    %c0_i32_0 = arith.constant 0 : i32
    %c0_i32_1 = arith.constant 0 : i32
    %c0_i32_2 = arith.constant 0 : i32
    return %c0_i32, %c0_i32_0, %c0_i32_1 : i32, i32, i32
  }
  func.func @transform_10(%arg0: i32) -> (i32, i32, i32) {
    %c0_i32 = arith.constant 0 : i32
    %c0_i32_0 = arith.constant 0 : i32
    %c0_i32_1 = arith.constant 0 : i32
    %c0_i32_2 = arith.constant 0 : i32
    return %c0_i32, %c0_i32_0, %c0_i32_1 : i32, i32, i32
  }
  func.func @transform_11(%arg0: i32) -> (i32, i32, i32) {
    %c0_i32 = arith.constant 0 : i32
    %c0_i32_0 = arith.constant 0 : i32
    %c0_i32_1 = arith.constant 0 : i32
    %c0_i32_2 = arith.constant 0 : i32
    return %c0_i32, %c0_i32_0, %c0_i32_1 : i32, i32, i32
  }
  func.func @transform_12(%arg0: i32) -> (i32, i32, i32) {
    %c0_i32 = arith.constant 0 : i32
    %c0_i32_0 = arith.constant 0 : i32
    %c0_i32_1 = arith.constant 0 : i32
    %c0_i32_2 = arith.constant 0 : i32
    return %c0_i32, %c0_i32_0, %c0_i32_1 : i32, i32, i32
  }
  func.func @transform_13(%arg0: i32) -> (i32, i32, i32) {
    %c0_i32 = arith.constant 0 : i32
    %c0_i32_0 = arith.constant 0 : i32
    %c0_i32_1 = arith.constant 0 : i32
    %c0_i32_2 = arith.constant 0 : i32
    return %c0_i32, %c0_i32_0, %c0_i32_1 : i32, i32, i32
  }
  func.func @transform_14(%arg0: i32) -> (i32, i32, i32) {
    %c0_i32 = arith.constant 0 : i32
    %c0_i32_0 = arith.constant 0 : i32
    %c0_i32_1 = arith.constant 0 : i32
    %c0_i32_2 = arith.constant 0 : i32
    return %c0_i32, %c0_i32_0, %c0_i32_1 : i32, i32, i32
  }
  func.func @transform_15(%arg0: i32) -> (i32, i32, i32) {
    %c0_i32 = arith.constant 0 : i32
    %c0_i32_0 = arith.constant 0 : i32
    %c0_i32_1 = arith.constant 0 : i32
    %c0_i32_2 = arith.constant 0 : i32
    return %c0_i32, %c0_i32_0, %c0_i32_1 : i32, i32, i32
  }
  func.func @transform_16(%arg0: i32) -> (i32, i32) {
    %c0_i32 = arith.constant 0 : i32
    %c0_i32_0 = arith.constant 0 : i32
    %c0_i32_1 = arith.constant 0 : i32
    return %c0_i32, %c0_i32_0 : i32, i32
  }
  func.func @transform_17(%arg0: i32) -> (i32, i32) {
    %c0_i32 = arith.constant 0 : i32
    %c0_i32_0 = arith.constant 0 : i32
    %c0_i32_1 = arith.constant 0 : i32
    return %c0_i32, %c0_i32_0 : i32, i32
  }
  func.func @transform_18(%arg0: i32) -> (i32, i32) {
    %c0_i32 = arith.constant 0 : i32
    %c0_i32_0 = arith.constant 0 : i32
    %c0_i32_1 = arith.constant 0 : i32
    return %c0_i32, %c0_i32_0 : i32, i32
  }
  func.func @transform_19(%arg0: i32) -> (i32, i32) {
    %c0_i32 = arith.constant 0 : i32
    %c0_i32_0 = arith.constant 0 : i32
    %c0_i32_1 = arith.constant 0 : i32
    return %c0_i32, %c0_i32_0 : i32, i32
  }
  func.func @transform_20(%arg0: i32) -> (i32, i32) {
    %c0_i32 = arith.constant 0 : i32
    %c0_i32_0 = arith.constant 0 : i32
    %c0_i32_1 = arith.constant 0 : i32
    return %c0_i32, %c0_i32_0 : i32, i32
  }
  func.func @transform_21(%arg0: i32) -> (i32, i32) {
    %c0_i32 = arith.constant 0 : i32
    %c0_i32_0 = arith.constant 0 : i32
    %c0_i32_1 = arith.constant 0 : i32
    return %c0_i32, %c0_i32_0 : i32, i32
  }
  func.func @transform_22(%arg0: i32) -> (i32, i32, i32) {
    %c0_i32 = arith.constant 0 : i32
    %c0_i32_0 = arith.constant 0 : i32
    %c0_i32_1 = arith.constant 0 : i32
    return %arg0, %c0_i32, %c0_i32_0 : i32, i32, i32
  }
}

</mosaic_0001>

<llo_original>
// kernel: tpu_custom_call.1
$region0: #{tpu_custom_call.1}
  #allocation0 [shape = 'u32[]', space=smem, size = 0x4, offset = 0x4, fixed_abs, tag = 'smem constant byte address 0x4 - core index']
  #allocation1 [shape = 'u32[72,128]{1,0:T(1,128)}', space=vmem, size = 0x9000, scoped, tag = 'internal scratch']
  %s0 = inlined_call_operand.hbm [shape: f32[2,8,64], index: 0, kind: input, shape index: {}]
  %s1 = inlined_call_operand.vmem [shape: f32[2,1,8], index: 1, kind: input, shape index: {}]
  %s2 = inlined_call_operand.hbm [shape: f32[1,64], index: 2, kind: input, shape index: {}]
  %s3 = inlined_call_operand.hbm [shape: f32[1,64], index: 3, kind: input, shape index: {}]
  %s4 = inlined_call_operand.vmem [shape: bf16[2,64,192], index: 4, kind: input, shape index: {}]
  %s5 = inlined_call_operand.hbm [shape: f32[2,1,192], index: 5, kind: input, shape index: {}]
  %s6 = inlined_call_operand.vmem [shape: bf16[2,64,64], index: 6, kind: input, shape index: {}]
  %s7 = inlined_call_operand.vmem [shape: f32[2,1,64], index: 7, kind: input, shape index: {}]
  %s8 = inlined_call_operand.hbm [shape: f32[2,1,64], index: 8, kind: input, shape index: {}]
  %s9 = inlined_call_operand.vmem [shape: f32[2,1,64], index: 9, kind: input, shape index: {}]
  %s10 = inlined_call_operand.hbm [shape: bf16[2,64,128], index: 10, kind: input, shape index: {}]
  %s11 = inlined_call_operand.vmem [shape: f32[2,1,128], index: 11, kind: input, shape index: {}]
  %s12 = inlined_call_operand.vmem [shape: bf16[2,128,64], index: 12, kind: input, shape index: {}]
  %s13 = inlined_call_operand.vmem [shape: f32[2,1,64], index: 13, kind: input, shape index: {}]
  %s14 = inlined_call_operand.hbm [shape: f32[2,1,64], index: 14, kind: input, shape index: {}]
  %s15 = inlined_call_operand.vmem [shape: f32[2,1,64], index: 15, kind: input, shape index: {}]
  %s16 = inlined_call_operand.hbm [shape: bf16[64,256], index: 16, kind: input, shape index: {}]
  %s17 = inlined_call_operand.hbm [shape: bf16[64,256], index: 17, kind: input, shape index: {}]
  %s18 = inlined_call_operand.vmem [shape: f32[1,256], index: 18, kind: input, shape index: {}]
  %s19 = inlined_call_operand.vmem [shape: f32[1,256], index: 19, kind: input, shape index: {}]
  %s20 = inlined_call_operand.hbm [shape: bf16[64,128], index: 20, kind: input, shape index: {}]
  %s21 = inlined_call_operand.vmem [shape: f32[1,128], index: 21, kind: input, shape index: {}]
  %s22 = inlined_call_operand.hbm [shape: f32[2,8,128], index: 22, kind: output, shape index: {}]
  %s23 = sld [smem:[#allocation0]]
  $region161: #{tpu_custom_call.1} parent=0
    _
  %s25 = ssub.s32 1, %s23
  %s26 = scalar_select 0, %s25, %s23
  $region1: #{tpu_custom_call.1} parent=0
    #allocation2 [shape = 'u8[8192]{0}', space=vmem, size = 0x2000, scoped, tag = 'input window, operand 0']
    #allocation3 [shape = 's32[2]{0}', space=sflag, size = 0x8, scoped, tag = 'scoped memory for tpu_custom_call.1']
    #allocation4 [shape = 's32[2]{0}', space=sflag, size = 0x8, scoped, tag = 'scoped memory for tpu_custom_call.1']
    #allocation5 [shape = 'u8[512]{0}', space=vmem, size = 0x400, scoped, tag = 'input window, operand 2, single buffered']
    #allocation6 [shape = 's32[1]{0}', space=sflag, size = 0x4, scoped, tag = 'scoped memory for tpu_custom_call.1']
    #allocation7 [shape = 'u8[512]{0}', space=vmem, size = 0x400, scoped, tag = 'input window, operand 3, single buffered']
    #allocation8 [shape = 'u8[2048]{0}', space=vmem, size = 0x800, scoped, tag = 'input window, operand 5, single buffered']
    #allocation9 [shape = 's32[1]{0}', space=sflag, size = 0x4, scoped, tag = 'scoped memory for tpu_custom_call.1']
    #allocation10 [shape = 'u8[1024]{0}', space=vmem, size = 0x400, scoped, tag = 'input window, operand 8, single buffered']
    #allocation11 [shape = 'u8[32768]{0}', space=vmem, size = 0x8000, scoped, tag = 'input window, operand 10, single buffered']
    #allocation12 [shape = 's32[1]{0}', space=sflag, size = 0x4, scoped, tag = 'scoped memory for tpu_custom_call.1']
    #allocation13 [shape = 'u8[1024]{0}', space=vmem, size = 0x400, scoped, tag = 'input window, operand 14, single buffered']
    #allocation14 [shape = 'u8[32768]{0}', space=vmem, size = 0x8000, scoped, tag = 'input window, operand 16, single buffered']
    #allocation15 [shape = 's32[1]{0}', space=sflag, size = 0x4, scoped, tag = 'scoped memory for tpu_custom_call.1']
    #allocation16 [shape = 'u8[32768]{0}', space=vmem, size = 0x8000, scoped, tag = 'input window, operand 17, single buffered']
    #allocation17 [shape = 'u8[16384]{0}', space=vmem, size = 0x4000, scoped, tag = 'input window, operand 20, single buffered']
    #allocation18 [shape = 's32[1]{0}', space=sflag, size = 0x4, scoped, tag = 'scoped memory for tpu_custom_call.1']
    #allocation19 [shape = 'u8[8192]{0}', space=vmem, size = 0x2000, scoped, tag = 'output window, operand 0']
    %27 = vsyncpa [#allocation3], 0
    %s28 = scalar_lea.sflag [#allocation3], 1
    %29 = vsyncpa %s28, 0
    %30 = vsyncpa [#allocation6], 0
    %31 = vsyncpa [#allocation9], 0
    %32 = vsyncpa [#allocation12], 0
    %33 = vsyncpa [#allocation15], 0
    %34 = vsyncpa [#allocation18], 0
    %35 = vsyncpa [#allocation4], 0
    %s36 = scalar_lea.sflag [#allocation4], 1
    %37 = vsyncpa %s36, 0
    loop: start=0, step=1, limit=4
    $region2: #{tpu_custom_call.1} parent=1 // loop_pre_header
      _
    $region3: #{tpu_custom_call.1} parent=1 // loop_header
      %s39 = sphi 0, %s43
      %p40 = scmp.ge.s32.totalorder %s39, 4
      %s49 = sphi 0, %s51
      %s52 = sphi 0, %s49
      %s53 = sphi 0, %s52
      %s69 = sphi 0, %s53
      %s75 = sphi 0, %s77
      %s78 = sphi 0, %s75
      %s79 = sphi 0, %s78
      %s95 = sphi 0, %s79
      %s99 = sphi 0, %s99
      %s101 = sphi 0, %s99
      %s102 = sphi 0, %s101
      %s116 = sphi 0, %s102
      %s120 = sphi 0, %s120
      %s122 = sphi 0, %s120
      %s123 = sphi 0, %s122
      %s137 = sphi 0, %s123
      %s141 = sphi 0, %s141
      %s143 = sphi 0, %s141
      %s144 = sphi 0, %s143
      %s158 = sphi 0, %s144
      %s162 = sphi 0, %s162
      %s164 = sphi 0, %s162
      %s165 = sphi 0, %s164
      %s179 = sphi 0, %s165
      %s183 = sphi 0, %s183
      %s185 = sphi 0, %s183
      %s186 = sphi 0, %s185
      %s200 = sphi 0, %s186
      %s204 = sphi 0, %s204
      %s206 = sphi 0, %s204
      %s207 = sphi 0, %s206
      %s221 = sphi 0, %s207
      %s225 = sphi 0, %s225
      %s227 = sphi 0, %s225
      %s228 = sphi 0, %s227
      %s242 = sphi 0, %s228
      %s246 = sphi 0, %s246
      %s248 = sphi 0, %s246
      %s249 = sphi 0, %s248
      %s263 = sphi 0, %s249
      %s267 = sphi 0, %s267
      %s269 = sphi 0, %s267
      %s270 = sphi 0, %s269
      %s284 = sphi 0, %s270
      %s288 = sphi 0, %s288
      %s290 = sphi 0, %s288
      %s291 = sphi 0, %s290
      %s305 = sphi 0, %s291
      %s309 = sphi 0, %s309
      %s311 = sphi 0, %s309
      %s312 = sphi 0, %s311
      %s326 = sphi 0, %s312
      %s330 = sphi 0, %s330
      %s332 = sphi 0, %s330
      %s333 = sphi 0, %s332
      %s347 = sphi 0, %s333
      %s351 = sphi 0, %s351
      %s353 = sphi 0, %s351
      %s354 = sphi 0, %s353
      %s368 = sphi 0, %s354
      %s372 = sphi 0, %s372
      %s374 = sphi 0, %s372
      %s375 = sphi 0, %s374
      %s389 = sphi 0, %s375
      %s393 = sphi 0, %s393
      %s395 = sphi 0, %s393
      %s396 = sphi 0, %s395
      %s410 = sphi 0, %s396
      %s414 = sphi 0, %s414
      %s416 = sphi 0, %s414
      %s417 = sphi 0, %s416
      %s431 = sphi 0, %s417
      %s435 = sphi 0, %s435
      %s437 = sphi 0, %s435
      %s438 = sphi 0, %s437
      %s452 = sphi 0, %s438
      %s456 = sphi 0, %s456
      %s458 = sphi 0, %s456
      %s459 = sphi 0, %s458
      %s473 = sphi 0, %s459
      %s477 = sphi 0, %s477
      %s479 = sphi 0, %s477
      %s480 = sphi 0, %s479
      %s494 = sphi 0, %s480
      %s498 = sphi 0, %s498
      %s500 = sphi 0, %s498
      %s501 = sphi 0, %s500
      %s515 = sphi 0, %s501
      %s521 = sphi 0, %s523
      %s524 = sphi 0, %s521
      %s525 = sphi 0, %s524
      %s541 = sphi 0, %s525
    $region4: #{tpu_custom_call.1} parent=1 // loop_header_branch
      %42 = sbr.rel (%p40) target = $region8
    $region5: #{tpu_custom_call.1} parent=1 // loop_body
      %s44 = ssub.s32 %s39, 1
      %s45 = ssub.s32 %s39, 2
      %s46 = sadd.s32 %s39, 1
      %s47 = ssub.s32 %s39, %s46
      %p48 = scmp.eq.s32.totalorder %s47, 0
      %s50 = sadd.s32 %s49, 1
      %s51 = scalar_select %p48, %s49, %s50
      %p54 = pneg %p48
      %p55 = scmp.eq.s32.totalorder %s39, 1
      %p56 = por %p54, %p55
      %p57 = scmp.ne.s32.totalorder %s49, %s52
      %p58 = scmp.eq.s32.totalorder %s39, 0
      %p59 = por %p57, %p58
      %p60 = scmp.ne.s32.totalorder %s49, %s52
      %p61 = scmp.eq.s32.totalorder %s44, 1
      %p62 = por %p60, %p61
      %p63 = scmp.ne.s32.totalorder %s52, %s53
      %p64 = scmp.eq.s32.totalorder %s44, 0
      %p65 = por %p63, %p64
      %p66 = scmp.ne.s32.totalorder %s52, %s53
      %p67 = scmp.eq.s32.totalorder %s45, 1
      %p68 = por %p66, %p67
      %p70 = scmp.ne.s32.totalorder %s53, %s69
      %p71 = scmp.eq.s32.totalorder %s45, 0
      %p72 = por %p70, %p71
      %s73 = ssub.s32 %s39, %s46
      %p74 = scmp.eq.s32.totalorder %s73, 0
      %s76 = sadd.s32 %s75, 1
      %s77 = scalar_select %p74, %s75, %s76
      %p80 = pneg %p74
      %p81 = scmp.eq.s32.totalorder %s39, 1
      %p82 = por %p80, %p81
      %p83 = scmp.ne.s32.totalorder %s75, %s78
      %p84 = scmp.eq.s32.totalorder %s39, 0
      %p85 = por %p83, %p84
      %p86 = scmp.ne.s32.totalorder %s75, %s78
      %p87 = scmp.eq.s32.totalorder %s44, 1
      %p88 = por %p86, %p87
      %p89 = scmp.ne.s32.totalorder %s78, %s79
      %p90 = scmp.eq.s32.totalorder %s44, 0
      %p91 = por %p89, %p90
      %p92 = scmp.ne.s32.totalorder %s78, %s79
      %p93 = scmp.eq.s32.totalorder %s45, 1
      %p94 = por %p92, %p93
      %p96 = scmp.ne.s32.totalorder %s79, %s95
      %p97 = scmp.eq.s32.totalorder %s45, 0
      %p98 = por %p96, %p97
      %s100 = sadd.s32 %s99, 1
      %p103 = scmp.eq.s32.totalorder %s39, 1
      %p104 = scmp.ne.s32.totalorder %s99, %s101
      %p105 = scmp.eq.s32.totalorder %s39, 0
      %p106 = por %p104, %p105
      %p107 = scmp.ne.s32.totalorder %s99, %s101
      %p108 = scmp.eq.s32.totalorder %s44, 1
      %p109 = por %p107, %p108
      %p110 = scmp.ne.s32.totalorder %s101, %s102
      %p111 = scmp.eq.s32.totalorder %s44, 0
      %p112 = por %p110, %p111
      %p113 = scmp.ne.s32.totalorder %s101, %s102
      %p114 = scmp.eq.s32.totalorder %s45, 1
      %p115 = por %p113, %p114
      %p117 = scmp.ne.s32.totalorder %s102, %s116
      %p118 = scmp.eq.s32.totalorder %s45, 0
      %p119 = por %p117, %p118
      %s121 = sadd.s32 %s120, 1
      %p124 = scmp.eq.s32.totalorder %s39, 1
      %p125 = scmp.ne.s32.totalorder %s120, %s122
      %p126 = scmp.eq.s32.totalorder %s39, 0
      %p127 = por %p125, %p126
      %p128 = scmp.ne.s32.totalorder %s120, %s122
      %p129 = scmp.eq.s32.totalorder %s44, 1
      %p130 = por %p128, %p129
      %p131 = scmp.ne.s32.totalorder %s122, %s123
      %p132 = scmp.eq.s32.totalorder %s44, 0
      %p133 = por %p131, %p132
      %p134 = scmp.ne.s32.totalorder %s122, %s123
      %p135 = scmp.eq.s32.totalorder %s45, 1
      %p136 = por %p134, %p135
      %p138 = scmp.ne.s32.totalorder %s123, %s137
      %p139 = scmp.eq.s32.totalorder %s45, 0
      %p140 = por %p138, %p139
      %s142 = sadd.s32 %s141, 1
      %p145 = scmp.eq.s32.totalorder %s39, 1
      %p146 = scmp.ne.s32.totalorder %s141, %s143
      %p147 = scmp.eq.s32.totalorder %s39, 0
      %p148 = por %p146, %p147
      %p149 = scmp.ne.s32.totalorder %s141, %s143
      %p150 = scmp.eq.s32.totalorder %s44, 1
      %p151 = por %p149, %p150
      %p152 = scmp.ne.s32.totalorder %s143, %s144
      %p153 = scmp.eq.s32.totalorder %s44, 0
      %p154 = por %p152, %p153
      %p155 = scmp.ne.s32.totalorder %s143, %s144
      %p156 = scmp.eq.s32.totalorder %s45, 1
      %p157 = por %p155, %p156
      %p159 = scmp.ne.s32.totalorder %s144, %s158
      %p160 = scmp.eq.s32.totalorder %s45, 0
      %p161 = por %p159, %p160
      %s163 = sadd.s32 %s162, 1
      %p166 = scmp.eq.s32.totalorder %s39, 1
      %p167 = scmp.ne.s32.totalorder %s162, %s164
      %p168 = scmp.eq.s32.totalorder %s39, 0
      %p169 = por %p167, %p168
      %p170 = scmp.ne.s32.totalorder %s162, %s164
      %p171 = scmp.eq.s32.totalorder %s44, 1
      %p172 = por %p170, %p171
      %p173 = scmp.ne.s32.totalorder %s164, %s165
      %p174 = scmp.eq.s32.totalorder %s44, 0
      %p175 = por %p173, %p174
      %p176 = scmp.ne.s32.totalorder %s164, %s165
      %p177 = scmp.eq.s32.totalorder %s45, 1
      %p178 = por %p176, %p177
      %p180 = scmp.ne.s32.totalorder %s165, %s179
      %p181 = scmp.eq.s32.totalorder %s45, 0
      %p182 = por %p180, %p181
      %s184 = sadd.s32 %s183, 1
      %p187 = scmp.eq.s32.totalorder %s39, 1
      %p188 = scmp.ne.s32.totalorder %s183, %s185
      %p189 = scmp.eq.s32.totalorder %s39, 0
      %p190 = por %p188, %p189
      %p191 = scmp.ne.s32.totalorder %s183, %s185
      %p192 = scmp.eq.s32.totalorder %s44, 1
      %p193 = por %p191, %p192
      %p194 = scmp.ne.s32.totalorder %s185, %s186
      %p195 = scmp.eq.s32.totalorder %s44, 0
      %p196 = por %p194, %p195
      %p197 = scmp.ne.s32.totalorder %s185, %s186
      %p198 = scmp.eq.s32.totalorder %s45, 1
      %p199 = por %p197, %p198
      %p201 = scmp.ne.s32.totalorder %s186, %s200
      %p202 = scmp.eq.s32.totalorder %s45, 0
      %p203 = por %p201, %p202
      %s205 = sadd.s32 %s204, 1
      %p208 = scmp.eq.s32.totalorder %s39, 1
      %p209 = scmp.ne.s32.totalorder %s204, %s206
      %p210 = scmp.eq.s32.totalorder %s39, 0
      %p211 = por %p209, %p210
      %p212 = scmp.ne.s32.totalorder %s204, %s206
      %p213 = scmp.eq.s32.totalorder %s44, 1
      %p214 = por %p212, %p213
      %p215 = scmp.ne.s32.totalorder %s206, %s207
      %p216 = scmp.eq.s32.totalorder %s44, 0
      %p217 = por %p215, %p216
      %p218 = scmp.ne.s32.totalorder %s206, %s207
      %p219 = scmp.eq.s32.totalorder %s45, 1
      %p220 = por %p218, %p219
      %p222 = scmp.ne.s32.totalorder %s207, %s221
      %p223 = scmp.eq.s32.totalorder %s45, 0
      %p224 = por %p222, %p223
      %s226 = sadd.s32 %s225, 1
      %p229 = scmp.eq.s32.totalorder %s39, 1
      %p230 = scmp.ne.s32.totalorder %s225, %s227
      %p231 = scmp.eq.s32.totalorder %s39, 0
      %p232 = por %p230, %p231
      %p233 = scmp.ne.s32.totalorder %s225, %s227
      %p234 = scmp.eq.s32.totalorder %s44, 1
      %p235 = por %p233, %p234
      %p236 = scmp.ne.s32.totalorder %s227, %s228
      %p237 = scmp.eq.s32.totalorder %s44, 0
      %p238 = por %p236, %p237
      %p239 = scmp.ne.s32.totalorder %s227, %s228
      %p240 = scmp.eq.s32.totalorder %s45, 1
      %p241 = por %p239, %p240
      %p243 = scmp.ne.s32.totalorder %s228, %s242
      %p244 = scmp.eq.s32.totalorder %s45, 0
      %p245 = por %p243, %p244
      %s247 = sadd.s32 %s246, 1
      %p250 = scmp.eq.s32.totalorder %s39, 1
      %p251 = scmp.ne.s32.totalorder %s246, %s248
      %p252 = scmp.eq.s32.totalorder %s39, 0
      %p253 = por %p251, %p252
      %p254 = scmp.ne.s32.totalorder %s246, %s248
      %p255 = scmp.eq.s32.totalorder %s44, 1
      %p256 = por %p254, %p255
      %p257 = scmp.ne.s32.totalorder %s248, %s249
      %p258 = scmp.eq.s32.totalorder %s44, 0
      %p259 = por %p257, %p258
      %p260 = scmp.ne.s32.totalorder %s248, %s249
      %p261 = scmp.eq.s32.totalorder %s45, 1
      %p262 = por %p260, %p261
      %p264 = scmp.ne.s32.totalorder %s249, %s263
      %p265 = scmp.eq.s32.totalorder %s45, 0
      %p266 = por %p264, %p265
      %s268 = sadd.s32 %s267, 1
      %p271 = scmp.eq.s32.totalorder %s39, 1
      %p272 = scmp.ne.s32.totalorder %s267, %s269
      %p273 = scmp.eq.s32.totalorder %s39, 0
      %p274 = por %p272, %p273
      %p275 = scmp.ne.s32.totalorder %s267, %s269
      %p276 = scmp.eq.s32.totalorder %s44, 1
      %p277 = por %p275, %p276
      %p278 = scmp.ne.s32.totalorder %s269, %s270
      %p279 = scmp.eq.s32.totalorder %s44, 0
      %p280 = por %p278, %p279
      %p281 = scmp.ne.s32.totalorder %s269, %s270
      %p282 = scmp.eq.s32.totalorder %s45, 1
      %p283 = por %p281, %p282
      %p285 = scmp.ne.s32.totalorder %s270, %s284
      %p286 = scmp.eq.s32.totalorder %s45, 0
      %p287 = por %p285, %p286
      %s289 = sadd.s32 %s288, 1
      %p292 = scmp.eq.s32.totalorder %s39, 1
      %p293 = scmp.ne.s32.totalorder %s288, %s290
      %p294 = scmp.eq.s32.totalorder %s39, 0
      %p295 = por %p293, %p294
      %p296 = scmp.ne.s32.totalorder %s288, %s290
      %p297 = scmp.eq.s32.totalorder %s44, 1
      %p298 = por %p296, %p297
      %p299 = scmp.ne.s32.totalorder %s290, %s291
      %p300 = scmp.eq.s32.totalorder %s44, 0
      %p301 = por %p299, %p300
      %p302 = scmp.ne.s32.totalorder %s290, %s291
      %p303 = scmp.eq.s32.totalorder %s45, 1
      %p304 = por %p302, %p303
      %p306 = scmp.ne.s32.totalorder %s291, %s305
      %p307 = scmp.eq.s32.totalorder %s45, 0
      %p308 = por %p306, %p307
      %s310 = sadd.s32 %s309, 1
      %p313 = scmp.eq.s32.totalorder %s39, 1
      %p314 = scmp.ne.s32.totalorder %s309, %s311
      %p315 = scmp.eq.s32.totalorder %s39, 0
      %p316 = por %p314, %p315
      %p317 = scmp.ne.s32.totalorder %s309, %s311
      %p318 = scmp.eq.s32.totalorder %s44, 1
      %p319 = por %p317, %p318
      %p320 = scmp.ne.s32.totalorder %s311, %s312
      %p321 = scmp.eq.s32.totalorder %s44, 0
      %p322 = por %p320, %p321
      %p323 = scmp.ne.s32.totalorder %s311, %s312
      %p324 = scmp.eq.s32.totalorder %s45, 1
      %p325 = por %p323, %p324
      %p327 = scmp.ne.s32.totalorder %s312, %s326
      %p328 = scmp.eq.s32.totalorder %s45, 0
      %p329 = por %p327, %p328
      %s331 = sadd.s32 %s330, 1
      %p334 = scmp.eq.s32.totalorder %s39, 1
      %p335 = scmp.ne.s32.totalorder %s330, %s332
      %p336 = scmp.eq.s32.totalorder %s39, 0
      %p337 = por %p335, %p336
      %p338 = scmp.ne.s32.totalorder %s330, %s332
      %p339 = scmp.eq.s32.totalorder %s44, 1
      %p340 = por %p338, %p339
      %p341 = scmp.ne.s32.totalorder %s332, %s333
      %p342 = scmp.eq.s32.totalorder %s44, 0
      %p343 = por %p341, %p342
      %p344 = scmp.ne.s32.totalorder %s332, %s333
      %p345 = scmp.eq.s32.totalorder %s45, 1
      %p346 = por %p344, %p345
      %p348 = scmp.ne.s32.totalorder %s333, %s347
      %p349 = scmp.eq.s32.totalorder %s45, 0
      %p350 = por %p348, %p349
      %s352 = sadd.s32 %s351, 1
      %p355 = scmp.eq.s32.totalorder %s39, 1
      %p356 = scmp.ne.s32.totalorder %s351, %s353
      %p357 = scmp.eq.s32.totalorder %s39, 0
      %p358 = por %p356, %p357
      %p359 = scmp.ne.s32.totalorder %s351, %s353
      %p360 = scmp.eq.s32.totalorder %s44, 1
      %p361 = por %p359, %p360
      %p362 = scmp.ne.s32.totalorder %s353, %s354
      %p363 = scmp.eq.s32.totalorder %s44, 0
      %p364 = por %p362, %p363
      %p365 = scmp.ne.s32.totalorder %s353, %s354
      %p366 = scmp.eq.s32.totalorder %s45, 1
      %p367 = por %p365, %p366
      %p369 = scmp.ne.s32.totalorder %s354, %s368
      %p370 = scmp.eq.s32.totalorder %s45, 0
      %p371 = por %p369, %p370
      %s373 = sadd.s32 %s372, 1
      %p376 = scmp.eq.s32.totalorder %s39, 1
      %p377 = scmp.ne.s32.totalorder %s372, %s374
      %p378 = scmp.eq.s32.totalorder %s39, 0
      %p379 = por %p377, %p378
      %p380 = scmp.ne.s32.totalorder %s372, %s374
      %p381 = scmp.eq.s32.totalorder %s44, 1
      %p382 = por %p380, %p381
      %p383 = scmp.ne.s32.totalorder %s374, %s375
      %p384 = scmp.eq.s32.totalorder %s44, 0
      %p385 = por %p383, %p384
      %p386 = scmp.ne.s32.totalorder %s374, %s375
      %p387 = scmp.eq.s32.totalorder %s45, 1
      %p388 = por %p386, %p387
      %p390 = scmp.ne.s32.totalorder %s375, %s389
      %p391 = scmp.eq.s32.totalorder %s45, 0
      %p392 = por %p390, %p391
      %s394 = sadd.s32 %s393, 1
      %p397 = scmp.eq.s32.totalorder %s39, 1
      %p398 = scmp.ne.s32.totalorder %s393, %s395
      %p399 = scmp.eq.s32.totalorder %s39, 0
      %p400 = por %p398, %p399
      %p401 = scmp.ne.s32.totalorder %s393, %s395
      %p402 = scmp.eq.s32.totalorder %s44, 1
      %p403 = por %p401, %p402
      %p404 = scmp.ne.s32.totalorder %s395, %s396
      %p405 = scmp.eq.s32.totalorder %s44, 0
      %p406 = por %p404, %p405
      %p407 = scmp.ne.s32.totalorder %s395, %s396
      %p408 = scmp.eq.s32.totalorder %s45, 1
      %p409 = por %p407, %p408
      %p411 = scmp.ne.s32.totalorder %s396, %s410
      %p412 = scmp.eq.s32.totalorder %s45, 0
      %p413 = por %p411, %p412
      %s415 = sadd.s32 %s414, 1
      %p418 = scmp.eq.s32.totalorder %s39, 1
      %p419 = scmp.ne.s32.totalorder %s414, %s416
      %p420 = scmp.eq.s32.totalorder %s39, 0
      %p421 = por %p419, %p420
      %p422 = scmp.ne.s32.totalorder %s414, %s416
      %p423 = scmp.eq.s32.totalorder %s44, 1
      %p424 = por %p422, %p423
      %p425 = scmp.ne.s32.totalorder %s416, %s417
      %p426 = scmp.eq.s32.totalorder %s44, 0
      %p427 = por %p425, %p426
      %p428 = scmp.ne.s32.totalorder %s416, %s417
      %p429 = scmp.eq.s32.totalorder %s45, 1
      %p430 = por %p428, %p429
      %p432 = scmp.ne.s32.totalorder %s417, %s431
      %p433 = scmp.eq.s32.totalorder %s45, 0
      %p434 = por %p432, %p433
      %s436 = sadd.s32 %s435, 1
      %p439 = scmp.eq.s32.totalorder %s39, 1
      %p440 = scmp.ne.s32.totalorder %s435, %s437
      %p441 = scmp.eq.s32.totalorder %s39, 0
      %p442 = por %p440, %p441
      %p443 = scmp.ne.s32.totalorder %s435, %s437
      %p444 = scmp.eq.s32.totalorder %s44, 1
      %p445 = por %p443, %p444
      %p446 = scmp.ne.s32.totalorder %s437, %s438
      %p447 = scmp.eq.s32.totalorder %s44, 0
      %p448 = por %p446, %p447
      %p449 = scmp.ne.s32.totalorder %s437, %s438
      %p450 = scmp.eq.s32.totalorder %s45, 1
      %p451 = por %p449, %p450
      %p453 = scmp.ne.s32.totalorder %s438, %s452
      %p454 = scmp.eq.s32.totalorder %s45, 0
      %p455 = por %p453, %p454
      %s457 = sadd.s32 %s456, 1
      %p460 = scmp.eq.s32.totalorder %s39, 1
      %p461 = scmp.ne.s32.totalorder %s456, %s458
      %p462 = scmp.eq.s32.totalorder %s39, 0
      %p463 = por %p461, %p462
      %p464 = scmp.ne.s32.totalorder %s456, %s458
      %p465 = scmp.eq.s32.totalorder %s44, 1
      %p466 = por %p464, %p465
      %p467 = scmp.ne.s32.totalorder %s458, %s459
      %p468 = scmp.eq.s32.totalorder %s44, 0
      %p469 = por %p467, %p468
      %p470 = scmp.ne.s32.totalorder %s458, %s459
      %p471 = scmp.eq.s32.totalorder %s45, 1
      %p472 = por %p470, %p471
      %p474 = scmp.ne.s32.totalorder %s459, %s473
      %p475 = scmp.eq.s32.totalorder %s45, 0
      %p476 = por %p474, %p475
      %s478 = sadd.s32 %s477, 1
      %p481 = scmp.eq.s32.totalorder %s39, 1
      %p482 = scmp.ne.s32.totalorder %s477, %s479
      %p483 = scmp.eq.s32.totalorder %s39, 0
      %p484 = por %p482, %p483
      %p485 = scmp.ne.s32.totalorder %s477, %s479
      %p486 = scmp.eq.s32.totalorder %s44, 1
      %p487 = por %p485, %p486
      %p488 = scmp.ne.s32.totalorder %s479, %s480
      %p489 = scmp.eq.s32.totalorder %s44, 0
      %p490 = por %p488, %p489
      %p491 = scmp.ne.s32.totalorder %s479, %s480
      %p492 = scmp.eq.s32.totalorder %s45, 1
      %p493 = por %p491, %p492
      %p495 = scmp.ne.s32.totalorder %s480, %s494
      %p496 = scmp.eq.s32.totalorder %s45, 0
      %p497 = por %p495, %p496
      %s499 = sadd.s32 %s498, 1
      %p502 = scmp.eq.s32.totalorder %s39, 1
      %p503 = scmp.ne.s32.totalorder %s498, %s500
      %p504 = scmp.eq.s32.totalorder %s39, 0
      %p505 = por %p503, %p504
      %p506 = scmp.ne.s32.totalorder %s498, %s500
      %p507 = scmp.eq.s32.totalorder %s44, 1
      %p508 = por %p506, %p507
      %p509 = scmp.ne.s32.totalorder %s500, %s501
      %p510 = scmp.eq.s32.totalorder %s44, 0
      %p511 = por %p509, %p510
      %p512 = scmp.ne.s32.totalorder %s500, %s501
      %p513 = scmp.eq.s32.totalorder %s45, 1
      %p514 = por %p512, %p513
      %p516 = scmp.ne.s32.totalorder %s501, %s515
      %p517 = scmp.eq.s32.totalorder %s45, 0
      %p518 = por %p516, %p517
      %s519 = ssub.s32 %s39, %s46
      %p520 = scmp.eq.s32.totalorder %s519, 0
      %s522 = sadd.s32 %s521, 1
      %s523 = scalar_select %p520, %s521, %s522
      %p526 = pneg %p520
      %p527 = scmp.eq.s32.totalorder %s39, 1
      %p528 = por %p526, %p527
      %p529 = scmp.ne.s32.totalorder %s521, %s524
      %p530 = scmp.eq.s32.totalorder %s39, 0
      %p531 = por %p529, %p530
      %p532 = scmp.ne.s32.totalorder %s521, %s524
      %p533 = scmp.eq.s32.totalorder %s44, 1
      %p534 = por %p532, %p533
      %p535 = scmp.ne.s32.totalorder %s524, %s525
      %p536 = scmp.eq.s32.totalorder %s44, 0
      %p537 = por %p535, %p536
      %p538 = scmp.ne.s32.totalorder %s524, %s525
      %p539 = scmp.eq.s32.totalorder %s45, 1
      %p540 = por %p538, %p539
      %p542 = scmp.ne.s32.totalorder %s525, %s541
      %p543 = scmp.eq.s32.totalorder %s45, 0
      %p544 = por %p542, %p543
      %p545 = scmp.le.s32.totalorder 1, %s39
      %p546 = scmp.lt.s32.totalorder %s39, 3
      %p547 = pnand %p545, %p546
      %p548 = pneg %p547
      // Predicated region
      $region9: #{tpu_custom_call.1} parent=5 // pred_check
        _
      $region10: #{tpu_custom_call.1} parent=5 // pred_check_branch
        %550 = sbr.rel (%p547) target = $region12
      $region11: #{tpu_custom_call.1} parent=5 // pred_region
        %s551 = ssub.s32 %s39, 1
        // Predicated region
        $region13: #{tpu_custom_call.1} parent=11 // pred_check
          %p552 = pneg %p112
        $region14: #{tpu_custom_call.1} parent=11 // pred_check_branch
          %554 = sbr.rel (%p552) target = $region16
        $region15: #{tpu_custom_call.1} parent=11 // pred_region
          %556 = vsyncadd [#allocation6], 0
          %s558 = sshll.u32 %s2, 4
          %s559 = int_to_ptr.hbm [resolvable:$true] %s558
          %s560 = sshll.u32 [#allocation5], 4
          %s561 = int_to_ptr.vmem [resolvable:$true] %s560
          %563 = dma.hbm_to_vmem [thread:$0]  %s559, 16, %s561, [#allocation6]
        $region16: #{tpu_custom_call.1} parent=11 // pred_fallthru
          _
        // Predicated region
        $region17: #{tpu_custom_call.1} parent=11 // pred_check
          %p564 = pneg %p133
        $region18: #{tpu_custom_call.1} parent=11 // pred_check_branch
          %566 = sbr.rel (%p564) target = $region20
        $region19: #{tpu_custom_call.1} parent=11 // pred_region
          %568 = vsyncadd [#allocation6], 0
          %s570 = sshll.u32 %s3, 4
          %s571 = int_to_ptr.hbm [resolvable:$true] %s570
          %s572 = sshll.u32 [#allocation7], 4
          %s573 = int_to_ptr.vmem [resolvable:$true] %s572
          %575 = dma.hbm_to_vmem [thread:$0]  %s571, 16, %s573, [#allocation6]
        $region20: #{tpu_custom_call.1} parent=11 // pred_fallthru
          _
        // Predicated region
        $region21: #{tpu_custom_call.1} parent=11 // pred_check
          %p576 = pneg %p154
        $region22: #{tpu_custom_call.1} parent=11 // pred_check_branch
          %578 = sbr.rel (%p576) target = $region24
        $region23: #{tpu_custom_call.1} parent=11 // pred_region
          _
        $region24: #{tpu_custom_call.1} parent=11 // pred_fallthru
          _
        // Predicated region
        $region25: #{tpu_custom_call.1} parent=11 // pred_check
          %p579 = pneg %p175
        $region26: #{tpu_custom_call.1} parent=11 // pred_check_branch
          %581 = sbr.rel (%p579) target = $region28
        $region27: #{tpu_custom_call.1} parent=11 // pred_region
          %583 = vsyncadd [#allocation9], 0
          %s584 = sshll.u32 %s5, 4
          %s585 = int_to_ptr.hbm [resolvable:$true] %s584
          %s586 = sshll.u32 [#allocation8], 4
          %s587 = int_to_ptr.vmem [resolvable:$true] %s586
          %592 = dma.hbm_to_vmem [thread:$0]  %s585, 64, %s587, [#allocation9], 32, 32, 2
        $region28: #{tpu_custom_call.1} parent=11 // pred_fallthru
          _
        // Predicated region
        $region29: #{tpu_custom_call.1} parent=11 // pred_check
          %p593 = pneg %p196
        $region30: #{tpu_custom_call.1} parent=11 // pred_check_branch
          %595 = sbr.rel (%p593) target = $region32
        $region31: #{tpu_custom_call.1} parent=11 // pred_region
          _
        $region32: #{tpu_custom_call.1} parent=11 // pred_fallthru
          _
        // Predicated region
        $region33: #{tpu_custom_call.1} parent=11 // pred_check
          %p596 = pneg %p217
        $region34: #{tpu_custom_call.1} parent=11 // pred_check_branch
          %598 = sbr.rel (%p596) target = $region36
        $region35: #{tpu_custom_call.1} parent=11 // pred_region
          _
        $region36: #{tpu_custom_call.1} parent=11 // pred_fallthru
          _
        // Predicated region
        $region37: #{tpu_custom_call.1} parent=11 // pred_check
          %p599 = pneg %p238
        $region38: #{tpu_custom_call.1} parent=11 // pred_check_branch
          %601 = sbr.rel (%p599) target = $region40
        $region39: #{tpu_custom_call.1} parent=11 // pred_region
          %603 = vsyncadd [#allocation9], 0
          %s604 = sshll.u32 %s8, 4
          %s605 = int_to_ptr.hbm [resolvable:$true] %s604
          %s606 = sshll.u32 [#allocation10], 4
          %s607 = int_to_ptr.vmem [resolvable:$true] %s606
          %612 = dma.hbm_to_vmem [thread:$0]  %s605, 32, %s607, [#allocation9], 16, 16, 1
        $region40: #{tpu_custom_call.1} parent=11 // pred_fallthru
          _
        // Predicated region
        $region41: #{tpu_custom_call.1} parent=11 // pred_check
          %p613 = pneg %p259
        $region42: #{tpu_custom_call.1} parent=11 // pred_check_branch
          %615 = sbr.rel (%p613) target = $region44
        $region43: #{tpu_custom_call.1} parent=11 // pred_region
          _
        $region44: #{tpu_custom_call.1} parent=11 // pred_fallthru
          _
        // Predicated region
        $region45: #{tpu_custom_call.1} parent=11 // pred_check
          %p616 = pneg %p280
        $region46: #{tpu_custom_call.1} parent=11 // pred_check_branch
          %618 = sbr.rel (%p616) target = $region48
        $region47: #{tpu_custom_call.1} parent=11 // pred_region
          %620 = vsyncadd [#allocation12], 0
          %s621 = sshll.u32 %s10, 4
          %s622 = int_to_ptr.hbm [resolvable:$true] %s621
          %s623 = sshll.u32 [#allocation11], 4
          %s624 = int_to_ptr.vmem [resolvable:$true] %s623
          %629 = dma.hbm_to_vmem [thread:$0]  %s622, 1024, %s624, [#allocation12], 64, 64, 4
        $region48: #{tpu_custom_call.1} parent=11 // pred_fallthru
          _
        // Predicated region
        $region49: #{tpu_custom_call.1} parent=11 // pred_check
          %p630 = pneg %p301
        $region50: #{tpu_custom_call.1} parent=11 // pred_check_branch
          %632 = sbr.rel (%p630) target = $region52
        $region51: #{tpu_custom_call.1} parent=11 // pred_region
          _
        $region52: #{tpu_custom_call.1} parent=11 // pred_fallthru
          _
        // Predicated region
        $region53: #{tpu_custom_call.1} parent=11 // pred_check
          %p633 = pneg %p322
        $region54: #{tpu_custom_call.1} parent=11 // pred_check_branch
          %635 = sbr.rel (%p633) target = $region56
        $region55: #{tpu_custom_call.1} parent=11 // pred_region
          _
        $region56: #{tpu_custom_call.1} parent=11 // pred_fallthru
          _
        // Predicated region
        $region57: #{tpu_custom_call.1} parent=11 // pred_check
          %p636 = pneg %p343
        $region58: #{tpu_custom_call.1} parent=11 // pred_check_branch
          %638 = sbr.rel (%p636) target = $region60
        $region59: #{tpu_custom_call.1} parent=11 // pred_region
          _
        $region60: #{tpu_custom_call.1} parent=11 // pred_fallthru
          _
        // Predicated region
        $region61: #{tpu_custom_call.1} parent=11 // pred_check
          %p639 = pneg %p364
        $region62: #{tpu_custom_call.1} parent=11 // pred_check_branch
          %641 = sbr.rel (%p639) target = $region64
        $region63: #{tpu_custom_call.1} parent=11 // pred_region
          %643 = vsyncadd [#allocation12], 0
          %s644 = sshll.u32 %s14, 4
          %s645 = int_to_ptr.hbm [resolvable:$true] %s644
          %s646 = sshll.u32 [#allocation13], 4
          %s647 = int_to_ptr.vmem [resolvable:$true] %s646
          %652 = dma.hbm_to_vmem [thread:$0]  %s645, 32, %s647, [#allocation12], 16, 16, 1
        $region64: #{tpu_custom_call.1} parent=11 // pred_fallthru
          _
        // Predicated region
        $region65: #{tpu_custom_call.1} parent=11 // pred_check
          %p653 = pneg %p385
        $region66: #{tpu_custom_call.1} parent=11 // pred_check_branch
          %655 = sbr.rel (%p653) target = $region68
        $region67: #{tpu_custom_call.1} parent=11 // pred_region
          _
        $region68: #{tpu_custom_call.1} parent=11 // pred_fallthru
          _
        // Predicated region
        $region69: #{tpu_custom_call.1} parent=11 // pred_check
          %p656 = pneg %p406
        $region70: #{tpu_custom_call.1} parent=11 // pred_check_branch
          %658 = sbr.rel (%p656) target = $region72
        $region71: #{tpu_custom_call.1} parent=11 // pred_region
          %660 = vsyncadd [#allocation15], 0
          %s661 = sshll.u32 %s16, 4
          %s662 = int_to_ptr.hbm [resolvable:$true] %s661
          %s663 = sshll.u32 [#allocation14], 4
          %s664 = int_to_ptr.vmem [resolvable:$true] %s663
          %669 = dma.hbm_to_vmem [thread:$0]  %s662, 1024, %s664, [#allocation15], 128, 128, 8
        $region72: #{tpu_custom_call.1} parent=11 // pred_fallthru
          _
        // Predicated region
        $region73: #{tpu_custom_call.1} parent=11 // pred_check
          %p670 = pneg %p427
        $region74: #{tpu_custom_call.1} parent=11 // pred_check_branch
          %672 = sbr.rel (%p670) target = $region76
        $region75: #{tpu_custom_call.1} parent=11 // pred_region
          %674 = vsyncadd [#allocation15], 0
          %s675 = sshll.u32 %s17, 4
          %s676 = int_to_ptr.hbm [resolvable:$true] %s675
          %s677 = sshll.u32 [#allocation16], 4
          %s678 = int_to_ptr.vmem [resolvable:$true] %s677
          %683 = dma.hbm_to_vmem [thread:$0]  %s676, 1024, %s678, [#allocation15], 128, 128, 8
        $region76: #{tpu_custom_call.1} parent=11 // pred_fallthru
          _
        // Predicated region
        $region77: #{tpu_custom_call.1} parent=11 // pred_check
          %p684 = pneg %p448
        $region78: #{tpu_custom_call.1} parent=11 // pred_check_branch
          %686 = sbr.rel (%p684) target = $region80
        $region79: #{tpu_custom_call.1} parent=11 // pred_region
          _
        $region80: #{tpu_custom_call.1} parent=11 // pred_fallthru
          _
        // Predicated region
        $region81: #{tpu_custom_call.1} parent=11 // pred_check
          %p687 = pneg %p469
        $region82: #{tpu_custom_call.1} parent=11 // pred_check_branch
          %689 = sbr.rel (%p687) target = $region84
        $region83: #{tpu_custom_call.1} parent=11 // pred_region
          _
        $region84: #{tpu_custom_call.1} parent=11 // pred_fallthru
          _
        // Predicated region
        $region85: #{tpu_custom_call.1} parent=11 // pred_check
          %p690 = pneg %p490
        $region86: #{tpu_custom_call.1} parent=11 // pred_check_branch
          %692 = sbr.rel (%p690) target = $region88
        $region87: #{tpu_custom_call.1} parent=11 // pred_region
          %694 = vsyncadd [#allocation18], 0
          %s695 = sshll.u32 %s20, 4
          %s696 = int_to_ptr.hbm [resolvable:$true] %s695
          %s697 = sshll.u32 [#allocation17], 4
          %s698 = int_to_ptr.vmem [resolvable:$true] %s697
          %703 = dma.hbm_to_vmem [thread:$0]  %s696, 512, %s698, [#allocation18], 64, 64, 4
        $region88: #{tpu_custom_call.1} parent=11 // pred_fallthru
          _
        // Predicated region
        $region89: #{tpu_custom_call.1} parent=11 // pred_check
          %p704 = pneg %p511
        $region90: #{tpu_custom_call.1} parent=11 // pred_check_branch
          %706 = sbr.rel (%p704) target = $region92
        $region91: #{tpu_custom_call.1} parent=11 // pred_region
          _
        $region92: #{tpu_custom_call.1} parent=11 // pred_fallthru
          _
      $region12: #{tpu_custom_call.1} parent=5 // pred_fallthru
        _
      %p707 = scmp.lt.s32.totalorder %s39, 2
      // Predicated region
      $region93: #{tpu_custom_call.1} parent=5 // pred_check
        %p708 = pneg %p707
      $region94: #{tpu_custom_call.1} parent=5 // pred_check_branch
        %710 = sbr.rel (%p708) target = $region96
      $region95: #{tpu_custom_call.1} parent=5 // pred_region
        // Predicated region
        $region97: #{tpu_custom_call.1} parent=95 // pred_check
          %p711 = pneg %p59
        $region98: #{tpu_custom_call.1} parent=95 // pred_check_branch
          %713 = sbr.rel (%p711) target = $region100
        $region99: #{tpu_custom_call.1} parent=95 // pred_region
          %s714 = sand.u32 %s49, 1
          %s715 = scalar_lea.sflag [#allocation3], %s714
          %s716 = sand.u32 %s49, 1
          %s717 = smul.addr %s716, 8
          %s718 = scalar_lea.vmem [#allocation2], %s717
          %720 = vsyncadd %s715, 0
          %s721 = smul.addr %s39, 8
          %s722 = scalar_lea.hbm %s0, %s721
          %s724 = sshll.u32 %s722, 4
          %s725 = int_to_ptr.hbm [resolvable:$true] %s724
          %s726 = sshll.u32 %s718, 4
          %s727 = int_to_ptr.vmem [resolvable:$true] %s726
          %729 = dma.hbm_to_vmem [thread:$0]  %s725, 128, %s727, %s715
        $region100: #{tpu_custom_call.1} parent=95 // pred_fallthru
          _
        // Predicated region
        $region101: #{tpu_custom_call.1} parent=95 // pred_check
          %p730 = pneg %p85
        $region102: #{tpu_custom_call.1} parent=95 // pred_check_branch
          %732 = sbr.rel (%p730) target = $region104
        $region103: #{tpu_custom_call.1} parent=95 // pred_region
          %p733 = scmp.lt.s32.totalorder %s39, 1
          %s734 = scalar_select %p733, %s39, 1
          %s735 = scalar_lea.vmem %s1, %s734
        $region104: #{tpu_custom_call.1} parent=95 // pred_fallthru
          _
      $region96: #{tpu_custom_call.1} parent=5 // pred_fallthru
        _
      %p736 = scmp.le.s32.totalorder 1, %s39
      %p737 = scmp.lt.s32.totalorder %s39, 3
      %p738 = pnand %p736, %p737
      %p739 = pneg %p738
      // Predicated region
      $region105: #{tpu_custom_call.1} parent=5 // pred_check
        _
      $region106: #{tpu_custom_call.1} parent=5 // pred_check_branch
        %741 = sbr.rel (%p738) target = $region108
      $region107: #{tpu_custom_call.1} parent=5 // pred_region
        %s742 = ssub.s32 %s39, 1
        %s743 = sand.u32 %s52, 1
        %s744 = scalar_lea.sflag [#allocation3], %s743
        %s745 = sand.u32 %s52, 1
        %s746 = smul.addr %s745, 8
        %s747 = scalar_lea.vmem [#allocation2], %s746
        // Predicated region
        $region109: #{tpu_custom_call.1} parent=107 // pred_check
          %p748 = pneg %p65
        $region110: #{tpu_custom_call.1} parent=107 // pred_check_branch
          %750 = sbr.rel (%p748) target = $region112
        $region111: #{tpu_custom_call.1} parent=107 // pred_region
          %752 = dma.done %s744, 128
        $region112: #{tpu_custom_call.1} parent=107 // pred_fallthru
          _
        // Predicated region
        $region113: #{tpu_custom_call.1} parent=107 // pred_check
          %p753 = pneg %p112
        $region114: #{tpu_custom_call.1} parent=107 // pred_check_branch
          %755 = sbr.rel (%p753) target = $region116
        $region115: #{tpu_custom_call.1} parent=107 // pred_region
          %757 = dma.done [#allocation6], 16
        $region116: #{tpu_custom_call.1} parent=107 // pred_fallthru
          _
        // Predicated region
        $region117: #{tpu_custom_call.1} parent=107 // pred_check
          %p758 = pneg %p133
        $region118: #{tpu_custom_call.1} parent=107 // pred_check_branch
          %760 = sbr.rel (%p758) target = $region120
        $region119: #{tpu_custom_call.1} parent=107 // pred_region
          %762 = dma.done [#allocation6], 16
        $region120: #{tpu_custom_call.1} parent=107 // pred_fallthru
          _
        // Predicated region
        $region121: #{tpu_custom_call.1} parent=107 // pred_check
          %p763 = pneg %p175
        $region122: #{tpu_custom_call.1} parent=107 // pred_check_branch
          %765 = sbr.rel (%p763) target = $region124
        $region123: #{tpu_custom_call.1} parent=107 // pred_region
          %767 = dma.done [#allocation9], 64
        $region124: #{tpu_custom_call.1} parent=107 // pred_fallthru
          _
        // Predicated region
        $region125: #{tpu_custom_call.1} parent=107 // pred_check
          %p768 = pneg %p238
        $region126: #{tpu_custom_call.1} parent=107 // pred_check_branch
          %770 = sbr.rel (%p768) target = $region128
        $region127: #{tpu_custom_call.1} parent=107 // pred_region
          %772 = dma.done [#allocation9], 32
        $region128: #{tpu_custom_call.1} parent=107 // pred_fallthru
          _
        // Predicated region
        $region129: #{tpu_custom_call.1} parent=107 // pred_check
          %p773 = pneg %p280
        $region130: #{tpu_custom_call.1} parent=107 // pred_check_branch
          %775 = sbr.rel (%p773) target = $region132
        $region131: #{tpu_custom_call.1} parent=107 // pred_region
          %777 = dma.done [#allocation12], 1024
        $region132: #{tpu_custom_call.1} parent=107 // pred_fallthru
          _
        // Predicated region
        $region133: #{tpu_custom_call.1} parent=107 // pred_check
          %p778 = pneg %p364
        $region134: #{tpu_custom_call.1} parent=107 // pred_check_branch
          %780 = sbr.rel (%p778) target = $region136
        $region135: #{tpu_custom_call.1} parent=107 // pred_region
          %782 = dma.done [#allocation12], 32
        $region136: #{tpu_custom_call.1} parent=107 // pred_fallthru
          _
        // Predicated region
        $region137: #{tpu_custom_call.1} parent=107 // pred_check
          %p783 = pneg %p406
        $region138: #{tpu_custom_call.1} parent=107 // pred_check_branch
          %785 = sbr.rel (%p783) target = $region140
        $region139: #{tpu_custom_call.1} parent=107 // pred_region
          %787 = dma.done [#allocation15], 1024
        $region140: #{tpu_custom_call.1} parent=107 // pred_fallthru
          _
        // Predicated region
        $region141: #{tpu_custom_call.1} parent=107 // pred_check
          %p788 = pneg %p427
        $region142: #{tpu_custom_call.1} parent=107 // pred_check_branch
          %790 = sbr.rel (%p788) target = $region144
        $region143: #{tpu_custom_call.1} parent=107 // pred_region
          %792 = dma.done [#allocation15], 1024
        $region144: #{tpu_custom_call.1} parent=107 // pred_fallthru
          _
        // Predicated region
        $region145: #{tpu_custom_call.1} parent=107 // pred_check
          %p793 = pneg %p490
        $region146: #{tpu_custom_call.1} parent=107 // pred_check_branch
          %795 = sbr.rel (%p793) target = $region148
        $region147: #{tpu_custom_call.1} parent=107 // pred_region
          %797 = dma.done [#allocation18], 512
        $region148: #{tpu_custom_call.1} parent=107 // pred_fallthru
          _
        %s798 = sand.u32 %s52, 1
        %s799 = scalar_lea.sflag [#allocation3], %s798
        %s800 = sand.u32 %s52, 1
        %s801 = smul.addr %s800, 8
        %s802 = scalar_lea.vmem [#allocation2], %s801
        %p803 = pneg %p65
        %p804 = pneg %p62
        %p805 = scmp.lt.s32.totalorder %s44, 1
        %s806 = scalar_select %p805, %s44, 1
        %s807 = scalar_lea.vmem %s1, %s806
        %p808 = pneg %p91
        %p809 = pneg %p88
        %p810 = pneg %p112
        %p811 = pneg %p109
        %p812 = pneg %p133
        %p813 = pneg %p130
        %p814 = pneg %p154
        %p815 = pneg %p151
        %p816 = pneg %p175
        %p817 = pneg %p172
        %p818 = pneg %p196
        %p819 = pneg %p193
        %p820 = pneg %p217
        %p821 = pneg %p214
        %p822 = pneg %p238
        %p823 = pneg %p235
        %p824 = pneg %p259
        %p825 = pneg %p256
        %p826 = pneg %p280
        %p827 = pneg %p277
        %p828 = pneg %p301
        %p829 = pneg %p298
        %p830 = pneg %p322
        %p831 = pneg %p319
        %p832 = pneg %p343
        %p833 = pneg %p340
        %p834 = pneg %p364
        %p835 = pneg %p361
        %p836 = pneg %p385
        %p837 = pneg %p382
        %p838 = pneg %p406
        %p839 = pneg %p403
        %p840 = pneg %p427
        %p841 = pneg %p424
        %p842 = pneg %p448
        %p843 = pneg %p445
        %p844 = pneg %p469
        %p845 = pneg %p466
        %p846 = pneg %p490
        %p847 = pneg %p487
        %p848 = pneg %p511
        %p849 = pneg %p508
        %p850 = pneg %p537
        %p851 = pneg %p534
        %s852 = sand.u32 %s524, 1
        %s853 = scalar_lea.sflag [#allocation4], %s852
        %s854 = sand.u32 %s524, 1
        %s855 = smul.addr %s854, 8
        %s856 = scalar_lea.vmem [#allocation19], %s855
        %p857 = scmp.lt.s32.totalorder %s44, 1
        %s858 = scalar_select %p857, %s44, 1
        %s859 = scalar_lea.vmem %s1, %s858
        %v861 = vld [vmem:[%s747] sm:$0xff]
        %v862 = vld [vmem:[#allocation5] sm:$0x1]
        %v863 = vld [vmem:[#allocation7] sm:$0x1]
        %vm864 = vcmask 523264
        %v865 = vsel %vm864, %v861, 0.0
        %866 = vadd.xlane.f32.xlu0 %v865
        %v867 = vpop.xlane.xlu0 %866
        %v868 = vrcp.pop 64.0
        %v869 = vmul.f32 64.0, %v868
        %v870 = vsub.f32 1.0, %v869
        %v871 = vmul.f32 %v868, %v870
        %v872 = vadd.f32 %v868, %v871
        %vm873 = vweird.f32 %v868
        %v874 = vsel %vm873, %v868, %v872
        %v875 = vmul.f32 %v867, %v874
        %v876 = vsub.f32 %v861, %v875
        %v877 = vmul.f32 %v876, %v876
        %v878 = vsel %vm864, %v877, 0.0
        %879 = vadd.xlane.f32.xlu0 %v878
        %v880 = vpop.xlane.xlu0 %879
        %v881 = vmul.f32 %v880, %v874
        %v882 = vadd.f32 %v881, 1e-12
        %v883 = vrsqrt.pop %v882
        %v884 = vmul.f32 %v883, %v882
        %v885 = vmul.f32 %v884, %v883
        %v886 = vmul.f32 0.5, %v885
        %v887 = vsub.f32 1.5, %v886
        %v888 = vmul.f32 %v883, %v887
        %vm889 = vweird.f32 %v882
        %vm890 = vweird.f32 %v883
        %vm891 = vmor %vm889, %vm890
        %v892 = vsel %vm891, %v883, %v888
        %v893 = vmul.f32 %v876, %v892
        %v895 = vperm.slane %v862, 0
        %v897 = vmul.f32 %v893, %v895
        %v899 = vperm.slane %v863, 0
        %v901 = vadd.f32 %v897, %v899
        %v902 = vld [vmem:[%s859] sm:$0x1]
        %v903 = vld [vmem:[%s4] sm:$0xff]
        %v904 = vld [vmem:[%s4 + $0x8] sm:$0xff]
        %v905 = vld [vmem:[%s4 + $0x10] sm:$0xff]
        %v906 = vld [vmem:[%s4 + $0x18] sm:$0xff]
        %v907 = vld [vmem:[%s4 + $0x20] sm:$0xff]
        %v908 = vld [vmem:[%s4 + $0x28] sm:$0xff]
        %v909 = vld [vmem:[%s4 + $0x30] sm:$0xff]
        %v910 = vld [vmem:[%s4 + $0x38] sm:$0xff]
        %v911 = vpack.c.bf16 %v901, %v901
        %v912 = vld [vmem:[#allocation8] sm:$0x3]
        %v914 = vperm.slane %v912, 0
        %v915 = vperm.slane %v912, 1
        %v926 = vunpack.c.l.b16 %v903
        %v927 = vunpack.c.h.b16 %v903
        %v928 = vunpack.c.l.b16 %v904
        %v929 = vunpack.c.h.b16 %v904
        %v930 = vunpack.c.l.b16 %v905
        %v931 = vunpack.c.h.b16 %v905
        %v932 = vunpack.c.l.b16 %v906
        %v933 = vunpack.c.h.b16 %v906
        %v934 = vunpack.c.l.b16 %v907
        %v935 = vunpack.c.h.b16 %v907
        %v936 = vunpack.c.l.b16 %v908
        %v937 = vunpack.c.h.b16 %v908
        %v938 = vunpack.c.l.b16 %v909
        %v939 = vunpack.c.h.b16 %v909
        %v940 = vunpack.c.l.b16 %v910
        %v941 = vunpack.c.h.b16 %v910
        %v942 = vpack.c.b16 %v928, %v926
        %v943 = vpack.c.b16 %v929, %v927
        %v944 = vpack.c.b16 %v932, %v930
        %v945 = vpack.c.b16 %v933, %v931
        %v946 = vpack.c.b16 %v936, %v934
        %v947 = vpack.c.b16 %v937, %v935
        %v948 = vpack.c.b16 %v940, %v938
        %v949 = vpack.c.b16 %v941, %v939
        %v959 = vsel %vm864, %v911, 0
        %961 = vmatpush.bf16.msra.mxu0 0
        %962 = vmatpush.bf16.msra.mxu0 0
        %963 = vmatpush.bf16.msra.mxu0 0
        %964 = vmatpush.bf16.msra.mxu0 0
        %965 = vmatpush.bf16.msra.mxu0 %v948
        %966 = vmatpush.bf16.msra.mxu0 %v946
        %967 = vmatpush.bf16.msra.mxu0 %v944
        %968 = vmatpush.bf16.msra.mxu0 %v942
        %969 = vmatmul.bf16.gmra.mxu0 %v959
        %v970 = vpop.f32.mrf.mxu0
        %v971 = vadd.f32 %v914, %v970
        %v972 = vpop.f32.mrf.mxu0
        %973 = vdwg.mxu0
        %974 = vmatpush.bf16.msra.mxu0 0
        %975 = vmatpush.bf16.msra.mxu0 0
        %976 = vmatpush.bf16.msra.mxu0 0
        %977 = vmatpush.bf16.msra.mxu0 0
        %978 = vmatpush.bf16.msra.mxu0 %v949
        %979 = vmatpush.bf16.msra.mxu0 %v947
        %980 = vmatpush.bf16.msra.mxu0 %v945
        %981 = vmatpush.bf16.msra.mxu0 %v943
        %982 = vmatmul.bf16.gmra.mxu0 %v959
        %v983 = vpop.f32.mrf.mxu0
        %v984 = vadd.f32 %v915, %v983
        %v985 = vpop.f32.mrf.mxu0
        %986 = vdwg.mxu0
        %v987 = vpack.c.bf16 %v971, %v971
        %989 = vrot.lane.b32.xlu0 %v987, 64
        %v990 = vpop.permute.xlu0 %989
        %vm991 = vcmask 261120
        %v993 = vsel %vm991, %v987, 0
        %v996 = vsel %vm991, %v990, 0
        %998 = vmatpush.bf16.xpose.msra.mxu0 0
        %999 = vmatpush.bf16.xpose.msra.mxu0 0
        %1000 = vmatpush.bf16.xpose.msra.mxu0 0
        %1001 = vmatpush.bf16.xpose.msra.mxu0 0
        %1002 = vmatpush.bf16.xpose.msra.mxu0 0
        %1003 = vmatpush.bf16.xpose.msra.mxu0 0
        %1004 = vmatpush.bf16.xpose.msra.mxu0 0
        %1005 = vmatpush.bf16.xpose.msra.mxu0 %v996
        %1006 = vmatmul.bf16.gmra.mxu0 %v993
        %v1007 = vpop.f32.mrf.mxu0
        %v1008 = vadd.f32 0.0, %v1007
        %v1009 = vpop.f32.mrf.mxu0
        %1010 = vdwg.mxu0
        %v1011 = vmul.f32 %v1008, 0.17677669
        %v1013 = vperm.slane %v902, 0
        %v1015 = vadd.f32 %v1011, %v1013
        %vm1016 = vcmask 64512
        %v1017 = vsel %vm1016, %v1015, -inf
        %1018 = vmax.xlane.f32.xlu0 %v1017
        %v1019 = vpop.xlane.xlu0 %1018
        %v1020 = vsub.f32 %v1015, %v1019
        %v1021 = vmul.f32 %v1020, 1.442695
        %v1022 = vpow.pop %v1021
        %v1023 = vsel %vm1016, %v1022, 0.0
        %1024 = vadd.xlane.f32.xlu0 %v1023
        %v1025 = vpop.xlane.xlu0 %1024
        %v1026 = vrcp.pop %v1025
        %v1027 = vmul.f32 %v1022, %v1026
        %v1028 = vpack.c.bf16 %v1027, %v1027
        %v1029 = vpack.c.bf16 %v984, %v984
        %v1031 = vsel %vm1016, %v1028, 0
        %vm1033 = vcmask 1043456
        %v1035 = vsel %vm1033, %v1029, 0
        %1037 = vmatpush.bf16.msra.mxu0 0
        %1038 = vmatpush.bf16.msra.mxu0 0
        %1039 = vmatpush.bf16.msra.mxu0 0
        %1040 = vmatpush.bf16.msra.mxu0 0
        %1041 = vmatpush.bf16.msra.mxu0 0
        %1042 = vmatpush.bf16.msra.mxu0 0
        %1043 = vmatpush.bf16.msra.mxu0 0
        %1044 = vmatpush.bf16.msra.mxu0 %v1035
        %1045 = vmatmul.bf16.gmra.mxu0 %v1031
        %v1046 = vpop.f32.mrf.mxu0
        %v1047 = vadd.f32 0.0, %v1046
        %v1048 = vpop.f32.mrf.mxu0
        %1049 = vdwg.mxu0
        %1050 = vrot.lane.b32.xlu0 %v987, 96
        %v1051 = vpop.permute.xlu0 %1050
        %1052 = vrot.lane.b32.xlu0 %v987, 32
        %v1053 = vpop.permute.xlu0 %1052
        %v1055 = vsel %vm991, %v1051, 0
        %v1058 = vsel %vm991, %v1053, 0
        %1060 = vmatpush.bf16.xpose.msra.mxu0 0
        %1061 = vmatpush.bf16.xpose.msra.mxu0 0
        %1062 = vmatpush.bf16.xpose.msra.mxu0 0
        %1063 = vmatpush.bf16.xpose.msra.mxu0 0
        %1064 = vmatpush.bf16.xpose.msra.mxu0 0
        %1065 = vmatpush.bf16.xpose.msra.mxu0 0
        %1066 = vmatpush.bf16.xpose.msra.mxu0 0
        %1067 = vmatpush.bf16.xpose.msra.mxu0 %v1058
        %1068 = vmatmul.bf16.gmra.mxu0 %v1055
        %v1069 = vpop.f32.mrf.mxu0
        %v1070 = vadd.f32 0.0, %v1069
        %v1071 = vpop.f32.mrf.mxu0
        %1072 = vdwg.mxu0
        %v1073 = vmul.f32 %v1070, 0.17677669
        %v1074 = vadd.f32 %v1073, %v1013
        %v1075 = vsel %vm1016, %v1074, -inf
        %1076 = vmax.xlane.f32.xlu0 %v1075
        %v1077 = vpop.xlane.xlu0 %1076
        %v1078 = vsub.f32 %v1074, %v1077
        %v1079 = vmul.f32 %v1078, 1.442695
        %v1080 = vpow.pop %v1079
        %v1081 = vsel %vm1016, %v1080, 0.0
        %1082 = vadd.xlane.f32.xlu0 %v1081
        %v1083 = vpop.xlane.xlu0 %1082
        %v1084 = vrcp.pop %v1083
        %v1085 = vmul.f32 %v1080, %v1084
        %v1086 = vpack.c.bf16 %v1085, %v1085
        %1088 = vrot.lane.b32.xlu0 %v1029, 96
        %v1089 = vpop.permute.xlu0 %1088
        %v1091 = vsel %vm1016, %v1086, 0
        %v1094 = vsel %vm1033, %v1089, 0
        %1096 = vmatpush.bf16.msra.mxu0 0
        %1097 = vmatpush.bf16.msra.mxu0 0
        %1098 = vmatpush.bf16.msra.mxu0 0
        %1099 = vmatpush.bf16.msra.mxu0 0
        %1100 = vmatpush.bf16.msra.mxu0 0
        %1101 = vmatpush.bf16.msra.mxu0 0
        %1102 = vmatpush.bf16.msra.mxu0 0
        %1103 = vmatpush.bf16.msra.mxu0 %v1094
        %1104 = vmatmul.bf16.gmra.mxu0 %v1091
        %v1105 = vpop.f32.mrf.mxu0
        %v1106 = vadd.f32 0.0, %v1105
        %v1107 = vpop.f32.mrf.mxu0
        %1108 = vdwg.mxu0
        %1110 = vrot.lane.b32.xlu0 %v1106, 32
        %v1111 = vpop.permute.xlu0 %1110
        %v1113 = vsel %vm991, %v1047, %v1111
        %v1114 = vld [vmem:[%s6] sm:$0xf]
        %v1115 = vld [vmem:[%s6 + $0x4] sm:$0xf]
        %v1116 = vld [vmem:[%s6 + $0x8] sm:$0xf]
        %v1117 = vld [vmem:[%s6 + $0xc] sm:$0xf]
        %v1118 = vld [vmem:[%s6 + $0x10] sm:$0xf]
        %v1119 = vld [vmem:[%s6 + $0x14] sm:$0xf]
        %v1120 = vld [vmem:[%s6 + $0x18] sm:$0xf]
        %v1121 = vld [vmem:[%s6 + $0x1c] sm:$0xf]
        %v1122 = vpack.c.bf16 %v1113, %v1113
        %v1123 = vld [vmem:[%s7] sm:$0x1]
        %v1125 = vperm.slane %v1123, 0
        %v1135 = vunpack.c.l.b16 %v1114
        %v1136 = vunpack.c.l.b16 %v1115
        %v1137 = vunpack.c.l.b16 %v1116
        %v1138 = vunpack.c.l.b16 %v1117
        %v1139 = vunpack.c.l.b16 %v1118
        %v1140 = vunpack.c.l.b16 %v1119
        %v1141 = vunpack.c.l.b16 %v1120
        %v1142 = vunpack.c.l.b16 %v1121
        %v1143 = vpack.c.b16 %v1136, %v1135
        %v1144 = vpack.c.b16 %v1138, %v1137
        %v1145 = vpack.c.b16 %v1140, %v1139
        %v1146 = vpack.c.b16 %v1142, %v1141
        %v1152 = vsel %vm864, %v1122, 0
        %1154 = vmatpush.bf16.msra.mxu0 0
        %1155 = vmatpush.bf16.msra.mxu0 0
        %1156 = vmatpush.bf16.msra.mxu0 0
        %1157 = vmatpush.bf16.msra.mxu0 0
        %1158 = vmatpush.bf16.msra.mxu0 %v1146
        %1159 = vmatpush.bf16.msra.mxu0 %v1145
        %1160 = vmatpush.bf16.msra.mxu0 %v1144
        %1161 = vmatpush.bf16.msra.mxu0 %v1143
        %1162 = vmatmul.bf16.gmra.mxu0 %v1152
        %v1163 = vpop.f32.mrf.mxu0
        %v1164 = vadd.f32 %v1125, %v1163
        %v1165 = vpop.f32.mrf.mxu0
        %1166 = vdwg.mxu0
        %v1167 = vadd.f32 %v901, %v1164
        %v1168 = vld [vmem:[#allocation10] sm:$0x1]
        %v1169 = vld [vmem:[%s9] sm:$0x1]
        %v1170 = vsel %vm864, %v1167, 0.0
        %1171 = vadd.xlane.f32.xlu0 %v1170
        %v1172 = vpop.xlane.xlu0 %1171
        %v1173 = vmul.f32 %v1172, %v874
        %v1174 = vsub.f32 %v1167, %v1173
        %v1175 = vmul.f32 %v1174, %v1174
        %v1176 = vsel %vm864, %v1175, 0.0
        %1177 = vadd.xlane.f32.xlu0 %v1176
        %v1178 = vpop.xlane.xlu0 %1177
        %v1179 = vmul.f32 %v1178, %v874
        %v1180 = vadd.f32 %v1179, 1e-12
        %v1181 = vrsqrt.pop %v1180
        %v1182 = vmul.f32 %v1181, %v1180
        %v1183 = vmul.f32 %v1182, %v1181
        %v1184 = vmul.f32 0.5, %v1183
        %v1185 = vsub.f32 1.5, %v1184
        %v1186 = vmul.f32 %v1181, %v1185
        %vm1187 = vweird.f32 %v1180
        %vm1188 = vweird.f32 %v1181
        %vm1189 = vmor %vm1187, %vm1188
        %v1190 = vsel %vm1189, %v1181, %v1186
        %v1191 = vmul.f32 %v1174, %v1190
        %v1193 = vperm.slane %v1168, 0
        %v1195 = vmul.f32 %v1191, %v1193
        %v1197 = vperm.slane %v1169, 0
        %v1199 = vadd.f32 %v1195, %v1197
        %v1200 = vld [vmem:[#allocation11] sm:$0xf]
        %v1201 = vld [vmem:[#allocation11 + $0x4] sm:$0xf]
        %v1202 = vld [vmem:[#allocation11 + $0x8] sm:$0xf]
        %v1203 = vld [vmem:[#allocation11 + $0xc] sm:$0xf]
        %v1204 = vld [vmem:[#allocation11 + $0x10] sm:$0xf]
        %v1205 = vld [vmem:[#allocation11 + $0x14] sm:$0xf]
        %v1206 = vld [vmem:[#allocation11 + $0x18] sm:$0xf]
        %v1207 = vld [vmem:[#allocation11 + $0x1c] sm:$0xf]
        %v1208 = vpack.c.bf16 %v1199, %v1199
        %v1209 = vld [vmem:[%s11] sm:$0x1]
        %v1211 = vperm.slane %v1209, 0
        %v1221 = vunpack.c.l.b16 %v1200
        %v1222 = vunpack.c.l.b16 %v1201
        %v1223 = vunpack.c.l.b16 %v1202
        %v1224 = vunpack.c.l.b16 %v1203
        %v1225 = vunpack.c.l.b16 %v1204
        %v1226 = vunpack.c.l.b16 %v1205
        %v1227 = vunpack.c.l.b16 %v1206
        %v1228 = vunpack.c.l.b16 %v1207
        %v1229 = vpack.c.b16 %v1222, %v1221
        %v1230 = vpack.c.b16 %v1224, %v1223
        %v1231 = vpack.c.b16 %v1226, %v1225
        %v1232 = vpack.c.b16 %v1228, %v1227
        %v1238 = vsel %vm864, %v1208, 0
        %1240 = vmatpush.bf16.msra.mxu0 0
        %1241 = vmatpush.bf16.msra.mxu0 0
        %1242 = vmatpush.bf16.msra.mxu0 0
        %1243 = vmatpush.bf16.msra.mxu0 0
        %1244 = vmatpush.bf16.msra.mxu0 %v1232
        %1245 = vmatpush.bf16.msra.mxu0 %v1231
        %1246 = vmatpush.bf16.msra.mxu0 %v1230
        %1247 = vmatpush.bf16.msra.mxu0 %v1229
        %1248 = vmatmul.bf16.gmra.mxu0 %v1238
        %v1249 = vpop.f32.mrf.mxu0
        %v1250 = vadd.f32 %v1211, %v1249
        %v1251 = vpop.f32.mrf.mxu0
        %1252 = vdwg.mxu0
        %v1253 = vmul.f32 %v1250, %v1250
        %v1254 = vmul.f32 %v1250, %v1253
        %v1255 = vmul.f32 %v1254, 0.044715
        %v1256 = vadd.f32 %v1250, %v1255
        %v1257 = vmul.f32 %v1256, 0.7978846
        %v1258 = vtanh.pop %v1257
        %v1259 = vadd.f32 %v1258, 1.0
        %v1260 = vmul.f32 %v1259, 0.5
        %v1261 = vmul.f32 %v1250, %v1260
        %v1262 = vld [vmem:[%s12] sm:$0xf]
        %v1263 = vld [vmem:[%s12 + $0x4] sm:$0xf]
        %v1264 = vld [vmem:[%s12 + $0x8] sm:$0xf]
        %v1265 = vld [vmem:[%s12 + $0xc] sm:$0xf]
        %v1266 = vld [vmem:[%s12 + $0x10] sm:$0xf]
        %v1267 = vld [vmem:[%s12 + $0x14] sm:$0xf]
        %v1268 = vld [vmem:[%s12 + $0x18] sm:$0xf]
        %v1269 = vld [vmem:[%s12 + $0x1c] sm:$0xf]
        %v1270 = vld [vmem:[%s12 + $0x20] sm:$0xf]
        %v1271 = vld [vmem:[%s12 + $0x24] sm:$0xf]
        %v1272 = vld [vmem:[%s12 + $0x28] sm:$0xf]
        %v1273 = vld [vmem:[%s12 + $0x2c] sm:$0xf]
        %v1274 = vld [vmem:[%s12 + $0x30] sm:$0xf]
        %v1275 = vld [vmem:[%s12 + $0x34] sm:$0xf]
        %v1276 = vld [vmem:[%s12 + $0x38] sm:$0xf]
        %v1277 = vld [vmem:[%s12 + $0x3c] sm:$0xf]
        %v1278 = vpack.c.bf16 %v1261, %v1261
        %v1279 = vld [vmem:[%s13] sm:$0x1]
        %v1281 = vperm.slane %v1279, 0
        %v1299 = vunpack.c.l.b16 %v1262
        %v1300 = vunpack.c.l.b16 %v1263
        %v1301 = vunpack.c.l.b16 %v1264
        %v1302 = vunpack.c.l.b16 %v1265
        %v1303 = vunpack.c.l.b16 %v1266
        %v1304 = vunpack.c.l.b16 %v1267
        %v1305 = vunpack.c.l.b16 %v1268
        %v1306 = vunpack.c.l.b16 %v1269
        %v1307 = vunpack.c.l.b16 %v1270
        %v1308 = vunpack.c.l.b16 %v1271
        %v1309 = vunpack.c.l.b16 %v1272
        %v1310 = vunpack.c.l.b16 %v1273
        %v1311 = vunpack.c.l.b16 %v1274
        %v1312 = vunpack.c.l.b16 %v1275
        %v1313 = vunpack.c.l.b16 %v1276
        %v1314 = vunpack.c.l.b16 %v1277
        %v1315 = vpack.c.b16 %v1300, %v1299
        %v1316 = vpack.c.b16 %v1302, %v1301
        %v1317 = vpack.c.b16 %v1304, %v1303
        %v1318 = vpack.c.b16 %v1306, %v1305
        %v1319 = vpack.c.b16 %v1308, %v1307
        %v1320 = vpack.c.b16 %v1310, %v1309
        %v1321 = vpack.c.b16 %v1312, %v1311
        %v1322 = vpack.c.b16 %v1314, %v1313
        %1331 = vmatpush.bf16.msra.mxu0 %v1322
        %1332 = vmatpush.bf16.msra.mxu0 %v1321
        %1333 = vmatpush.bf16.msra.mxu0 %v1320
        %1334 = vmatpush.bf16.msra.mxu0 %v1319
        %1335 = vmatpush.bf16.msra.mxu0 %v1318
        %1336 = vmatpush.bf16.msra.mxu0 %v1317
        %1337 = vmatpush.bf16.msra.mxu0 %v1316
        %1338 = vmatpush.bf16.msra.mxu0 %v1315
        %1339 = vmatmul.bf16.gmra.mxu0 %v1278
        %v1340 = vpop.f32.mrf.mxu0
        %v1341 = vadd.f32 %v1281, %v1340
        %v1342 = vpop.f32.mrf.mxu0
        %1343 = vdwg.mxu0
        %v1344 = vadd.f32 %v1199, %v1341
        %v1345 = vld [vmem:[#allocation13] sm:$0x1]
        %v1346 = vld [vmem:[%s15] sm:$0x1]
        %v1347 = vsel %vm864, %v1344, 0.0
        %1348 = vadd.xlane.f32.xlu0 %v1347
        %v1349 = vpop.xlane.xlu0 %1348
        %v1350 = vmul.f32 %v1349, %v874
        %v1351 = vsub.f32 %v1344, %v1350
        %v1352 = vmul.f32 %v1351, %v1351
        %v1353 = vsel %vm864, %v1352, 0.0
        %1354 = vadd.xlane.f32.xlu0 %v1353
        %v1355 = vpop.xlane.xlu0 %1354
        %v1356 = vmul.f32 %v1355, %v874
        %v1357 = vadd.f32 %v1356, 1e-12
        %v1358 = vrsqrt.pop %v1357
        %v1359 = vmul.f32 %v1358, %v1357
        %v1360 = vmul.f32 %v1359, %v1358
        %v1361 = vmul.f32 0.5, %v1360
        %v1362 = vsub.f32 1.5, %v1361
        %v1363 = vmul.f32 %v1358, %v1362
        %vm1364 = vweird.f32 %v1357
        %vm1365 = vweird.f32 %v1358
        %vm1366 = vmor %vm1364, %vm1365
        %v1367 = vsel %vm1366, %v1358, %v1363
        %v1368 = vmul.f32 %v1351, %v1367
        %v1370 = vperm.slane %v1345, 0
        %v1372 = vmul.f32 %v1368, %v1370
        %v1374 = vperm.slane %v1346, 0
        %v1376 = vadd.f32 %v1372, %v1374
        %s1377 = scalar_lea.vmem %s4, 64
        %v1378 = vld [vmem:[%s1377] sm:$0xff]
        %v1379 = vld [vmem:[%s1377 + $0x8] sm:$0xff]
        %v1380 = vld [vmem:[%s1377 + $0x10] sm:$0xff]
        %v1381 = vld [vmem:[%s1377 + $0x18] sm:$0xff]
        %v1382 = vld [vmem:[%s1377 + $0x20] sm:$0xff]
        %v1383 = vld [vmem:[%s1377 + $0x28] sm:$0xff]
        %v1384 = vld [vmem:[%s1377 + $0x30] sm:$0xff]
        %v1385 = vld [vmem:[%s1377 + $0x38] sm:$0xff]
        %v1386 = vpack.c.bf16 %v1376, %v1376
        %s1387 = scalar_lea.vmem [#allocation8], 2
        %v1388 = vld [vmem:[%s1387] sm:$0x3]
        %v1390 = vperm.slane %v1388, 0
        %v1391 = vperm.slane %v1388, 1
        %v1402 = vunpack.c.l.b16 %v1378
        %v1403 = vunpack.c.h.b16 %v1378
        %v1404 = vunpack.c.l.b16 %v1379
        %v1405 = vunpack.c.h.b16 %v1379
        %v1406 = vunpack.c.l.b16 %v1380
        %v1407 = vunpack.c.h.b16 %v1380
        %v1408 = vunpack.c.l.b16 %v1381
        %v1409 = vunpack.c.h.b16 %v1381
        %v1410 = vunpack.c.l.b16 %v1382
        %v1411 = vunpack.c.h.b16 %v1382
        %v1412 = vunpack.c.l.b16 %v1383
        %v1413 = vunpack.c.h.b16 %v1383
        %v1414 = vunpack.c.l.b16 %v1384
        %v1415 = vunpack.c.h.b16 %v1384
        %v1416 = vunpack.c.l.b16 %v1385
        %v1417 = vunpack.c.h.b16 %v1385
        %v1418 = vpack.c.b16 %v1404, %v1402
        %v1419 = vpack.c.b16 %v1405, %v1403
        %v1420 = vpack.c.b16 %v1408, %v1406
        %v1421 = vpack.c.b16 %v1409, %v1407
        %v1422 = vpack.c.b16 %v1412, %v1410
        %v1423 = vpack.c.b16 %v1413, %v1411
        %v1424 = vpack.c.b16 %v1416, %v1414
        %v1425 = vpack.c.b16 %v1417, %v1415
        %v1435 = vsel %vm864, %v1386, 0
        %1437 = vmatpush.bf16.msra.mxu0 0
        %1438 = vmatpush.bf16.msra.mxu0 0
        %1439 = vmatpush.bf16.msra.mxu0 0
        %1440 = vmatpush.bf16.msra.mxu0 0
        %1441 = vmatpush.bf16.msra.mxu0 %v1424
        %1442 = vmatpush.bf16.msra.mxu0 %v1422
        %1443 = vmatpush.bf16.msra.mxu0 %v1420
        %1444 = vmatpush.bf16.msra.mxu0 %v1418
        %1445 = vmatmul.bf16.gmra.mxu0 %v1435
        %v1446 = vpop.f32.mrf.mxu0
        %v1447 = vadd.f32 %v1390, %v1446
        %v1448 = vpop.f32.mrf.mxu0
        %1449 = vdwg.mxu0
        %1450 = vmatpush.bf16.msra.mxu0 0
        %1451 = vmatpush.bf16.msra.mxu0 0
        %1452 = vmatpush.bf16.msra.mxu0 0
        %1453 = vmatpush.bf16.msra.mxu0 0
        %1454 = vmatpush.bf16.msra.mxu0 %v1425
        %1455 = vmatpush.bf16.msra.mxu0 %v1423
        %1456 = vmatpush.bf16.msra.mxu0 %v1421
        %1457 = vmatpush.bf16.msra.mxu0 %v1419
        %1458 = vmatmul.bf16.gmra.mxu0 %v1435
        %v1459 = vpop.f32.mrf.mxu0
        %v1460 = vadd.f32 %v1391, %v1459
        %v1461 = vpop.f32.mrf.mxu0
        %1462 = vdwg.mxu0
        %v1463 = vpack.c.bf16 %v1447, %v1447
        %1465 = vrot.lane.b32.xlu0 %v1463, 64
        %v1466 = vpop.permute.xlu0 %1465
        %v1468 = vsel %vm991, %v1463, 0
        %v1471 = vsel %vm991, %v1466, 0
        %1473 = vmatpush.bf16.xpose.msra.mxu0 0
        %1474 = vmatpush.bf16.xpose.msra.mxu0 0
        %1475 = vmatpush.bf16.xpose.msra.mxu0 0
        %1476 = vmatpush.bf16.xpose.msra.mxu0 0
        %1477 = vmatpush.bf16.xpose.msra.mxu0 0
        %1478 = vmatpush.bf16.xpose.msra.mxu0 0
        %1479 = vmatpush.bf16.xpose.msra.mxu0 0
        %1480 = vmatpush.bf16.xpose.msra.mxu0 %v1471
        %1481 = vmatmul.bf16.gmra.mxu0 %v1468
        %v1482 = vpop.f32.mrf.mxu0
        %v1483 = vadd.f32 0.0, %v1482
        %v1484 = vpop.f32.mrf.mxu0
        %1485 = vdwg.mxu0
        %v1486 = vmul.f32 %v1483, 0.17677669
        %v1487 = vadd.f32 %v1486, %v1013
        %v1488 = vsel %vm1016, %v1487, -inf
        %1489 = vmax.xlane.f32.xlu0 %v1488
        %v1490 = vpop.xlane.xlu0 %1489
        %v1491 = vsub.f32 %v1487, %v1490
        %v1492 = vmul.f32 %v1491, 1.442695
        %v1493 = vpow.pop %v1492
        %v1494 = vsel %vm1016, %v1493, 0.0
        %1495 = vadd.xlane.f32.xlu0 %v1494
        %v1496 = vpop.xlane.xlu0 %1495
        %v1497 = vrcp.pop %v1496
        %v1498 = vmul.f32 %v1493, %v1497
        %v1499 = vpack.c.bf16 %v1498, %v1498
        %v1500 = vpack.c.bf16 %v1460, %v1460
        %v1502 = vsel %vm1016, %v1499, 0
        %v1505 = vsel %vm1033, %v1500, 0
        %1507 = vmatpush.bf16.msra.mxu0 0
        %1508 = vmatpush.bf16.msra.mxu0 0
        %1509 = vmatpush.bf16.msra.mxu0 0
        %1510 = vmatpush.bf16.msra.mxu0 0
        %1511 = vmatpush.bf16.msra.mxu0 0
        %1512 = vmatpush.bf16.msra.mxu0 0
        %1513 = vmatpush.bf16.msra.mxu0 0
        %1514 = vmatpush.bf16.msra.mxu0 %v1505
        %1515 = vmatmul.bf16.gmra.mxu0 %v1502
        %v1516 = vpop.f32.mrf.mxu0
        %v1517 = vadd.f32 0.0, %v1516
        %v1518 = vpop.f32.mrf.mxu0
        %1519 = vdwg.mxu0
        %1520 = vrot.lane.b32.xlu0 %v1463, 96
        %v1521 = vpop.permute.xlu0 %1520
        %1522 = vrot.lane.b32.xlu0 %v1463, 32
        %v1523 = vpop.permute.xlu0 %1522
        %v1525 = vsel %vm991, %v1521, 0
        %v1528 = vsel %vm991, %v1523, 0
        %1530 = vmatpush.bf16.xpose.msra.mxu0 0
        %1531 = vmatpush.bf16.xpose.msra.mxu0 0
        %1532 = vmatpush.bf16.xpose.msra.mxu0 0
        %1533 = vmatpush.bf16.xpose.msra.mxu0 0
        %1534 = vmatpush.bf16.xpose.msra.mxu0 0
        %1535 = vmatpush.bf16.xpose.msra.mxu0 0
        %1536 = vmatpush.bf16.xpose.msra.mxu0 0
        %1537 = vmatpush.bf16.xpose.msra.mxu0 %v1528
        %1538 = vmatmul.bf16.gmra.mxu0 %v1525
        %v1539 = vpop.f32.mrf.mxu0
        %v1540 = vadd.f32 0.0, %v1539
        %v1541 = vpop.f32.mrf.mxu0
        %1542 = vdwg.mxu0
        %v1543 = vmul.f32 %v1540, 0.17677669
        %v1544 = vadd.f32 %v1543, %v1013
        %v1545 = vsel %vm1016, %v1544, -inf
        %1546 = vmax.xlane.f32.xlu0 %v1545
        %v1547 = vpop.xlane.xlu0 %1546
        %v1548 = vsub.f32 %v1544, %v1547
        %v1549 = vmul.f32 %v1548, 1.442695
        %v1550 = vpow.pop %v1549
        %v1551 = vsel %vm1016, %v1550, 0.0
        %1552 = vadd.xlane.f32.xlu0 %v1551
        %v1553 = vpop.xlane.xlu0 %1552
        %v1554 = vrcp.pop %v1553
        %v1555 = vmul.f32 %v1550, %v1554
        %v1556 = vpack.c.bf16 %v1555, %v1555
        %1558 = vrot.lane.b32.xlu0 %v1500, 96
        %v1559 = vpop.permute.xlu0 %1558
        %v1561 = vsel %vm1016, %v1556, 0
        %v1564 = vsel %vm1033, %v1559, 0
        %1566 = vmatpush.bf16.msra.mxu0 0
        %1567 = vmatpush.bf16.msra.mxu0 0
        %1568 = vmatpush.bf16.msra.mxu0 0
        %1569 = vmatpush.bf16.msra.mxu0 0
        %1570 = vmatpush.bf16.msra.mxu0 0
        %1571 = vmatpush.bf16.msra.mxu0 0
        %1572 = vmatpush.bf16.msra.mxu0 0
        %1573 = vmatpush.bf16.msra.mxu0 %v1564
        %1574 = vmatmul.bf16.gmra.mxu0 %v1561
        %v1575 = vpop.f32.mrf.mxu0
        %v1576 = vadd.f32 0.0, %v1575
        %v1577 = vpop.f32.mrf.mxu0
        %1578 = vdwg.mxu0
        %1580 = vrot.lane.b32.xlu0 %v1576, 32
        %v1581 = vpop.permute.xlu0 %1580
        %v1583 = vsel %vm991, %v1517, %v1581
        %s1584 = scalar_lea.vmem %s6, 32
        %v1585 = vld [vmem:[%s1584] sm:$0xf]
        %v1586 = vld [vmem:[%s1584 + $0x4] sm:$0xf]
        %v1587 = vld [vmem:[%s1584 + $0x8] sm:$0xf]
        %v1588 = vld [vmem:[%s1584 + $0xc] sm:$0xf]
        %v1589 = vld [vmem:[%s1584 + $0x10] sm:$0xf]
        %v1590 = vld [vmem:[%s1584 + $0x14] sm:$0xf]
        %v1591 = vld [vmem:[%s1584 + $0x18] sm:$0xf]
        %v1592 = vld [vmem:[%s1584 + $0x1c] sm:$0xf]
        %v1593 = vpack.c.bf16 %v1583, %v1583
        %s1594 = scalar_lea.vmem %s7, 1
        %v1595 = vld [vmem:[%s1594] sm:$0x1]
        %v1597 = vperm.slane %v1595, 0
        %v1607 = vunpack.c.l.b16 %v1585
        %v1608 = vunpack.c.l.b16 %v1586
        %v1609 = vunpack.c.l.b16 %v1587
        %v1610 = vunpack.c.l.b16 %v1588
        %v1611 = vunpack.c.l.b16 %v1589
        %v1612 = vunpack.c.l.b16 %v1590
        %v1613 = vunpack.c.l.b16 %v1591
        %v1614 = vunpack.c.l.b16 %v1592
        %v1615 = vpack.c.b16 %v1608, %v1607
        %v1616 = vpack.c.b16 %v1610, %v1609
        %v1617 = vpack.c.b16 %v1612, %v1611
        %v1618 = vpack.c.b16 %v1614, %v1613
        %v1624 = vsel %vm864, %v1593, 0
        %1626 = vmatpush.bf16.msra.mxu0 0
        %1627 = vmatpush.bf16.msra.mxu0 0
        %1628 = vmatpush.bf16.msra.mxu0 0
        %1629 = vmatpush.bf16.msra.mxu0 0
        %1630 = vmatpush.bf16.msra.mxu0 %v1618
        %1631 = vmatpush.bf16.msra.mxu0 %v1617
        %1632 = vmatpush.bf16.msra.mxu0 %v1616
        %1633 = vmatpush.bf16.msra.mxu0 %v1615
        %1634 = vmatmul.bf16.gmra.mxu0 %v1624
        %v1635 = vpop.f32.mrf.mxu0
        %v1636 = vadd.f32 %v1597, %v1635
        %v1637 = vpop.f32.mrf.mxu0
        %1638 = vdwg.mxu0
        %v1639 = vadd.f32 %v1376, %v1636
        %s1640 = scalar_lea.vmem [#allocation10], 1
        %v1641 = vld [vmem:[%s1640] sm:$0x1]
        %s1642 = scalar_lea.vmem %s9, 1
        %v1643 = vld [vmem:[%s1642] sm:$0x1]
        %v1644 = vsel %vm864, %v1639, 0.0
        %1645 = vadd.xlane.f32.xlu0 %v1644
        %v1646 = vpop.xlane.xlu0 %1645
        %v1647 = vmul.f32 %v1646, %v874
        %v1648 = vsub.f32 %v1639, %v1647
        %v1649 = vmul.f32 %v1648, %v1648
        %v1650 = vsel %vm864, %v1649, 0.0
        %1651 = vadd.xlane.f32.xlu0 %v1650
        %v1652 = vpop.xlane.xlu0 %1651
        %v1653 = vmul.f32 %v1652, %v874
        %v1654 = vadd.f32 %v1653, 1e-12
        %v1655 = vrsqrt.pop %v1654
        %v1656 = vmul.f32 %v1655, %v1654
        %v1657 = vmul.f32 %v1656, %v1655
        %v1658 = vmul.f32 0.5, %v1657
        %v1659 = vsub.f32 1.5, %v1658
        %v1660 = vmul.f32 %v1655, %v1659
        %vm1661 = vweird.f32 %v1654
        %vm1662 = vweird.f32 %v1655
        %vm1663 = vmor %vm1661, %vm1662
        %v1664 = vsel %vm1663, %v1655, %v1660
        %v1665 = vmul.f32 %v1648, %v1664
        %v1667 = vperm.slane %v1641, 0
        %v1669 = vmul.f32 %v1665, %v1667
        %v1671 = vperm.slane %v1643, 0
        %v1673 = vadd.f32 %v1669, %v1671
        %s1674 = scalar_lea.vmem [#allocation11], 32
        %v1675 = vld [vmem:[%s1674] sm:$0xf]
        %v1676 = vld [vmem:[%s1674 + $0x4] sm:$0xf]
        %v1677 = vld [vmem:[%s1674 + $0x8] sm:$0xf]
        %v1678 = vld [vmem:[%s1674 + $0xc] sm:$0xf]
        %v1679 = vld [vmem:[%s1674 + $0x10] sm:$0xf]
        %v1680 = vld [vmem:[%s1674 + $0x14] sm:$0xf]
        %v1681 = vld [vmem:[%s1674 + $0x18] sm:$0xf]
        %v1682 = vld [vmem:[%s1674 + $0x1c] sm:$0xf]
        %v1683 = vpack.c.bf16 %v1673, %v1673
        %s1684 = scalar_lea.vmem %s11, 1
        %v1685 = vld [vmem:[%s1684] sm:$0x1]
        %v1687 = vperm.slane %v1685, 0
        %v1697 = vunpack.c.l.b16 %v1675
        %v1698 = vunpack.c.l.b16 %v1676
        %v1699 = vunpack.c.l.b16 %v1677
        %v1700 = vunpack.c.l.b16 %v1678
        %v1701 = vunpack.c.l.b16 %v1679
        %v1702 = vunpack.c.l.b16 %v1680
        %v1703 = vunpack.c.l.b16 %v1681
        %v1704 = vunpack.c.l.b16 %v1682
        %v1705 = vpack.c.b16 %v1698, %v1697
        %v1706 = vpack.c.b16 %v1700, %v1699
        %v1707 = vpack.c.b16 %v1702, %v1701
        %v1708 = vpack.c.b16 %v1704, %v1703
        %v1714 = vsel %vm864, %v1683, 0
        %1716 = vmatpush.bf16.msra.mxu0 0
        %1717 = vmatpush.bf16.msra.mxu0 0
        %1718 = vmatpush.bf16.msra.mxu0 0
        %1719 = vmatpush.bf16.msra.mxu0 0
        %1720 = vmatpush.bf16.msra.mxu0 %v1708
        %1721 = vmatpush.bf16.msra.mxu0 %v1707
        %1722 = vmatpush.bf16.msra.mxu0 %v1706
        %1723 = vmatpush.bf16.msra.mxu0 %v1705
        %1724 = vmatmul.bf16.gmra.mxu0 %v1714
        %v1725 = vpop.f32.mrf.mxu0
        %v1726 = vadd.f32 %v1687, %v1725
        %v1727 = vpop.f32.mrf.mxu0
        %1728 = vdwg.mxu0
        %v1729 = vmul.f32 %v1726, %v1726
        %v1730 = vmul.f32 %v1726, %v1729
        %v1731 = vmul.f32 %v1730, 0.044715
        %v1732 = vadd.f32 %v1726, %v1731
        %v1733 = vmul.f32 %v1732, 0.7978846
        %v1734 = vtanh.pop %v1733
        %v1735 = vadd.f32 %v1734, 1.0
        %v1736 = vmul.f32 %v1735, 0.5
        %v1737 = vmul.f32 %v1726, %v1736
        %s1738 = scalar_lea.vmem %s12, 64
        %v1739 = vld [vmem:[%s1738] sm:$0xf]
        %v1740 = vld [vmem:[%s1738 + $0x4] sm:$0xf]
        %v1741 = vld [vmem:[%s1738 + $0x8] sm:$0xf]
        %v1742 = vld [vmem:[%s1738 + $0xc] sm:$0xf]
        %v1743 = vld [vmem:[%s1738 + $0x10] sm:$0xf]
        %v1744 = vld [vmem:[%s1738 + $0x14] sm:$0xf]
        %v1745 = vld [vmem:[%s1738 + $0x18] sm:$0xf]
        %v1746 = vld [vmem:[%s1738 + $0x1c] sm:$0xf]
        %v1747 = vld [vmem:[%s1738 + $0x20] sm:$0xf]
        %v1748 = vld [vmem:[%s1738 + $0x24] sm:$0xf]
        %v1749 = vld [vmem:[%s1738 + $0x28] sm:$0xf]
        %v1750 = vld [vmem:[%s1738 + $0x2c] sm:$0xf]
        %v1751 = vld [vmem:[%s1738 + $0x30] sm:$0xf]
        %v1752 = vld [vmem:[%s1738 + $0x34] sm:$0xf]
        %v1753 = vld [vmem:[%s1738 + $0x38] sm:$0xf]
        %v1754 = vld [vmem:[%s1738 + $0x3c] sm:$0xf]
        %v1755 = vpack.c.bf16 %v1737, %v1737
        %s1756 = scalar_lea.vmem %s13, 1
        %v1757 = vld [vmem:[%s1756] sm:$0x1]
        %v1759 = vperm.slane %v1757, 0
        %v1777 = vunpack.c.l.b16 %v1739
        %v1778 = vunpack.c.l.b16 %v1740
        %v1779 = vunpack.c.l.b16 %v1741
        %v1780 = vunpack.c.l.b16 %v1742
        %v1781 = vunpack.c.l.b16 %v1743
        %v1782 = vunpack.c.l.b16 %v1744
        %v1783 = vunpack.c.l.b16 %v1745
        %v1784 = vunpack.c.l.b16 %v1746
        %v1785 = vunpack.c.l.b16 %v1747
        %v1786 = vunpack.c.l.b16 %v1748
        %v1787 = vunpack.c.l.b16 %v1749
        %v1788 = vunpack.c.l.b16 %v1750
        %v1789 = vunpack.c.l.b16 %v1751
        %v1790 = vunpack.c.l.b16 %v1752
        %v1791 = vunpack.c.l.b16 %v1753
        %v1792 = vunpack.c.l.b16 %v1754
        %v1793 = vpack.c.b16 %v1778, %v1777
        %v1794 = vpack.c.b16 %v1780, %v1779
        %v1795 = vpack.c.b16 %v1782, %v1781
        %v1796 = vpack.c.b16 %v1784, %v1783
        %v1797 = vpack.c.b16 %v1786, %v1785
        %v1798 = vpack.c.b16 %v1788, %v1787
        %v1799 = vpack.c.b16 %v1790, %v1789
        %v1800 = vpack.c.b16 %v1792, %v1791
        %1809 = vmatpush.bf16.msra.mxu0 %v1800
        %1810 = vmatpush.bf16.msra.mxu0 %v1799
        %1811 = vmatpush.bf16.msra.mxu0 %v1798
        %1812 = vmatpush.bf16.msra.mxu0 %v1797
        %1813 = vmatpush.bf16.msra.mxu0 %v1796
        %1814 = vmatpush.bf16.msra.mxu0 %v1795
        %1815 = vmatpush.bf16.msra.mxu0 %v1794
        %1816 = vmatpush.bf16.msra.mxu0 %v1793
        %1817 = vmatmul.bf16.gmra.mxu0 %v1755
        %v1818 = vpop.f32.mrf.mxu0
        %v1819 = vadd.f32 %v1759, %v1818
        %v1820 = vpop.f32.mrf.mxu0
        %1821 = vdwg.mxu0
        %v1822 = vadd.f32 %v1673, %v1819
        %s1823 = scalar_lea.vmem [#allocation13], 1
        %v1824 = vld [vmem:[%s1823] sm:$0x1]
        %s1825 = scalar_lea.vmem %s15, 1
        %v1826 = vld [vmem:[%s1825] sm:$0x1]
        %v1827 = vsel %vm864, %v1822, 0.0
        %1828 = vadd.xlane.f32.xlu0 %v1827
        %v1829 = vpop.xlane.xlu0 %1828
        %v1830 = vmul.f32 %v1829, %v874
        %v1831 = vsub.f32 %v1822, %v1830
        %v1832 = vmul.f32 %v1831, %v1831
        %v1833 = vsel %vm864, %v1832, 0.0
        %1834 = vadd.xlane.f32.xlu0 %v1833
        %v1835 = vpop.xlane.xlu0 %1834
        %v1836 = vmul.f32 %v1835, %v874
        %v1837 = vadd.f32 %v1836, 1e-12
        %v1838 = vrsqrt.pop %v1837
        %v1839 = vmul.f32 %v1838, %v1837
        %v1840 = vmul.f32 %v1839, %v1838
        %v1841 = vmul.f32 0.5, %v1840
        %v1842 = vsub.f32 1.5, %v1841
        %v1843 = vmul.f32 %v1838, %v1842
        %vm1844 = vweird.f32 %v1837
        %vm1845 = vweird.f32 %v1838
        %vm1846 = vmor %vm1844, %vm1845
        %v1847 = vsel %vm1846, %v1838, %v1843
        %v1848 = vmul.f32 %v1831, %v1847
        %v1850 = vperm.slane %v1824, 0
        %v1852 = vmul.f32 %v1848, %v1850
        %v1854 = vperm.slane %v1826, 0
        %v1856 = vadd.f32 %v1852, %v1854
        %v1857 = vld [vmem:[#allocation14] sm:$0xff]
        %v1858 = vld [vmem:[#allocation14 + $0x8] sm:$0xff]
        %v1859 = vld [vmem:[#allocation14 + $0x10] sm:$0xff]
        %v1860 = vld [vmem:[#allocation14 + $0x18] sm:$0xff]
        %v1861 = vld [vmem:[#allocation14 + $0x20] sm:$0xff]
        %v1862 = vld [vmem:[#allocation14 + $0x28] sm:$0xff]
        %v1863 = vld [vmem:[#allocation14 + $0x30] sm:$0xff]
        %v1864 = vld [vmem:[#allocation14 + $0x38] sm:$0xff]
        %v1865 = vld [vmem:[#allocation16] sm:$0xff]
        %v1866 = vld [vmem:[#allocation16 + $0x8] sm:$0xff]
        %v1867 = vld [vmem:[#allocation16 + $0x10] sm:$0xff]
        %v1868 = vld [vmem:[#allocation16 + $0x18] sm:$0xff]
        %v1869 = vld [vmem:[#allocation16 + $0x20] sm:$0xff]
        %v1870 = vld [vmem:[#allocation16 + $0x28] sm:$0xff]
        %v1871 = vld [vmem:[#allocation16 + $0x30] sm:$0xff]
        %v1872 = vld [vmem:[#allocation16 + $0x38] sm:$0xff]
        %v1873 = vld [vmem:[%s18] sm:$0x3]
        %v1874 = vld [vmem:[%s19] sm:$0x3]
        %v1875 = vadd.f32 %v1873, %v1874
        %v1876 = vpack.c.bf16 %v1856, %v1856
        %v1885 = vunpack.c.l.b16 %v1865
        %v1886 = vunpack.c.h.b16 %v1865
        %v1887 = vunpack.c.l.b16 %v1866
        %v1888 = vunpack.c.h.b16 %v1866
        %v1889 = vunpack.c.l.b16 %v1867
        %v1890 = vunpack.c.h.b16 %v1867
        %v1891 = vunpack.c.l.b16 %v1868
        %v1892 = vunpack.c.h.b16 %v1868
        %v1893 = vunpack.c.l.b16 %v1869
        %v1894 = vunpack.c.h.b16 %v1869
        %v1895 = vunpack.c.l.b16 %v1870
        %v1896 = vunpack.c.h.b16 %v1870
        %v1897 = vunpack.c.l.b16 %v1871
        %v1898 = vunpack.c.h.b16 %v1871
        %v1899 = vunpack.c.l.b16 %v1872
        %v1900 = vunpack.c.h.b16 %v1872
        %v1901 = vpack.c.b16 %v1887, %v1885
        %v1902 = vpack.c.b16 %v1888, %v1886
        %v1903 = vpack.c.b16 %v1891, %v1889
        %v1904 = vpack.c.b16 %v1892, %v1890
        %v1905 = vpack.c.b16 %v1895, %v1893
        %v1906 = vpack.c.b16 %v1896, %v1894
        %v1907 = vpack.c.b16 %v1899, %v1897
        %v1908 = vpack.c.b16 %v1900, %v1898
        %v1918 = vsel %vm864, 0.0, 0
        %1920 = vmatpush.bf16.msra.mxu0 0
        %1921 = vmatpush.bf16.msra.mxu0 0
        %1922 = vmatpush.bf16.msra.mxu0 0
        %1923 = vmatpush.bf16.msra.mxu0 0
        %1924 = vmatpush.bf16.msra.mxu0 %v1907
        %1925 = vmatpush.bf16.msra.mxu0 %v1905
        %1926 = vmatpush.bf16.msra.mxu0 %v1903
        %1927 = vmatpush.bf16.msra.mxu0 %v1901
        %1928 = vmatmul.f32.gmra.mxu0 %v1918
        %v1929 = vpop.f32.mrf.mxu0
        %v1930 = vadd.f32 0.0, %v1929
        %1931 = vdwg.mxu0
        %1932 = vmatpush.bf16.msra.mxu0 0
        %1933 = vmatpush.bf16.msra.mxu0 0
        %1934 = vmatpush.bf16.msra.mxu0 0
        %1935 = vmatpush.bf16.msra.mxu0 0
        %1936 = vmatpush.bf16.msra.mxu0 %v1908
        %1937 = vmatpush.bf16.msra.mxu0 %v1906
        %1938 = vmatpush.bf16.msra.mxu0 %v1904
        %1939 = vmatpush.bf16.msra.mxu0 %v1902
        %1940 = vmatmul.f32.gmra.mxu0 %v1918
        %v1941 = vpop.f32.mrf.mxu0
        %v1942 = vadd.f32 0.0, %v1941
        %1943 = vdwg.mxu0
        %v1952 = vunpack.c.l.b16 %v1857
        %v1953 = vunpack.c.h.b16 %v1857
        %v1954 = vunpack.c.l.b16 %v1858
        %v1955 = vunpack.c.h.b16 %v1858
        %v1956 = vunpack.c.l.b16 %v1859
        %v1957 = vunpack.c.h.b16 %v1859
        %v1958 = vunpack.c.l.b16 %v1860
        %v1959 = vunpack.c.h.b16 %v1860
        %v1960 = vunpack.c.l.b16 %v1861
        %v1961 = vunpack.c.h.b16 %v1861
        %v1962 = vunpack.c.l.b16 %v1862
        %v1963 = vunpack.c.h.b16 %v1862
        %v1964 = vunpack.c.l.b16 %v1863
        %v1965 = vunpack.c.h.b16 %v1863
        %v1966 = vunpack.c.l.b16 %v1864
        %v1967 = vunpack.c.h.b16 %v1864
        %v1968 = vpack.c.b16 %v1954, %v1952
        %v1969 = vpack.c.b16 %v1955, %v1953
        %v1970 = vpack.c.b16 %v1958, %v1956
        %v1971 = vpack.c.b16 %v1959, %v1957
        %v1972 = vpack.c.b16 %v1962, %v1960
        %v1973 = vpack.c.b16 %v1963, %v1961
        %v1974 = vpack.c.b16 %v1966, %v1964
        %v1975 = vpack.c.b16 %v1967, %v1965
        %v1985 = vsel %vm864, %v1876, 0
        %1987 = vmatpush.bf16.msra.mxu0 0
        %1988 = vmatpush.bf16.msra.mxu0 0
        %1989 = vmatpush.bf16.msra.mxu0 0
        %1990 = vmatpush.bf16.msra.mxu0 0
        %1991 = vmatpush.bf16.msra.mxu0 %v1974
        %1992 = vmatpush.bf16.msra.mxu0 %v1972
        %1993 = vmatpush.bf16.msra.mxu0 %v1970
        %1994 = vmatpush.bf16.msra.mxu0 %v1968
        %1995 = vmatmul.bf16.gmra.mxu0 %v1985
        %v1996 = vpop.f32.mrf.mxu0
        %v1997 = vadd.f32 %v1930, %v1996
        %v1998 = vpop.f32.mrf.mxu0
        %1999 = vdwg.mxu0
        %2000 = vmatpush.bf16.msra.mxu0 0
        %2001 = vmatpush.bf16.msra.mxu0 0
        %2002 = vmatpush.bf16.msra.mxu0 0
        %2003 = vmatpush.bf16.msra.mxu0 0
        %2004 = vmatpush.bf16.msra.mxu0 %v1975
        %2005 = vmatpush.bf16.msra.mxu0 %v1973
        %2006 = vmatpush.bf16.msra.mxu0 %v1971
        %2007 = vmatpush.bf16.msra.mxu0 %v1969
        %2008 = vmatmul.bf16.gmra.mxu0 %v1985
        %v2009 = vpop.f32.mrf.mxu0
        %v2010 = vadd.f32 %v1942, %v2009
        %v2011 = vpop.f32.mrf.mxu0
        %2012 = vdwg.mxu0
        %v2014 = vperm.slane %v1875, 0
        %v2015 = vperm.slane %v1875, 1
        %v2018 = vadd.f32 %v1997, %v2014
        %v2019 = vadd.f32 %v2010, %v2015
        %v2020 = vxor.u32 %v2018, 2147483648
        %v2021 = vmul.f32 %v2020, 1.442695
        %v2022 = vpow.pop %v2021
        %v2023 = vadd.f32 %v2022, 1.0
        %v2024 = vrcp.pop %v2023
        %v2025 = vmul.f32 %v2023, %v2024
        %v2026 = vsub.f32 1.0, %v2025
        %v2027 = vmul.f32 %v2024, %v2026
        %v2028 = vadd.f32 %v2024, %v2027
        %vm2029 = vweird.f32 %v2023
        %vm2030 = vweird.f32 %v2024
        %vm2031 = vmor %vm2029, %vm2030
        %v2032 = vsel %vm2031, %v2024, %v2028
        %v2033 = vand.u32 2147483647, %v2023
        %vm2034 = vcmp.eq.f32.partialorder %v2033, 8.507059e+37
        %v2035 = vand.u32 %v2023, 2147483648
        %v2036 = vor.u32 1.1754944e-38, %v2035
        %v2037 = vsel %vm2034, %v2036, %v2032
        %v2038 = vmul.f32 1.0, %v2037
        %v2039 = vtanh.pop %v2019
        %v2040 = vxor.u32 %v2019, 2147483648
        %v2041 = vmul.f32 %v2040, 1.442695
        %v2042 = vpow.pop %v2041
        %v2043 = vadd.f32 %v2042, 1.0
        %v2044 = vrcp.pop %v2043
        %v2045 = vmul.f32 %v2043, %v2044
        %v2046 = vsub.f32 1.0, %v2045
        %v2047 = vmul.f32 %v2044, %v2046
        %v2048 = vadd.f32 %v2044, %v2047
        %vm2049 = vweird.f32 %v2043
        %vm2050 = vweird.f32 %v2044
        %vm2051 = vmor %vm2049, %vm2050
        %v2052 = vsel %vm2051, %v2044, %v2048
        %v2053 = vand.u32 2147483647, %v2043
        %vm2054 = vcmp.eq.f32.partialorder %v2053, 8.507059e+37
        %v2055 = vand.u32 %v2043, 2147483648
        %v2056 = vor.u32 1.1754944e-38, %v2055
        %v2057 = vsel %vm2054, %v2056, %v2052
        %v2058 = vmul.f32 1.0, %v2057
        %v2059 = vmul.f32 %v2038, 0.0
        %v2060 = vmul.f32 %v2038, %v2039
        %2062 = vrot.lane.b32.xlu0 %v2060, 64
        %v2063 = vpop.permute.xlu0 %2062
        %v2065 = vadd.f32 %v2059, %v2063
        %v2066 = vtanh.pop %v2065
        %v2067 = vmul.f32 %v2058, %v2066
        %v2068 = vpack.c.bf16 %v2067, %v2067
        %2070 = vrot.lane.b32.xlu0 %v2067, 64
        %v2071 = vpop.permute.xlu0 %2070
        %v2072 = vsel %vm864, %v2071, 0
        %2074 = vmatpush.bf16.msra.mxu0 0
        %2075 = vmatpush.bf16.msra.mxu0 0
        %2076 = vmatpush.bf16.msra.mxu0 0
        %2077 = vmatpush.bf16.msra.mxu0 0
        %2078 = vmatpush.bf16.msra.mxu0 %v1907
        %2079 = vmatpush.bf16.msra.mxu0 %v1905
        %2080 = vmatpush.bf16.msra.mxu0 %v1903
        %2081 = vmatpush.bf16.msra.mxu0 %v1901
        %2082 = vmatmul.f32.gmra.mxu0 %v2072
        %v2083 = vpop.f32.mrf.mxu0
        %v2084 = vadd.f32 0.0, %v2083
        %2085 = vdwg.mxu0
        %2086 = vmatpush.bf16.msra.mxu0 0
        %2087 = vmatpush.bf16.msra.mxu0 0
        %2088 = vmatpush.bf16.msra.mxu0 0
        %2089 = vmatpush.bf16.msra.mxu0 0
        %2090 = vmatpush.bf16.msra.mxu0 %v1908
        %2091 = vmatpush.bf16.msra.mxu0 %v1906
        %2092 = vmatpush.bf16.msra.mxu0 %v1904
        %2093 = vmatpush.bf16.msra.mxu0 %v1902
        %2094 = vmatmul.f32.gmra.mxu0 %v2072
        %v2095 = vpop.f32.mrf.mxu0
        %v2096 = vadd.f32 0.0, %v2095
        %2097 = vdwg.mxu0
        %v2098 = vshrl.u32 %v1876, 16
        %v2101 = vsel %vm864, %v2098, 0
        %2103 = vmatpush.bf16.msra.mxu0 0
        %2104 = vmatpush.bf16.msra.mxu0 0
        %2105 = vmatpush.bf16.msra.mxu0 0
        %2106 = vmatpush.bf16.msra.mxu0 0
        %2107 = vmatpush.bf16.msra.mxu0 %v1974
        %2108 = vmatpush.bf16.msra.mxu0 %v1972
        %2109 = vmatpush.bf16.msra.mxu0 %v1970
        %2110 = vmatpush.bf16.msra.mxu0 %v1968
        %2111 = vmatmul.bf16.gmra.mxu0 %v2101
        %v2112 = vpop.f32.mrf.mxu0
        %v2113 = vadd.f32 %v2084, %v2112
        %v2114 = vpop.f32.mrf.mxu0
        %2115 = vdwg.mxu0
        %2116 = vmatpush.bf16.msra.mxu0 0
        %2117 = vmatpush.bf16.msra.mxu0 0
        %2118 = vmatpush.bf16.msra.mxu0 0
        %2119 = vmatpush.bf16.msra.mxu0 0
        %2120 = vmatpush.bf16.msra.mxu0 %v1975
        %2121 = vmatpush.bf16.msra.mxu0 %v1973
        %2122 = vmatpush.bf16.msra.mxu0 %v1971
        %2123 = vmatpush.bf16.msra.mxu0 %v1969
        %2124 = vmatmul.bf16.gmra.mxu0 %v2101
        %v2125 = vpop.f32.mrf.mxu0
        %v2126 = vadd.f32 %v2096, %v2125
        %v2127 = vpop.f32.mrf.mxu0
        %2128 = vdwg.mxu0
        %v2129 = vadd.f32 %v2113, %v2014
        %v2130 = vadd.f32 %v2126, %v2015
        %v2131 = vxor.u32 %v2129, 2147483648
        %v2132 = vmul.f32 %v2131, 1.442695
        %v2133 = vpow.pop %v2132
        %v2134 = vadd.f32 %v2133, 1.0
        %v2135 = vrcp.pop %v2134
        %v2136 = vmul.f32 %v2134, %v2135
        %v2137 = vsub.f32 1.0, %v2136
        %v2138 = vmul.f32 %v2135, %v2137
        %v2139 = vadd.f32 %v2135, %v2138
        %vm2140 = vweird.f32 %v2134
        %vm2141 = vweird.f32 %v2135
        %vm2142 = vmor %vm2140, %vm2141
        %v2143 = vsel %vm2142, %v2135, %v2139
        %v2144 = vand.u32 2147483647, %v2134
        %vm2145 = vcmp.eq.f32.partialorder %v2144, 8.507059e+37
        %v2146 = vand.u32 %v2134, 2147483648
        %v2147 = vor.u32 1.1754944e-38, %v2146
        %v2148 = vsel %vm2145, %v2147, %v2143
        %v2149 = vmul.f32 1.0, %v2148
        %v2150 = vtanh.pop %v2130
        %v2151 = vxor.u32 %v2130, 2147483648
        %v2152 = vmul.f32 %v2151, 1.442695
        %v2153 = vpow.pop %v2152
        %v2154 = vadd.f32 %v2153, 1.0
        %v2155 = vrcp.pop %v2154
        %v2156 = vmul.f32 %v2154, %v2155
        %v2157 = vsub.f32 1.0, %v2156
        %v2158 = vmul.f32 %v2155, %v2157
        %v2159 = vadd.f32 %v2155, %v2158
        %vm2160 = vweird.f32 %v2154
        %vm2161 = vweird.f32 %v2155
        %vm2162 = vmor %vm2160, %vm2161
        %v2163 = vsel %vm2162, %v2155, %v2159
        %v2164 = vand.u32 2147483647, %v2154
        %vm2165 = vcmp.eq.f32.partialorder %v2164, 8.507059e+37
        %v2166 = vand.u32 %v2154, 2147483648
        %v2167 = vor.u32 1.1754944e-38, %v2166
        %v2168 = vsel %vm2165, %v2167, %v2163
        %v2169 = vmul.f32 1.0, %v2168
        %v2170 = vmul.f32 %v2149, %v2065
        %v2171 = vmul.f32 %v2149, %v2150
        %2173 = vrot.lane.b32.xlu0 %v2171, 64
        %v2174 = vpop.permute.xlu0 %2173
        %v2176 = vadd.f32 %v2170, %v2174
        %v2177 = vtanh.pop %v2176
        %v2178 = vmul.f32 %v2169, %v2177
        %v2179 = vpack.c.bf16 %v2178, %v2178
        %2181 = vrot.lane.b32.xlu0 %v2178, 64
        %v2182 = vpop.permute.xlu0 %2181
        %v2183 = vsel %vm864, %v2182, 0
        %2185 = vmatpush.bf16.msra.mxu0 0
        %2186 = vmatpush.bf16.msra.mxu0 0
        %2187 = vmatpush.bf16.msra.mxu0 0
        %2188 = vmatpush.bf16.msra.mxu0 0
        %2189 = vmatpush.bf16.msra.mxu0 %v1907
        %2190 = vmatpush.bf16.msra.mxu0 %v1905
        %2191 = vmatpush.bf16.msra.mxu0 %v1903
        %2192 = vmatpush.bf16.msra.mxu0 %v1901
        %2193 = vmatmul.f32.gmra.mxu0 %v2183
        %v2194 = vpop.f32.mrf.mxu0
        %v2195 = vadd.f32 0.0, %v2194
        %2196 = vdwg.mxu0
        %2197 = vmatpush.bf16.msra.mxu0 0
        %2198 = vmatpush.bf16.msra.mxu0 0
        %2199 = vmatpush.bf16.msra.mxu0 0
        %2200 = vmatpush.bf16.msra.mxu0 0
        %2201 = vmatpush.bf16.msra.mxu0 %v1908
        %2202 = vmatpush.bf16.msra.mxu0 %v1906
        %2203 = vmatpush.bf16.msra.mxu0 %v1904
        %2204 = vmatpush.bf16.msra.mxu0 %v1902
        %2205 = vmatmul.f32.gmra.mxu0 %v2183
        %v2206 = vpop.f32.mrf.mxu0
        %v2207 = vadd.f32 0.0, %v2206
        %2208 = vdwg.mxu0
        %v2210 = vrot.slane %v1876, 1
        %v2212 = vsel %vm864, %v2210, 0
        %2214 = vmatpush.bf16.msra.mxu0 0
        %2215 = vmatpush.bf16.msra.mxu0 0
        %2216 = vmatpush.bf16.msra.mxu0 0
        %2217 = vmatpush.bf16.msra.mxu0 0
        %2218 = vmatpush.bf16.msra.mxu0 %v1974
        %2219 = vmatpush.bf16.msra.mxu0 %v1972
        %2220 = vmatpush.bf16.msra.mxu0 %v1970
        %2221 = vmatpush.bf16.msra.mxu0 %v1968
        %2222 = vmatmul.bf16.gmra.mxu0 %v2212
        %v2223 = vpop.f32.mrf.mxu0
        %v2224 = vadd.f32 %v2195, %v2223
        %v2225 = vpop.f32.mrf.mxu0
        %2226 = vdwg.mxu0
        %2227 = vmatpush.bf16.msra.mxu0 0
        %2228 = vmatpush.bf16.msra.mxu0 0
        %2229 = vmatpush.bf16.msra.mxu0 0
        %2230 = vmatpush.bf16.msra.mxu0 0
        %2231 = vmatpush.bf16.msra.mxu0 %v1975
        %2232 = vmatpush.bf16.msra.mxu0 %v1973
        %2233 = vmatpush.bf16.msra.mxu0 %v1971
        %2234 = vmatpush.bf16.msra.mxu0 %v1969
        %2235 = vmatmul.bf16.gmra.mxu0 %v2212
        %v2236 = vpop.f32.mrf.mxu0
        %v2237 = vadd.f32 %v2207, %v2236
        %v2238 = vpop.f32.mrf.mxu0
        %2239 = vdwg.mxu0
        %v2240 = vadd.f32 %v2224, %v2014
        %v2241 = vadd.f32 %v2237, %v2015
        %v2242 = vxor.u32 %v2240, 2147483648
        %v2243 = vmul.f32 %v2242, 1.442695
        %v2244 = vpow.pop %v2243
        %v2245 = vadd.f32 %v2244, 1.0
        %v2246 = vrcp.pop %v2245
        %v2247 = vmul.f32 %v2245, %v2246
        %v2248 = vsub.f32 1.0, %v2247
        %v2249 = vmul.f32 %v2246, %v2248
        %v2250 = vadd.f32 %v2246, %v2249
        %vm2251 = vweird.f32 %v2245
        %vm2252 = vweird.f32 %v2246
        %vm2253 = vmor %vm2251, %vm2252
        %v2254 = vsel %vm2253, %v2246, %v2250
        %v2255 = vand.u32 2147483647, %v2245
        %vm2256 = vcmp.eq.f32.partialorder %v2255, 8.507059e+37
        %v2257 = vand.u32 %v2245, 2147483648
        %v2258 = vor.u32 1.1754944e-38, %v2257
        %v2259 = vsel %vm2256, %v2258, %v2254
        %v2260 = vmul.f32 1.0, %v2259
        %v2261 = vtanh.pop %v2241
        %v2262 = vxor.u32 %v2241, 2147483648
        %v2263 = vmul.f32 %v2262, 1.442695
        %v2264 = vpow.pop %v2263
        %v2265 = vadd.f32 %v2264, 1.0
        %v2266 = vrcp.pop %v2265
        %v2267 = vmul.f32 %v2265, %v2266
        %v2268 = vsub.f32 1.0, %v2267
        %v2269 = vmul.f32 %v2266, %v2268
        %v2270 = vadd.f32 %v2266, %v2269
        %vm2271 = vweird.f32 %v2265
        %vm2272 = vweird.f32 %v2266
        %vm2273 = vmor %vm2271, %vm2272
        %v2274 = vsel %vm2273, %v2266, %v2270
        %v2275 = vand.u32 2147483647, %v2265
        %vm2276 = vcmp.eq.f32.partialorder %v2275, 8.507059e+37
        %v2277 = vand.u32 %v2265, 2147483648
        %v2278 = vor.u32 1.1754944e-38, %v2277
        %v2279 = vsel %vm2276, %v2278, %v2274
        %v2280 = vmul.f32 1.0, %v2279
        %v2281 = vmul.f32 %v2260, %v2176
        %v2282 = vmul.f32 %v2260, %v2261
        %2284 = vrot.lane.b32.xlu0 %v2282, 64
        %v2285 = vpop.permute.xlu0 %2284
        %v2287 = vadd.f32 %v2281, %v2285
        %v2288 = vtanh.pop %v2287
        %v2289 = vmul.f32 %v2280, %v2288
        %v2290 = vpack.c.bf16 %v2289, %v2289
        %2292 = vrot.lane.b32.xlu0 %v2289, 64
        %v2293 = vpop.permute.xlu0 %2292
        %v2294 = vsel %vm864, %v2293, 0
        %2296 = vmatpush.bf16.msra.mxu0 0
        %2297 = vmatpush.bf16.msra.mxu0 0
        %2298 = vmatpush.bf16.msra.mxu0 0
        %2299 = vmatpush.bf16.msra.mxu0 0
        %2300 = vmatpush.bf16.msra.mxu0 %v1907
        %2301 = vmatpush.bf16.msra.mxu0 %v1905
        %2302 = vmatpush.bf16.msra.mxu0 %v1903
        %2303 = vmatpush.bf16.msra.mxu0 %v1901
        %2304 = vmatmul.f32.gmra.mxu0 %v2294
        %v2305 = vpop.f32.mrf.mxu0
        %v2306 = vadd.f32 0.0, %v2305
        %2307 = vdwg.mxu0
        %2308 = vmatpush.bf16.msra.mxu0 0
        %2309 = vmatpush.bf16.msra.mxu0 0
        %2310 = vmatpush.bf16.msra.mxu0 0
        %2311 = vmatpush.bf16.msra.mxu0 0
        %2312 = vmatpush.bf16.msra.mxu0 %v1908
        %2313 = vmatpush.bf16.msra.mxu0 %v1906
        %2314 = vmatpush.bf16.msra.mxu0 %v1904
        %2315 = vmatpush.bf16.msra.mxu0 %v1902
        %2316 = vmatmul.f32.gmra.mxu0 %v2294
        %v2317 = vpop.f32.mrf.mxu0
        %v2318 = vadd.f32 0.0, %v2317
        %2319 = vdwg.mxu0
        %v2320 = vrot.slane %v2098, 1
        %v2322 = vsel %vm864, %v2320, 0
        %2324 = vmatpush.bf16.msra.mxu0 0
        %2325 = vmatpush.bf16.msra.mxu0 0
        %2326 = vmatpush.bf16.msra.mxu0 0
        %2327 = vmatpush.bf16.msra.mxu0 0
        %2328 = vmatpush.bf16.msra.mxu0 %v1974
        %2329 = vmatpush.bf16.msra.mxu0 %v1972
        %2330 = vmatpush.bf16.msra.mxu0 %v1970
        %2331 = vmatpush.bf16.msra.mxu0 %v1968
        %2332 = vmatmul.bf16.gmra.mxu0 %v2322
        %v2333 = vpop.f32.mrf.mxu0
        %v2334 = vadd.f32 %v2306, %v2333
        %v2335 = vpop.f32.mrf.mxu0
        %2336 = vdwg.mxu0
        %2337 = vmatpush.bf16.msra.mxu0 0
        %2338 = vmatpush.bf16.msra.mxu0 0
        %2339 = vmatpush.bf16.msra.mxu0 0
        %2340 = vmatpush.bf16.msra.mxu0 0
        %2341 = vmatpush.bf16.msra.mxu0 %v1975
        %2342 = vmatpush.bf16.msra.mxu0 %v1973
        %2343 = vmatpush.bf16.msra.mxu0 %v1971
        %2344 = vmatpush.bf16.msra.mxu0 %v1969
        %2345 = vmatmul.bf16.gmra.mxu0 %v2322
        %v2346 = vpop.f32.mrf.mxu0
        %v2347 = vadd.f32 %v2318, %v2346
        %v2348 = vpop.f32.mrf.mxu0
        %2349 = vdwg.mxu0
        %v2350 = vadd.f32 %v2334, %v2014
        %v2351 = vadd.f32 %v2347, %v2015
        %v2352 = vxor.u32 %v2350, 2147483648
        %v2353 = vmul.f32 %v2352, 1.442695
        %v2354 = vpow.pop %v2353
        %v2355 = vadd.f32 %v2354, 1.0
        %v2356 = vrcp.pop %v2355
        %v2357 = vmul.f32 %v2355, %v2356
        %v2358 = vsub.f32 1.0, %v2357
        %v2359 = vmul.f32 %v2356, %v2358
        %v2360 = vadd.f32 %v2356, %v2359
        %vm2361 = vweird.f32 %v2355
        %vm2362 = vweird.f32 %v2356
        %vm2363 = vmor %vm2361, %vm2362
        %v2364 = vsel %vm2363, %v2356, %v2360
        %v2365 = vand.u32 2147483647, %v2355
        %vm2366 = vcmp.eq.f32.partialorder %v2365, 8.507059e+37
        %v2367 = vand.u32 %v2355, 2147483648
        %v2368 = vor.u32 1.1754944e-38, %v2367
        %v2369 = vsel %vm2366, %v2368, %v2364
        %v2370 = vmul.f32 1.0, %v2369
        %v2371 = vtanh.pop %v2351
        %v2372 = vxor.u32 %v2351, 2147483648
        %v2373 = vmul.f32 %v2372, 1.442695
        %v2374 = vpow.pop %v2373
        %v2375 = vadd.f32 %v2374, 1.0
        %v2376 = vrcp.pop %v2375
        %v2377 = vmul.f32 %v2375, %v2376
        %v2378 = vsub.f32 1.0, %v2377
        %v2379 = vmul.f32 %v2376, %v2378
        %v2380 = vadd.f32 %v2376, %v2379
        %vm2381 = vweird.f32 %v2375
        %vm2382 = vweird.f32 %v2376
        %vm2383 = vmor %vm2381, %vm2382
        %v2384 = vsel %vm2383, %v2376, %v2380
        %v2385 = vand.u32 2147483647, %v2375
        %vm2386 = vcmp.eq.f32.partialorder %v2385, 8.507059e+37
        %v2387 = vand.u32 %v2375, 2147483648
        %v2388 = vor.u32 1.1754944e-38, %v2387
        %v2389 = vsel %vm2386, %v2388, %v2384
        %v2390 = vmul.f32 1.0, %v2389
        %v2391 = vmul.f32 %v2370, %v2287
        %v2392 = vmul.f32 %v2370, %v2371
        %2394 = vrot.lane.b32.xlu0 %v2392, 64
        %v2395 = vpop.permute.xlu0 %2394
        %v2397 = vadd.f32 %v2391, %v2395
        %v2398 = vtanh.pop %v2397
        %v2399 = vmul.f32 %v2390, %v2398
        %v2400 = vpack.c.bf16 %v2399, %v2399
        %2402 = vrot.lane.b32.xlu0 %v2399, 64
        %v2403 = vpop.permute.xlu0 %2402
        %v2404 = vsel %vm864, %v2403, 0
        %2406 = vmatpush.bf16.msra.mxu0 0
        %2407 = vmatpush.bf16.msra.mxu0 0
        %2408 = vmatpush.bf16.msra.mxu0 0
        %2409 = vmatpush.bf16.msra.mxu0 0
        %2410 = vmatpush.bf16.msra.mxu0 %v1907
        %2411 = vmatpush.bf16.msra.mxu0 %v1905
        %2412 = vmatpush.bf16.msra.mxu0 %v1903
        %2413 = vmatpush.bf16.msra.mxu0 %v1901
        %2414 = vmatmul.f32.gmra.mxu0 %v2404
        %v2415 = vpop.f32.mrf.mxu0
        %v2416 = vadd.f32 0.0, %v2415
        %2417 = vdwg.mxu0
        %2418 = vmatpush.bf16.msra.mxu0 0
        %2419 = vmatpush.bf16.msra.mxu0 0
        %2420 = vmatpush.bf16.msra.mxu0 0
        %2421 = vmatpush.bf16.msra.mxu0 0
        %2422 = vmatpush.bf16.msra.mxu0 %v1908
        %2423 = vmatpush.bf16.msra.mxu0 %v1906
        %2424 = vmatpush.bf16.msra.mxu0 %v1904
        %2425 = vmatpush.bf16.msra.mxu0 %v1902
        %2426 = vmatmul.f32.gmra.mxu0 %v2404
        %v2427 = vpop.f32.mrf.mxu0
        %v2428 = vadd.f32 0.0, %v2427
        %2429 = vdwg.mxu0
        %v2430 = vrot.slane %v1876, 2
        %v2432 = vsel %vm864, %v2430, 0
        %2434 = vmatpush.bf16.msra.mxu0 0
        %2435 = vmatpush.bf16.msra.mxu0 0
        %2436 = vmatpush.bf16.msra.mxu0 0
        %2437 = vmatpush.bf16.msra.mxu0 0
        %2438 = vmatpush.bf16.msra.mxu0 %v1974
        %2439 = vmatpush.bf16.msra.mxu0 %v1972
        %2440 = vmatpush.bf16.msra.mxu0 %v1970
        %2441 = vmatpush.bf16.msra.mxu0 %v1968
        %2442 = vmatmul.bf16.gmra.mxu0 %v2432
        %v2443 = vpop.f32.mrf.mxu0
        %v2444 = vadd.f32 %v2416, %v2443
        %v2445 = vpop.f32.mrf.mxu0
        %2446 = vdwg.mxu0
        %2447 = vmatpush.bf16.msra.mxu0 0
        %2448 = vmatpush.bf16.msra.mxu0 0
        %2449 = vmatpush.bf16.msra.mxu0 0
        %2450 = vmatpush.bf16.msra.mxu0 0
        %2451 = vmatpush.bf16.msra.mxu0 %v1975
        %2452 = vmatpush.bf16.msra.mxu0 %v1973
        %2453 = vmatpush.bf16.msra.mxu0 %v1971
        %2454 = vmatpush.bf16.msra.mxu0 %v1969
        %2455 = vmatmul.bf16.gmra.mxu0 %v2432
        %v2456 = vpop.f32.mrf.mxu0
        %v2457 = vadd.f32 %v2428, %v2456
        %v2458 = vpop.f32.mrf.mxu0
        %2459 = vdwg.mxu0
        %v2460 = vadd.f32 %v2444, %v2014
        %v2461 = vadd.f32 %v2457, %v2015
        %v2462 = vxor.u32 %v2460, 2147483648
        %v2463 = vmul.f32 %v2462, 1.442695
        %v2464 = vpow.pop %v2463
        %v2465 = vadd.f32 %v2464, 1.0
        %v2466 = vrcp.pop %v2465
        %v2467 = vmul.f32 %v2465, %v2466
        %v2468 = vsub.f32 1.0, %v2467
        %v2469 = vmul.f32 %v2466, %v2468
        %v2470 = vadd.f32 %v2466, %v2469
        %vm2471 = vweird.f32 %v2465
        %vm2472 = vweird.f32 %v2466
        %vm2473 = vmor %vm2471, %vm2472
        %v2474 = vsel %vm2473, %v2466, %v2470
        %v2475 = vand.u32 2147483647, %v2465
        %vm2476 = vcmp.eq.f32.partialorder %v2475, 8.507059e+37
        %v2477 = vand.u32 %v2465, 2147483648
        %v2478 = vor.u32 1.1754944e-38, %v2477
        %v2479 = vsel %vm2476, %v2478, %v2474
        %v2480 = vmul.f32 1.0, %v2479
        %v2481 = vtanh.pop %v2461
        %v2482 = vxor.u32 %v2461, 2147483648
        %v2483 = vmul.f32 %v2482, 1.442695
        %v2484 = vpow.pop %v2483
        %v2485 = vadd.f32 %v2484, 1.0
        %v2486 = vrcp.pop %v2485
        %v2487 = vmul.f32 %v2485, %v2486
        %v2488 = vsub.f32 1.0, %v2487
        %v2489 = vmul.f32 %v2486, %v2488
        %v2490 = vadd.f32 %v2486, %v2489
        %vm2491 = vweird.f32 %v2485
        %vm2492 = vweird.f32 %v2486
        %vm2493 = vmor %vm2491, %vm2492
        %v2494 = vsel %vm2493, %v2486, %v2490
        %v2495 = vand.u32 2147483647, %v2485
        %vm2496 = vcmp.eq.f32.partialorder %v2495, 8.507059e+37
        %v2497 = vand.u32 %v2485, 2147483648
        %v2498 = vor.u32 1.1754944e-38, %v2497
        %v2499 = vsel %vm2496, %v2498, %v2494
        %v2500 = vmul.f32 1.0, %v2499
        %v2501 = vmul.f32 %v2480, %v2397
        %v2502 = vmul.f32 %v2480, %v2481
        %2504 = vrot.lane.b32.xlu0 %v2502, 64
        %v2505 = vpop.permute.xlu0 %2504
        %v2507 = vadd.f32 %v2501, %v2505
        %v2508 = vtanh.pop %v2507
        %v2509 = vmul.f32 %v2500, %v2508
        %v2510 = vpack.c.bf16 %v2509, %v2509
        %2512 = vrot.lane.b32.xlu0 %v2509, 64
        %v2513 = vpop.permute.xlu0 %2512
        %v2514 = vsel %vm864, %v2513, 0
        %2516 = vmatpush.bf16.msra.mxu0 0
        %2517 = vmatpush.bf16.msra.mxu0 0
        %2518 = vmatpush.bf16.msra.mxu0 0
        %2519 = vmatpush.bf16.msra.mxu0 0
        %2520 = vmatpush.bf16.msra.mxu0 %v1907
        %2521 = vmatpush.bf16.msra.mxu0 %v1905
        %2522 = vmatpush.bf16.msra.mxu0 %v1903
        %2523 = vmatpush.bf16.msra.mxu0 %v1901
        %2524 = vmatmul.f32.gmra.mxu0 %v2514
        %v2525 = vpop.f32.mrf.mxu0
        %v2526 = vadd.f32 0.0, %v2525
        %2527 = vdwg.mxu0
        %2528 = vmatpush.bf16.msra.mxu0 0
        %2529 = vmatpush.bf16.msra.mxu0 0
        %2530 = vmatpush.bf16.msra.mxu0 0
        %2531 = vmatpush.bf16.msra.mxu0 0
        %2532 = vmatpush.bf16.msra.mxu0 %v1908
        %2533 = vmatpush.bf16.msra.mxu0 %v1906
        %2534 = vmatpush.bf16.msra.mxu0 %v1904
        %2535 = vmatpush.bf16.msra.mxu0 %v1902
        %2536 = vmatmul.f32.gmra.mxu0 %v2514
        %v2537 = vpop.f32.mrf.mxu0
        %v2538 = vadd.f32 0.0, %v2537
        %2539 = vdwg.mxu0
        %v2540 = vrot.slane %v2098, 2
        %v2542 = vsel %vm864, %v2540, 0
        %2544 = vmatpush.bf16.msra.mxu0 0
        %2545 = vmatpush.bf16.msra.mxu0 0
        %2546 = vmatpush.bf16.msra.mxu0 0
        %2547 = vmatpush.bf16.msra.mxu0 0
        %2548 = vmatpush.bf16.msra.mxu0 %v1974
        %2549 = vmatpush.bf16.msra.mxu0 %v1972
        %2550 = vmatpush.bf16.msra.mxu0 %v1970
        %2551 = vmatpush.bf16.msra.mxu0 %v1968
        %2552 = vmatmul.bf16.gmra.mxu0 %v2542
        %v2553 = vpop.f32.mrf.mxu0
        %v2554 = vadd.f32 %v2526, %v2553
        %v2555 = vpop.f32.mrf.mxu0
        %2556 = vdwg.mxu0
        %2557 = vmatpush.bf16.msra.mxu0 0
        %2558 = vmatpush.bf16.msra.mxu0 0
        %2559 = vmatpush.bf16.msra.mxu0 0
        %2560 = vmatpush.bf16.msra.mxu0 0
        %2561 = vmatpush.bf16.msra.mxu0 %v1975
        %2562 = vmatpush.bf16.msra.mxu0 %v1973
        %2563 = vmatpush.bf16.msra.mxu0 %v1971
        %2564 = vmatpush.bf16.msra.mxu0 %v1969
        %2565 = vmatmul.bf16.gmra.mxu0 %v2542
        %v2566 = vpop.f32.mrf.mxu0
        %v2567 = vadd.f32 %v2538, %v2566
        %v2568 = vpop.f32.mrf.mxu0
        %2569 = vdwg.mxu0
        %v2570 = vadd.f32 %v2554, %v2014
        %v2571 = vadd.f32 %v2567, %v2015
        %v2572 = vxor.u32 %v2570, 2147483648
        %v2573 = vmul.f32 %v2572, 1.442695
        %v2574 = vpow.pop %v2573
        %v2575 = vadd.f32 %v2574, 1.0
        %v2576 = vrcp.pop %v2575
        %v2577 = vmul.f32 %v2575, %v2576
        %v2578 = vsub.f32 1.0, %v2577
        %v2579 = vmul.f32 %v2576, %v2578
        %v2580 = vadd.f32 %v2576, %v2579
        %vm2581 = vweird.f32 %v2575
        %vm2582 = vweird.f32 %v2576
        %vm2583 = vmor %vm2581, %vm2582
        %v2584 = vsel %vm2583, %v2576, %v2580
        %v2585 = vand.u32 2147483647, %v2575
        %vm2586 = vcmp.eq.f32.partialorder %v2585, 8.507059e+37
        %v2587 = vand.u32 %v2575, 2147483648
        %v2588 = vor.u32 1.1754944e-38, %v2587
        %v2589 = vsel %vm2586, %v2588, %v2584
        %v2590 = vmul.f32 1.0, %v2589
        %v2591 = vtanh.pop %v2571
        %v2592 = vxor.u32 %v2571, 2147483648
        %v2593 = vmul.f32 %v2592, 1.442695
        %v2594 = vpow.pop %v2593
        %v2595 = vadd.f32 %v2594, 1.0
        %v2596 = vrcp.pop %v2595
        %v2597 = vmul.f32 %v2595, %v2596
        %v2598 = vsub.f32 1.0, %v2597
        %v2599 = vmul.f32 %v2596, %v2598
        %v2600 = vadd.f32 %v2596, %v2599
        %vm2601 = vweird.f32 %v2595
        %vm2602 = vweird.f32 %v2596
        %vm2603 = vmor %vm2601, %vm2602
        %v2604 = vsel %vm2603, %v2596, %v2600
        %v2605 = vand.u32 2147483647, %v2595
        %vm2606 = vcmp.eq.f32.partialorder %v2605, 8.507059e+37
        %v2607 = vand.u32 %v2595, 2147483648
        %v2608 = vor.u32 1.1754944e-38, %v2607
        %v2609 = vsel %vm2606, %v2608, %v2604
        %v2610 = vmul.f32 1.0, %v2609
        %v2611 = vmul.f32 %v2590, %v2507
        %v2612 = vmul.f32 %v2590, %v2591
        %2614 = vrot.lane.b32.xlu0 %v2612, 64
        %v2615 = vpop.permute.xlu0 %2614
        %v2617 = vadd.f32 %v2611, %v2615
        %v2618 = vtanh.pop %v2617
        %v2619 = vmul.f32 %v2610, %v2618
        %v2620 = vpack.c.bf16 %v2619, %v2619
        %2622 = vrot.lane.b32.xlu0 %v2619, 64
        %v2623 = vpop.permute.xlu0 %2622
        %v2624 = vsel %vm864, %v2623, 0
        %2626 = vmatpush.bf16.msra.mxu0 0
        %2627 = vmatpush.bf16.msra.mxu0 0
        %2628 = vmatpush.bf16.msra.mxu0 0
        %2629 = vmatpush.bf16.msra.mxu0 0
        %2630 = vmatpush.bf16.msra.mxu0 %v1907
        %2631 = vmatpush.bf16.msra.mxu0 %v1905
        %2632 = vmatpush.bf16.msra.mxu0 %v1903
        %2633 = vmatpush.bf16.msra.mxu0 %v1901
        %2634 = vmatmul.f32.gmra.mxu0 %v2624
        %v2635 = vpop.f32.mrf.mxu0
        %v2636 = vadd.f32 0.0, %v2635
        %2637 = vdwg.mxu0
        %2638 = vmatpush.bf16.msra.mxu0 0
        %2639 = vmatpush.bf16.msra.mxu0 0
        %2640 = vmatpush.bf16.msra.mxu0 0
        %2641 = vmatpush.bf16.msra.mxu0 0
        %2642 = vmatpush.bf16.msra.mxu0 %v1908
        %2643 = vmatpush.bf16.msra.mxu0 %v1906
        %2644 = vmatpush.bf16.msra.mxu0 %v1904
        %2645 = vmatpush.bf16.msra.mxu0 %v1902
        %2646 = vmatmul.f32.gmra.mxu0 %v2624
        %v2647 = vpop.f32.mrf.mxu0
        %v2648 = vadd.f32 0.0, %v2647
        %2649 = vdwg.mxu0
        %v2650 = vrot.slane %v1876, 3
        %v2652 = vsel %vm864, %v2650, 0
        %2654 = vmatpush.bf16.msra.mxu0 0
        %2655 = vmatpush.bf16.msra.mxu0 0
        %2656 = vmatpush.bf16.msra.mxu0 0
        %2657 = vmatpush.bf16.msra.mxu0 0
        %2658 = vmatpush.bf16.msra.mxu0 %v1974
        %2659 = vmatpush.bf16.msra.mxu0 %v1972
        %2660 = vmatpush.bf16.msra.mxu0 %v1970
        %2661 = vmatpush.bf16.msra.mxu0 %v1968
        %2662 = vmatmul.bf16.gmra.mxu0 %v2652
        %v2663 = vpop.f32.mrf.mxu0
        %v2664 = vadd.f32 %v2636, %v2663
        %v2665 = vpop.f32.mrf.mxu0
        %2666 = vdwg.mxu0
        %2667 = vmatpush.bf16.msra.mxu0 0
        %2668 = vmatpush.bf16.msra.mxu0 0
        %2669 = vmatpush.bf16.msra.mxu0 0
        %2670 = vmatpush.bf16.msra.mxu0 0
        %2671 = vmatpush.bf16.msra.mxu0 %v1975
        %2672 = vmatpush.bf16.msra.mxu0 %v1973
        %2673 = vmatpush.bf16.msra.mxu0 %v1971
        %2674 = vmatpush.bf16.msra.mxu0 %v1969
        %2675 = vmatmul.bf16.gmra.mxu0 %v2652
        %v2676 = vpop.f32.mrf.mxu0
        %v2677 = vadd.f32 %v2648, %v2676
        %v2678 = vpop.f32.mrf.mxu0
        %2679 = vdwg.mxu0
        %v2680 = vadd.f32 %v2664, %v2014
        %v2681 = vadd.f32 %v2677, %v2015
        %v2682 = vxor.u32 %v2680, 2147483648
        %v2683 = vmul.f32 %v2682, 1.442695
        %v2684 = vpow.pop %v2683
        %v2685 = vadd.f32 %v2684, 1.0
        %v2686 = vrcp.pop %v2685
        %v2687 = vmul.f32 %v2685, %v2686
        %v2688 = vsub.f32 1.0, %v2687
        %v2689 = vmul.f32 %v2686, %v2688
        %v2690 = vadd.f32 %v2686, %v2689
        %vm2691 = vweird.f32 %v2685
        %vm2692 = vweird.f32 %v2686
        %vm2693 = vmor %vm2691, %vm2692
        %v2694 = vsel %vm2693, %v2686, %v2690
        %v2695 = vand.u32 2147483647, %v2685
        %vm2696 = vcmp.eq.f32.partialorder %v2695, 8.507059e+37
        %v2697 = vand.u32 %v2685, 2147483648
        %v2698 = vor.u32 1.1754944e-38, %v2697
        %v2699 = vsel %vm2696, %v2698, %v2694
        %v2700 = vmul.f32 1.0, %v2699
        %v2701 = vtanh.pop %v2681
        %v2702 = vxor.u32 %v2681, 2147483648
        %v2703 = vmul.f32 %v2702, 1.442695
        %v2704 = vpow.pop %v2703
        %v2705 = vadd.f32 %v2704, 1.0
        %v2706 = vrcp.pop %v2705
        %v2707 = vmul.f32 %v2705, %v2706
        %v2708 = vsub.f32 1.0, %v2707
        %v2709 = vmul.f32 %v2706, %v2708
        %v2710 = vadd.f32 %v2706, %v2709
        %vm2711 = vweird.f32 %v2705
        %vm2712 = vweird.f32 %v2706
        %vm2713 = vmor %vm2711, %vm2712
        %v2714 = vsel %vm2713, %v2706, %v2710
        %v2715 = vand.u32 2147483647, %v2705
        %vm2716 = vcmp.eq.f32.partialorder %v2715, 8.507059e+37
        %v2717 = vand.u32 %v2705, 2147483648
        %v2718 = vor.u32 1.1754944e-38, %v2717
        %v2719 = vsel %vm2716, %v2718, %v2714
        %v2720 = vmul.f32 1.0, %v2719
        %v2721 = vmul.f32 %v2700, %v2617
        %v2722 = vmul.f32 %v2700, %v2701
        %2724 = vrot.lane.b32.xlu0 %v2722, 64
        %v2725 = vpop.permute.xlu0 %2724
        %v2727 = vadd.f32 %v2721, %v2725
        %v2728 = vtanh.pop %v2727
        %v2729 = vmul.f32 %v2720, %v2728
        %v2730 = vpack.c.bf16 %v2729, %v2729
        %2732 = vrot.lane.b32.xlu0 %v2729, 64
        %v2733 = vpop.permute.xlu0 %2732
        %v2734 = vsel %vm864, %v2733, 0
        %2736 = vmatpush.bf16.msra.mxu0 0
        %2737 = vmatpush.bf16.msra.mxu0 0
        %2738 = vmatpush.bf16.msra.mxu0 0
        %2739 = vmatpush.bf16.msra.mxu0 0
        %2740 = vmatpush.bf16.msra.mxu0 %v1907
        %2741 = vmatpush.bf16.msra.mxu0 %v1905
        %2742 = vmatpush.bf16.msra.mxu0 %v1903
        %2743 = vmatpush.bf16.msra.mxu0 %v1901
        %2744 = vmatmul.f32.gmra.mxu0 %v2734
        %v2745 = vpop.f32.mrf.mxu0
        %v2746 = vadd.f32 0.0, %v2745
        %2747 = vdwg.mxu0
        %2748 = vmatpush.bf16.msra.mxu0 0
        %2749 = vmatpush.bf16.msra.mxu0 0
        %2750 = vmatpush.bf16.msra.mxu0 0
        %2751 = vmatpush.bf16.msra.mxu0 0
        %2752 = vmatpush.bf16.msra.mxu0 %v1908
        %2753 = vmatpush.bf16.msra.mxu0 %v1906
        %2754 = vmatpush.bf16.msra.mxu0 %v1904
        %2755 = vmatpush.bf16.msra.mxu0 %v1902
        %2756 = vmatmul.f32.gmra.mxu0 %v2734
        %v2757 = vpop.f32.mrf.mxu0
        %v2758 = vadd.f32 0.0, %v2757
        %2759 = vdwg.mxu0
        %v2760 = vrot.slane %v2098, 3
        %v2762 = vsel %vm864, %v2760, 0
        %2764 = vmatpush.bf16.msra.mxu0 0
        %2765 = vmatpush.bf16.msra.mxu0 0
        %2766 = vmatpush.bf16.msra.mxu0 0
        %2767 = vmatpush.bf16.msra.mxu0 0
        %2768 = vmatpush.bf16.msra.mxu0 %v1974
        %2769 = vmatpush.bf16.msra.mxu0 %v1972
        %2770 = vmatpush.bf16.msra.mxu0 %v1970
        %2771 = vmatpush.bf16.msra.mxu0 %v1968
        %2772 = vmatmul.bf16.gmra.mxu0 %v2762
        %v2773 = vpop.f32.mrf.mxu0
        %v2774 = vadd.f32 %v2746, %v2773
        %v2775 = vpop.f32.mrf.mxu0
        %2776 = vdwg.mxu0
        %2777 = vmatpush.bf16.msra.mxu0 0
        %2778 = vmatpush.bf16.msra.mxu0 0
        %2779 = vmatpush.bf16.msra.mxu0 0
        %2780 = vmatpush.bf16.msra.mxu0 0
        %2781 = vmatpush.bf16.msra.mxu0 %v1975
        %2782 = vmatpush.bf16.msra.mxu0 %v1973
        %2783 = vmatpush.bf16.msra.mxu0 %v1971
        %2784 = vmatpush.bf16.msra.mxu0 %v1969
        %2785 = vmatmul.bf16.gmra.mxu0 %v2762
        %v2786 = vpop.f32.mrf.mxu0
        %v2787 = vadd.f32 %v2758, %v2786
        %v2788 = vpop.f32.mrf.mxu0
        %2789 = vdwg.mxu0
        %v2790 = vadd.f32 %v2774, %v2014
        %v2791 = vadd.f32 %v2787, %v2015
        %v2792 = vxor.u32 %v2790, 2147483648
        %v2793 = vmul.f32 %v2792, 1.442695
        %v2794 = vpow.pop %v2793
        %v2795 = vadd.f32 %v2794, 1.0
        %v2796 = vrcp.pop %v2795
        %v2797 = vmul.f32 %v2795, %v2796
        %v2798 = vsub.f32 1.0, %v2797
        %v2799 = vmul.f32 %v2796, %v2798
        %v2800 = vadd.f32 %v2796, %v2799
        %vm2801 = vweird.f32 %v2795
        %vm2802 = vweird.f32 %v2796
        %vm2803 = vmor %vm2801, %vm2802
        %v2804 = vsel %vm2803, %v2796, %v2800
        %v2805 = vand.u32 2147483647, %v2795
        %vm2806 = vcmp.eq.f32.partialorder %v2805, 8.507059e+37
        %v2807 = vand.u32 %v2795, 2147483648
        %v2808 = vor.u32 1.1754944e-38, %v2807
        %v2809 = vsel %vm2806, %v2808, %v2804
        %v2810 = vmul.f32 1.0, %v2809
        %v2811 = vtanh.pop %v2791
        %v2812 = vxor.u32 %v2791, 2147483648
        %v2813 = vmul.f32 %v2812, 1.442695
        %v2814 = vpow.pop %v2813
        %v2815 = vadd.f32 %v2814, 1.0
        %v2816 = vrcp.pop %v2815
        %v2817 = vmul.f32 %v2815, %v2816
        %v2818 = vsub.f32 1.0, %v2817
        %v2819 = vmul.f32 %v2816, %v2818
        %v2820 = vadd.f32 %v2816, %v2819
        %vm2821 = vweird.f32 %v2815
        %vm2822 = vweird.f32 %v2816
        %vm2823 = vmor %vm2821, %vm2822
        %v2824 = vsel %vm2823, %v2816, %v2820
        %v2825 = vand.u32 2147483647, %v2815
        %vm2826 = vcmp.eq.f32.partialorder %v2825, 8.507059e+37
        %v2827 = vand.u32 %v2815, 2147483648
        %v2828 = vor.u32 1.1754944e-38, %v2827
        %v2829 = vsel %vm2826, %v2828, %v2824
        %v2830 = vmul.f32 1.0, %v2829
        %v2831 = vmul.f32 %v2810, %v2727
        %v2832 = vmul.f32 %v2810, %v2811
        %2834 = vrot.lane.b32.xlu0 %v2832, 64
        %v2835 = vpop.permute.xlu0 %2834
        %v2837 = vadd.f32 %v2831, %v2835
        %v2838 = vtanh.pop %v2837
        %v2839 = vmul.f32 %v2830, %v2838
        %v2840 = vpack.c.bf16 %v2839, %v2839
        %v2842 = vunpack.c.l.b16 %v2179
        %v2843 = vpack.c.b16 %v2842, %v2842
        %v2845 = vshll.u32 %v2843, 16
        %v2849 = vunpack.c.l.b16 %v2290
        %v2850 = vpack.c.b16 %v2849, %v2849
        %v2851 = vrot.slane %v2850, 7
        %v2853 = vunpack.c.l.b16 %v2400
        %v2854 = vpack.c.b16 %v2853, %v2853
        %v2856 = vshll.u32 %v2854, 16
        %v2858 = vrot.slane %v2856, 7
        %v2861 = vunpack.c.l.b16 %v2510
        %v2862 = vpack.c.b16 %v2861, %v2861
        %v2863 = vrot.slane %v2862, 6
        %v2865 = vunpack.c.l.b16 %v2620
        %v2866 = vpack.c.b16 %v2865, %v2865
        %v2868 = vshll.u32 %v2866, 16
        %v2870 = vrot.slane %v2868, 6
        %v2873 = vunpack.c.l.b16 %v2730
        %v2874 = vpack.c.b16 %v2873, %v2873
        %v2875 = vrot.slane %v2874, 5
        %v2877 = vunpack.c.l.b16 %v2840
        %v2878 = vpack.c.b16 %v2877, %v2877
        %v2880 = vshll.u32 %v2878, 16
        %v2882 = vrot.slane %v2880, 5
        %vm2884 = vcmask 1040384
        %vm2885 = vsmask.f32 256
        %vm2886 = vmand %vm2884, %vm2885
        %v2887 = vsel %vm2886, %v2068, %v2845
        %vm2888 = vcmask 1040384
        %v2891 = vsel %vm2888, %v2887, %v2851
        %vm2893 = vcmask 1041408
        %vm2894 = vsmask.f32 1280
        %vm2895 = vmand %vm2893, %vm2894
        %v2896 = vsel %vm2895, %v2891, %v2858
        %vm2897 = vcmask 1041408
        %v2900 = vsel %vm2897, %v2896, %v2863
        %vm2902 = vcmask 1042432
        %vm2903 = vsmask.f32 2304
        %vm2904 = vmand %vm2902, %vm2903
        %v2905 = vsel %vm2904, %v2900, %v2870
        %vm2906 = vcmask 1042432
        %v2909 = vsel %vm2906, %v2905, %v2875
        %vm2911 = vcmask 1043456
        %vm2912 = vsmask.f32 3328
        %vm2913 = vmand %vm2911, %vm2912
        %v2914 = vsel %vm2913, %v2909, %v2882
        %v2915 = vld [vmem:[#allocation17] sm:$0xf]
        %v2916 = vld [vmem:[#allocation17 + $0x4] sm:$0xf]
        %v2917 = vld [vmem:[#allocation17 + $0x8] sm:$0xf]
        %v2918 = vld [vmem:[#allocation17 + $0xc] sm:$0xf]
        %v2919 = vld [vmem:[#allocation17 + $0x10] sm:$0xf]
        %v2920 = vld [vmem:[#allocation17 + $0x14] sm:$0xf]
        %v2921 = vld [vmem:[#allocation17 + $0x18] sm:$0xf]
        %v2922 = vld [vmem:[#allocation17 + $0x1c] sm:$0xf]
        %v2923 = vld [vmem:[%s21] sm:$0x1]
        %v2925 = vperm.slane %v2923, 0
        %2928 = vrot.lane.b32.xlu0 %v2914, 64
        %v2929 = vpop.permute.xlu0 %2928
        %v2938 = vunpack.c.l.b16 %v2915
        %v2939 = vunpack.c.l.b16 %v2916
        %v2940 = vunpack.c.l.b16 %v2917
        %v2941 = vunpack.c.l.b16 %v2918
        %v2942 = vunpack.c.l.b16 %v2919
        %v2943 = vunpack.c.l.b16 %v2920
        %v2944 = vunpack.c.l.b16 %v2921
        %v2945 = vunpack.c.l.b16 %v2922
        %v2946 = vpack.c.b16 %v2939, %v2938
        %v2947 = vpack.c.b16 %v2941, %v2940
        %v2948 = vpack.c.b16 %v2943, %v2942
        %v2949 = vpack.c.b16 %v2945, %v2944
        %v2955 = vsel %vm864, %v2929, 0
        %2957 = vmatpush.bf16.msra.mxu0 0
        %2958 = vmatpush.bf16.msra.mxu0 0
        %2959 = vmatpush.bf16.msra.mxu0 0
        %2960 = vmatpush.bf16.msra.mxu0 0
        %2961 = vmatpush.bf16.msra.mxu0 %v2949
        %2962 = vmatpush.bf16.msra.mxu0 %v2948
        %2963 = vmatpush.bf16.msra.mxu0 %v2947
        %2964 = vmatpush.bf16.msra.mxu0 %v2946
        %2965 = vmatmul.bf16.gmra.mxu0 %v2955
        %v2966 = vpop.f32.mrf.mxu0
        %v2967 = vadd.f32 %v2925, %v2966
        %v2968 = vpop.f32.mrf.mxu0
        %2969 = vdwg.mxu0
        %2970 = vst [vmem:[%s856] sm:$0xff] %v2967
        %s2971 = sand.u32 %s524, 1
        %s2972 = scalar_lea.sflag [#allocation4], %s2971
        %s2973 = sand.u32 %s524, 1
        %s2974 = smul.addr %s2973, 8
        %s2975 = scalar_lea.vmem [#allocation19], %s2974
        // Predicated region
        $region149: #{tpu_custom_call.1} parent=107 // pred_check
          %p2976 = pneg %p534
        $region150: #{tpu_custom_call.1} parent=107 // pred_check_branch
          %2978 = sbr.rel (%p2976) target = $region152
        $region151: #{tpu_custom_call.1} parent=107 // pred_region
          %2980 = vsyncadd %s2972, 0
          %s2981 = smul.addr %s44, 8
          %s2982 = scalar_lea.hbm %s22, %s2981
          %s2984 = sshll.u32 %s2975, 4
          %s2985 = int_to_ptr.vmem [resolvable:$true] %s2984
          %s2986 = sshll.u32 %s2982, 4
          %s2987 = int_to_ptr.hbm [resolvable:$true] %s2986
          %2989 = dma.vmem_to_hbm [thread:$0]  %s2985, 128, %s2987, %s2972
        $region152: #{tpu_custom_call.1} parent=107 // pred_fallthru
          _
      $region108: #{tpu_custom_call.1} parent=5 // pred_fallthru
        _
      %p2990 = scmp.le.s32.totalorder 2, %s39
      // Predicated region
      $region153: #{tpu_custom_call.1} parent=5 // pred_check
        %p2991 = pneg %p2990
      $region154: #{tpu_custom_call.1} parent=5 // pred_check_branch
        %2993 = sbr.rel (%p2991) target = $region156
      $region155: #{tpu_custom_call.1} parent=5 // pred_region
        %s2994 = ssub.s32 %s39, 2
        // Predicated region
        $region157: #{tpu_custom_call.1} parent=155 // pred_check
          %p2995 = pneg %p540
        $region158: #{tpu_custom_call.1} parent=155 // pred_check_branch
          %2997 = sbr.rel (%p2995) target = $region160
        $region159: #{tpu_custom_call.1} parent=155 // pred_region
          %s2998 = sand.u32 %s525, 1
          %s2999 = scalar_lea.sflag [#allocation4], %s2998
          %s3000 = sand.u32 %s525, 1
          %s3001 = smul.addr %s3000, 8
          %s3002 = scalar_lea.vmem [#allocation19], %s3001
          %3004 = dma.done %s2999, 128
        $region160: #{tpu_custom_call.1} parent=155 // pred_fallthru
          _
      $region156: #{tpu_custom_call.1} parent=5 // pred_fallthru
        _
    $region6: #{tpu_custom_call.1} parent=1 // loop_footer
      %s43 = sadd.s32 1, %s39
    $region7: #{tpu_custom_call.1} parent=1 // loop_footer_branch
      %38 = sbr.rel target = $region3
    $region8: #{tpu_custom_call.1} parent=1 // loop_exit
      _
    %3005 = vsyncpa [#allocation3], 1
    %s3006 = scalar_lea.sflag [#allocation3], 1
    %3007 = vsyncpa %s3006, 1
    %3008 = vsyncpa [#allocation6], 1
    %3009 = vsyncpa [#allocation9], 1
    %3010 = vsyncpa [#allocation12], 1
    %3011 = vsyncpa [#allocation15], 1
    %3012 = vsyncpa [#allocation18], 1
    %3013 = vsyncpa [#allocation4], 1
    %s3014 = scalar_lea.sflag [#allocation4], 1
    %3015 = vsyncpa %s3014, 1

</llo_original>
